<compile_context>
chip_gen: v6e
topology: v6e:2x2x1
jax: 0.10.0
libtpu: 0.0.40
codegen_flags: <defaults>
</compile_context>

<pallas_src>
import jax
import jax.numpy as jnp
import numpy as np
from jax import lax
from jax.experimental import pallas as pl
from jax.experimental.pallas import tpu as pltpu


# ----------------------------------------------------------------------------- kernel

def _tgcn_recurrence_kernel(L_ref, xgzr_ref, xgc_ref,
                            wzr0_ref, wzr1_ref, wc0_ref, wc1_ref, out_ref):
    T = xgzr_ref.shape[0]
    N, Ch = out_ref.shape[1], out_ref.shape[2]
    n_graph = L_ref.shape[1]

    Lpad = L_ref[...]        # (N, n_graph) bf16: scaled Cheb Laplacian, rows>=n_graph zero
    Wzr0 = wzr0_ref[...]     # (Ch, 2*Ch)  bf16: h-path T0 weights, gates [z | r]
    Wzr1 = wzr1_ref[...]     # (Ch, 2*Ch)  bf16: h-path T1 weights, gates [z | r]
    Wc0 = wc0_ref[...]       # (Ch, Ch)    bf16: candidate T0 weights
    Wc1 = wc1_ref[...]       # (Ch, Ch)    bf16: candidate T1 weights

    def apply_L(v_bf):
        # Only columns 0..n_graph-1 of the flattened batch are coupled by the graph;
        # padded rows of Lpad give an exactly-zero T1 term for the remaining nodes
        # (literal module semantics).  Sublane slice [:n_graph] is 8-aligned => free.
        return jnp.dot(Lpad, v_bf[:n_graph, :],
                       preferred_element_type=jnp.float32).astype(jnp.bfloat16)

    def step(t, h):
        h_bf = h.astype(jnp.bfloat16)
        Lh = apply_L(h_bf)
        zr = (jnp.dot(h_bf, Wzr0, preferred_element_type=jnp.float32)
              + jnp.dot(Lh, Wzr1, preferred_element_type=jnp.float32)
              + xgzr_ref[t])                        # (N, 2*Ch) f32
        z = jax.nn.sigmoid(zr[:, :Ch])
        r = jax.nn.sigmoid(zr[:, Ch:])
        hr_bf = (h * r).astype(jnp.bfloat16)
        Lhr = apply_L(hr_bf)
        c = (jnp.dot(hr_bf, Wc0, preferred_element_type=jnp.float32)
             + jnp.dot(Lhr, Wc1, preferred_element_type=jnp.float32)
             + xgc_ref[t])                          # (N, Ch) f32
        h_new = z * h + (1.0 - z) * jnp.tanh(c)
        out_ref[t] = h_new
        return h_new

    lax.fori_loop(0, T, step, jnp.zeros((N, Ch), jnp.float32), unroll=True)


# ----------------------------------------------------------------------------- packing

def build_scaled_laplacian(edge_index, n_nodes):
    """PyG ChebConv.__norm__ with lambda_max=2.0:
    L_hat = 2L/lambda_max - I = -D^{-1/2} A D^{-1/2}, zero diagonal."""
    row, col = edge_index[0], edge_index[1]
    A = jnp.zeros((n_nodes, n_nodes), jnp.float32).at[row, col].add(1.0)
    deg = A.sum(axis=1)
    dinv = jnp.where(deg > 0, 1.0 / jnp.sqrt(jnp.maximum(deg, 1e-12)), 0.0)
    return -(dinv[:, None] * A * dinv[None, :])


def _pack_params(Wx, bx, Wh, bh):
    """Pack ChebConv weights into fused right-multiply matrices.

    Wx: (3, 2, Cin, Ch)  gates (z, r, c) x Chebyshev order (T0, T1)
    Wh: (3, 2, Ch,  Ch)
    """
    Cin, Ch = Wx.shape[2], Wx.shape[3]
    # x-path: one (2*Cin, 3*Ch) matrix applied to [x, L@x]; columns ordered [z | r | c].
    Wx_packed = jnp.concatenate(
        [jnp.transpose(Wx[:, 0], (1, 0, 2)).reshape(Cin, 3 * Ch),
         jnp.transpose(Wx[:, 1], (1, 0, 2)).reshape(Cin, 3 * Ch)], axis=0)
    # h-path z/r: T0 and T1 weights kept separate (applied to h and L@h respectively).
    Wzr0 = jnp.concatenate([Wh[0, 0], Wh[1, 0]], axis=1)   # (Ch, 2*Ch) on h
    Wzr1 = jnp.concatenate([Wh[0, 1], Wh[1, 1]], axis=1)   # (Ch, 2*Ch) on L@h
    Wc0, Wc1 = Wh[2, 0], Wh[2, 1]                          # (Ch, Ch)
    # fold ALL biases (x-path + h-path of every ChebConv) into one constant.
    bias = bx.reshape(3 * Ch) + jnp.concatenate([bh[0, 0], bh[1, 0], bh[2, 0]], axis=0)
    return Wx_packed, Wzr0, Wzr1, Wc0, Wc1, bias


def _precompute_x_gates(X, L_graph, Wx_packed, bias):
    """Hoisted h-independent path: (T, N, 3*Ch) gate preactivations, biases folded in."""
    B, T, n_graph, Cin = X.shape
    N = B * n_graph
    x_seq = jnp.transpose(X, (1, 0, 2, 3)).reshape(T, N, Cin)
    Lx_top = jnp.einsum('mn,tnc->tmc', L_graph, x_seq[:, :n_graph, :])
    if N > n_graph:
        Lx = jnp.concatenate(
            [Lx_top, jnp.zeros((T, N - n_graph, Cin), x_seq.dtype)], axis=1)
    else:
        Lx = Lx_top
    xcat = jnp.concatenate([x_seq, Lx], axis=-1)                 # (T, N, 2*Cin)
    return jnp.einsum('tnc,cd->tnd', xcat, Wx_packed) + bias     # (T, N, 3*Ch)


# ----------------------------------------------------------------------------- forward

@jax.jit
def tgcn_forward(X, edge_index, params):
    """X: (B, T, num_nodes, Cin) f32 -> (B, T, num_nodes, Cout)."""
    Wx, bx, Wh, bh, Wfc, bfc = params
    B, T, n_graph, _ = X.shape
    N = B * n_graph
    Ch = Wh.shape[-1]

    L_graph = build_scaled_laplacian(edge_index, n_graph)                 # (nn, nn)
    L_pad = jnp.zeros((N, n_graph), jnp.float32).at[:n_graph].set(L_graph)

    Wx_packed, Wzr0, Wzr1, Wc0, Wc1, bias = _pack_params(Wx, bx, Wh, bh)
    xg = _precompute_x_gates(X, L_graph, Wx_packed, bias)                 # (T, N, 3*Ch)
    xg_zr, xg_c = xg[..., :2 * Ch], xg[..., 2 * Ch:]

    vmem = lambda: pl.BlockSpec(memory_space=pltpu.MemorySpace.VMEM)
    h_seq = pl.pallas_call(
        _tgcn_recurrence_kernel,
        out_shape=jax.ShapeDtypeStruct((T, N, Ch), jnp.float32),
        in_specs=[vmem()] * 7,
        out_specs=vmem(),
    )(L_pad.astype(jnp.bfloat16), xg_zr, xg_c,
      Wzr0.astype(jnp.bfloat16), Wzr1.astype(jnp.bfloat16),
      Wc0.astype(jnp.bfloat16), Wc1.astype(jnp.bfloat16))

    h_seq = h_seq.reshape(T, B, n_graph, Ch).transpose(1, 0, 2, 3)        # (B,T,nn,Ch)
    return h_seq @ Wfc + bfc     # Linear head outside the kernel (lane-dense stores)


# ----------------------------------------------------------------------------- refs

def tgcn_reference_f32(X, edge_index, params):
    """Pure-JAX f32 reference of the literal PyTorch module (dense batched operator)."""
    Wx, bx, Wh, bh, Wfc, bfc = params
    B, T, n_graph, Cin = X.shape
    N = B * n_graph
    Ch = Wh.shape[-1]
    row, col = edge_index[0], edge_index[1]
    A = jnp.zeros((N, N), jnp.float32).at[row, col].add(1.0)
    deg = A.sum(axis=1)
    dinv = jnp.where(deg > 0, 1.0 / jnp.sqrt(jnp.maximum(deg, 1e-12)), 0.0)
    L = -(dinv[:, None] * A * dinv[None, :])
    x_seq = jnp.transpose(X, (1, 0, 2, 3)).reshape(T, N, Cin)
    h = jnp.zeros((N, Ch), jnp.float32)
    outs = []
    for t in range(T):
        x = x_seq[t]
        Lx, Lh = L @ x, L @ h
        cx = lambda i, t0, t1: t0 @ Wx[i, 0] + t1 @ Wx[i, 1] + bx[i]
        ch = lambda i, t0, t1: t0 @ Wh[i, 0] + t1 @ Wh[i, 1] + bh[i]
        z = jax.nn.sigmoid(cx(0, x, Lx) + ch(0, h, Lh))
        r = jax.nn.sigmoid(cx(1, x, Lx) + ch(1, h, Lh))
        hr = h * r
        ht = jnp.tanh(cx(2, x, Lx) + ch(2, hr, L @ hr))
        h = z * h + (1.0 - z) * ht
        outs.append(h)
    hs = jnp.stack(outs, 0).reshape(T, B, n_graph, Ch).transpose(1, 0, 2, 3)
    return hs @ Wfc + bfc


def tgcn_reference_bf16(X, edge_index, params):
    """Pure-JAX mirror of the kernel's math (bf16 MXU operands, f32 accumulation)."""
    Wx, bx, Wh, bh, Wfc, bfc = params
    B, T, n_graph, _ = X.shape
    N = B * n_graph
    Ch = Wh.shape[-1]
    L_graph = build_scaled_laplacian(edge_index, n_graph)
    L_pad = (jnp.zeros((N, n_graph), jnp.float32)
             .at[:n_graph].set(L_graph).astype(jnp.bfloat16))
    Wx_packed, Wzr0, Wzr1, Wc0, Wc1, bias = _pack_params(Wx, bx, Wh, bh)
    xg = _precompute_x_gates(X, L_graph, Wx_packed, bias)
    Wzr0b, Wzr1b = Wzr0.astype(jnp.bfloat16), Wzr1.astype(jnp.bfloat16)
    Wc0b, Wc1b = Wc0.astype(jnp.bfloat16), Wc1.astype(jnp.bfloat16)

    def apply_L(v_bf):
        return jnp.dot(L_pad, v_bf[:n_graph],
                       preferred_element_type=jnp.float32).astype(jnp.bfloat16)

    h = jnp.zeros((N, Ch), jnp.float32)
    outs = []
    for t in range(T):
        h_bf = h.astype(jnp.bfloat16)
        Lh = apply_L(h_bf)
        zr = (jnp.dot(h_bf, Wzr0b, preferred_element_type=jnp.float32)
              + jnp.dot(Lh, Wzr1b, preferred_element_type=jnp.float32)
              + xg[t, :, :2 * Ch])
        z, r = jax.nn.sigmoid(zr[:, :Ch]), jax.nn.sigmoid(zr[:, Ch:])
        hr_bf = (h * r).astype(jnp.bfloat16)
        Lhr = apply_L(hr_bf)
        c = (jnp.dot(hr_bf, Wc0b, preferred_element_type=jnp.float32)
             + jnp.dot(Lhr, Wc1b, preferred_element_type=jnp.float32)
             + xg[t, :, 2 * Ch:])
        h = z * h + (1.0 - z) * jnp.tanh(c)
        outs.append(h)
    hs = jnp.stack(outs, 0).reshape(T, B, n_graph, Ch).transpose(1, 0, 2, 3)
    return hs @ Wfc + bfc


# ----------------------------------------------------------------------------- main

if __name__ == "__main__":
    B, T, NUM_NODES, CIN, HIDDEN, COUT = 2, 8, 16, 4, 32, 4

    key = jax.random.PRNGKey(0)
    k = iter(jax.random.split(key, 16))

    X = jax.random.normal(next(k), (B, T, NUM_NODES, CIN), jnp.float32)

    # deterministic synthetic parameters (6 ChebConv layers K=2, stacked as z/r/h, + fc)
    Wx = 0.2 * jax.random.normal(next(k), (3, 2, CIN, HIDDEN), jnp.float32)
    bx = 0.1 * jax.random.normal(next(k), (3, 1, HIDDEN), jnp.float32)
    Wh = 0.2 * jax.random.normal(next(k), (3, 2, HIDDEN, HIDDEN), jnp.float32)
    bh = 0.1 * jax.random.normal(next(k), (3, 1, HIDDEN), jnp.float32)
    Wfc = 0.2 * jax.random.normal(next(k), (HIDDEN, COUT), jnp.float32)
    bfc = 0.1 * jax.random.normal(next(k), (1, COUT), jnp.float32)
    params = (Wx, bx, Wh, bh, Wfc, bfc)

    # undirected ring graph over the per-sample num_nodes (as in the PyTorch usage)
    src = np.arange(NUM_NODES, dtype=np.int32)
    dst = (src + 1) % NUM_NODES
    edge_index = jnp.asarray(
        np.stack([np.concatenate([src, dst]), np.concatenate([dst, src])], axis=0))

    out = jax.block_until_ready(tgcn_forward(X, edge_index, params))
    assert out.shape == (B, T, NUM_NODES, COUT)

    # Tight check against an exact pure-JAX mirror of the kernel's bf16/f32 math.
    ref_bf16 = tgcn_reference_bf16(X, edge_index, params)
    np.testing.assert_allclose(np.asarray(out), np.asarray(ref_bf16), rtol=5e-3, atol=5e-3)

    # Sanity check against the original full-f32 semantics (bound on bf16-MXU drift
    # accumulated over the 8-step recurrence; catches any packing/semantics bug).
    ref_f32 = tgcn_reference_f32(X, edge_index, params)
    np.testing.assert_allclose(np.asarray(out), np.asarray(ref_f32), rtol=1e-1, atol=1e-1)

    print("KERNEL_OK")
</pallas_src>

<mosaic_0001>
module attributes {stable_mosaic.version = 11 : i64} {
  func.func private @main(%arg0: i32) attributes {dimension_semantics = [#tpu.dimension_semantics<core_parallel>], iteration_bounds = array<i64: 2>, tpu.core_type = #tpu.core_type<sc_scalar_subcore>, window_params = []} {
    return
  }
}

module attributes {stable_mosaic.version = 11 : i64} {
  func.func private @main(%arg0: i32) attributes {dimension_semantics = [#tpu.dimension_semantics<core_parallel>], iteration_bounds = array<i64: 2>, tpu.core_type = #tpu.core_type<sc_scalar_subcore>, window_params = []} {
    return
  }
}

module attributes {stable_mosaic.version = 11 : i64} {
  func.func @_tgcn_recurrence_kernel(%arg0: memref<32x16xbf16, #tpu.memory_space<vmem>>, %arg1: memref<8x32x64xf32, #tpu.memory_space<vmem>>, %arg2: memref<8x32x32xf32, #tpu.memory_space<vmem>>, %arg3: memref<32x64xbf16, #tpu.memory_space<vmem>>, %arg4: memref<32x64xbf16, #tpu.memory_space<vmem>>, %arg5: memref<32x32xbf16, #tpu.memory_space<vmem>>, %arg6: memref<32x32xbf16, #tpu.memory_space<vmem>>, %arg7: memref<8x32x32xf32, #tpu.memory_space<vmem>>) attributes {dimension_semantics = [], scalar_prefetch = 0 : i64, scratch_operands = 0 : i64, tpu.core_type = #tpu.core_type<tc>} {
    %c0 = arith.constant 0 : index
    %c0_0 = arith.constant 0 : index
    %0 = vector.load %arg0[%c0, %c0_0] : memref<32x16xbf16, #tpu.memory_space<vmem>>, vector<32x16xbf16>
    %c0_1 = arith.constant 0 : index
    %c0_2 = arith.constant 0 : index
    %1 = vector.load %arg3[%c0_1, %c0_2] : memref<32x64xbf16, #tpu.memory_space<vmem>>, vector<32x64xbf16>
    %c0_3 = arith.constant 0 : index
    %c0_4 = arith.constant 0 : index
    %2 = vector.load %arg4[%c0_3, %c0_4] : memref<32x64xbf16, #tpu.memory_space<vmem>>, vector<32x64xbf16>
    %c0_5 = arith.constant 0 : index
    %c0_6 = arith.constant 0 : index
    %3 = vector.load %arg5[%c0_5, %c0_6] : memref<32x32xbf16, #tpu.memory_space<vmem>>, vector<32x32xbf16>
    %c0_7 = arith.constant 0 : index
    %c0_8 = arith.constant 0 : index
    %4 = vector.load %arg6[%c0_7, %c0_8] : memref<32x32xbf16, #tpu.memory_space<vmem>>, vector<32x32xbf16>
    %cst = arith.constant 0.000000e+00 : f32
    %5 = vector.broadcast %cst : f32 to vector<32x32xf32>
    %c0_i32 = arith.constant 0 : i32
    %6 = arith.truncf %5 : vector<32x32xf32> to vector<32x32xbf16>
    %7 = vector.extract_strided_slice %6 {offsets = [0, 0], sizes = [16, 32], strides = [1, 1]} : vector<32x32xbf16> to vector<16x32xbf16>
    %cst_9 = arith.constant dense<0.000000e+00> : vector<32x32xf32>
    %8 = tpu.matmul %0, %7, %cst_9 {dimension_numbers = #tpu.dot_dimension_numbers<[1], [0], [0], [1], [0, 0, 1, 1], [], []>} : vector<32x16xbf16>, vector<16x32xbf16>, vector<32x32xf32> -> vector<32x32xf32>
    %9 = arith.truncf %8 : vector<32x32xf32> to vector<32x32xbf16>
    %cst_10 = arith.constant dense<0.000000e+00> : vector<32x64xf32>
    %10 = tpu.matmul %6, %1, %cst_10 {dimension_numbers = #tpu.dot_dimension_numbers<[1], [0], [0], [1], [0, 0, 1, 1], [], []>} : vector<32x32xbf16>, vector<32x64xbf16>, vector<32x64xf32> -> vector<32x64xf32>
    %cst_11 = arith.constant dense<0.000000e+00> : vector<32x64xf32>
    %11 = tpu.matmul %9, %2, %cst_11 {dimension_numbers = #tpu.dot_dimension_numbers<[1], [0], [0], [1], [0, 0, 1, 1], [], []>} : vector<32x32xbf16>, vector<32x64xbf16>, vector<32x64xf32> -> vector<32x64xf32>
    %12 = arith.addf %10, %11 : vector<32x64xf32>
    %13 = arith.index_cast %c0_i32 : i32 to index
    %c0_12 = arith.constant 0 : index
    %c0_13 = arith.constant 0 : index
    %14 = vector.load %arg1[%13, %c0_12, %c0_13] : memref<8x32x64xf32, #tpu.memory_space<vmem>>, vector<1x32x64xf32>
    %15 = vector.shape_cast %14 : vector<1x32x64xf32> to vector<32x64xf32>
    %16 = arith.addf %12, %15 : vector<32x64xf32>
    %17 = vector.extract_strided_slice %16 {offsets = [0, 0], sizes = [32, 32], strides = [1, 1]} : vector<32x64xf32> to vector<32x32xf32>
    %18 = arith.negf %17 : vector<32x32xf32>
    %19 = math.exp %18 : vector<32x32xf32>
    %cst_14 = arith.constant 1.000000e+00 : f32
    %20 = vector.broadcast %cst_14 : f32 to vector<32x32xf32>
    %21 = arith.addf %20, %19 : vector<32x32xf32>
    %22 = arith.divf %20, %21 : vector<32x32xf32>
    %23 = vector.extract_strided_slice %16 {offsets = [0, 32], sizes = [32, 32], strides = [1, 1]} : vector<32x64xf32> to vector<32x32xf32>
    %24 = arith.negf %23 : vector<32x32xf32>
    %25 = math.exp %24 : vector<32x32xf32>
    %cst_15 = arith.constant 1.000000e+00 : f32
    %26 = vector.broadcast %cst_15 : f32 to vector<32x32xf32>
    %27 = arith.addf %26, %25 : vector<32x32xf32>
    %28 = arith.divf %26, %27 : vector<32x32xf32>
    %29 = arith.mulf %5, %28 : vector<32x32xf32>
    %30 = arith.truncf %29 : vector<32x32xf32> to vector<32x32xbf16>
    %31 = vector.extract_strided_slice %30 {offsets = [0, 0], sizes = [16, 32], strides = [1, 1]} : vector<32x32xbf16> to vector<16x32xbf16>
    %cst_16 = arith.constant dense<0.000000e+00> : vector<32x32xf32>
    %32 = tpu.matmul %0, %31, %cst_16 {dimension_numbers = #tpu.dot_dimension_numbers<[1], [0], [0], [1], [0, 0, 1, 1], [], []>} : vector<32x16xbf16>, vector<16x32xbf16>, vector<32x32xf32> -> vector<32x32xf32>
    %33 = arith.truncf %32 : vector<32x32xf32> to vector<32x32xbf16>
    %cst_17 = arith.constant dense<0.000000e+00> : vector<32x32xf32>
    %34 = tpu.matmul %30, %3, %cst_17 {dimension_numbers = #tpu.dot_dimension_numbers<[1], [0], [0], [1], [0, 0, 1, 1], [], []>} : vector<32x32xbf16>, vector<32x32xbf16>, vector<32x32xf32> -> vector<32x32xf32>
    %cst_18 = arith.constant dense<0.000000e+00> : vector<32x32xf32>
    %35 = tpu.matmul %33, %4, %cst_18 {dimension_numbers = #tpu.dot_dimension_numbers<[1], [0], [0], [1], [0, 0, 1, 1], [], []>} : vector<32x32xbf16>, vector<32x32xbf16>, vector<32x32xf32> -> vector<32x32xf32>
    %36 = arith.addf %34, %35 : vector<32x32xf32>
    %37 = arith.index_cast %c0_i32 : i32 to index
    %c0_19 = arith.constant 0 : index
    %c0_20 = arith.constant 0 : index
    %38 = vector.load %arg2[%37, %c0_19, %c0_20] : memref<8x32x32xf32, #tpu.memory_space<vmem>>, vector<1x32x32xf32>
    %39 = vector.shape_cast %38 : vector<1x32x32xf32> to vector<32x32xf32>
    %40 = arith.addf %36, %39 : vector<32x32xf32>
    %41 = arith.mulf %22, %5 : vector<32x32xf32>
    %cst_21 = arith.constant 1.000000e+00 : f32
    %42 = vector.broadcast %cst_21 : f32 to vector<32x32xf32>
    %43 = arith.subf %42, %22 : vector<32x32xf32>
    %44 = math.tanh %40 : vector<32x32xf32>
    %45 = arith.mulf %43, %44 : vector<32x32xf32>
    %46 = arith.addf %41, %45 : vector<32x32xf32>
    %47 = arith.index_cast %c0_i32 : i32 to index
    %c0_22 = arith.constant 0 : index
    %c0_23 = arith.constant 0 : index
    %48 = vector.load %arg7[%47, %c0_22, %c0_23] : memref<8x32x32xf32, #tpu.memory_space<vmem>>, vector<1x32x32xf32>
    %49 = vector.shape_cast %48 : vector<1x32x32xf32> to vector<32x32xf32>
    %50 = vector.shape_cast %46 : vector<32x32xf32> to vector<1x32x32xf32>
    tpu.vector_store %arg7[%47, %c0_22, %c0_23], %50 {strides = array<i32>} : memref<8x32x32xf32, #tpu.memory_space<vmem>>, vector<1x32x32xf32>,
    %c1_i32 = arith.constant 1 : i32
    %51 = arith.truncf %46 : vector<32x32xf32> to vector<32x32xbf16>
    %52 = vector.extract_strided_slice %51 {offsets = [0, 0], sizes = [16, 32], strides = [1, 1]} : vector<32x32xbf16> to vector<16x32xbf16>
    %cst_24 = arith.constant dense<0.000000e+00> : vector<32x32xf32>
    %53 = tpu.matmul %0, %52, %cst_24 {dimension_numbers = #tpu.dot_dimension_numbers<[1], [0], [0], [1], [0, 0, 1, 1], [], []>} : vector<32x16xbf16>, vector<16x32xbf16>, vector<32x32xf32> -> vector<32x32xf32>
    %54 = arith.truncf %53 : vector<32x32xf32> to vector<32x32xbf16>
    %cst_25 = arith.constant dense<0.000000e+00> : vector<32x64xf32>
    %55 = tpu.matmul %51, %1, %cst_25 {dimension_numbers = #tpu.dot_dimension_numbers<[1], [0], [0], [1], [0, 0, 1, 1], [], []>} : vector<32x32xbf16>, vector<32x64xbf16>, vector<32x64xf32> -> vector<32x64xf32>
    %cst_26 = arith.constant dense<0.000000e+00> : vector<32x64xf32>
    %56 = tpu.matmul %54, %2, %cst_26 {dimension_numbers = #tpu.dot_dimension_numbers<[1], [0], [0], [1], [0, 0, 1, 1], [], []>} : vector<32x32xbf16>, vector<32x64xbf16>, vector<32x64xf32> -> vector<32x64xf32>
    %57 = arith.addf %55, %56 : vector<32x64xf32>
    %58 = arith.index_cast %c1_i32 : i32 to index
    %c0_27 = arith.constant 0 : index
    %c0_28 = arith.constant 0 : index
    %59 = vector.load %arg1[%58, %c0_27, %c0_28] : memref<8x32x64xf32, #tpu.memory_space<vmem>>, vector<1x32x64xf32>
    %60 = vector.shape_cast %59 : vector<1x32x64xf32> to vector<32x64xf32>
    %61 = arith.addf %57, %60 : vector<32x64xf32>
    %62 = vector.extract_strided_slice %61 {offsets = [0, 0], sizes = [32, 32], strides = [1, 1]} : vector<32x64xf32> to vector<32x32xf32>
    %63 = arith.negf %62 : vector<32x32xf32>
    %64 = math.exp %63 : vector<32x32xf32>
    %cst_29 = arith.constant 1.000000e+00 : f32
    %65 = vector.broadcast %cst_29 : f32 to vector<32x32xf32>
    %66 = arith.addf %65, %64 : vector<32x32xf32>
    %67 = arith.divf %65, %66 : vector<32x32xf32>
    %68 = vector.extract_strided_slice %61 {offsets = [0, 32], sizes = [32, 32], strides = [1, 1]} : vector<32x64xf32> to vector<32x32xf32>
    %69 = arith.negf %68 : vector<32x32xf32>
    %70 = math.exp %69 : vector<32x32xf32>
    %cst_30 = arith.constant 1.000000e+00 : f32
    %71 = vector.broadcast %cst_30 : f32 to vector<32x32xf32>
    %72 = arith.addf %71, %70 : vector<32x32xf32>
    %73 = arith.divf %71, %72 : vector<32x32xf32>
    %74 = arith.mulf %46, %73 : vector<32x32xf32>
    %75 = arith.truncf %74 : vector<32x32xf32> to vector<32x32xbf16>
    %76 = vector.extract_strided_slice %75 {offsets = [0, 0], sizes = [16, 32], strides = [1, 1]} : vector<32x32xbf16> to vector<16x32xbf16>
    %cst_31 = arith.constant dense<0.000000e+00> : vector<32x32xf32>
    %77 = tpu.matmul %0, %76, %cst_31 {dimension_numbers = #tpu.dot_dimension_numbers<[1], [0], [0], [1], [0, 0, 1, 1], [], []>} : vector<32x16xbf16>, vector<16x32xbf16>, vector<32x32xf32> -> vector<32x32xf32>
    %78 = arith.truncf %77 : vector<32x32xf32> to vector<32x32xbf16>
    %cst_32 = arith.constant dense<0.000000e+00> : vector<32x32xf32>
    %79 = tpu.matmul %75, %3, %cst_32 {dimension_numbers = #tpu.dot_dimension_numbers<[1], [0], [0], [1], [0, 0, 1, 1], [], []>} : vector<32x32xbf16>, vector<32x32xbf16>, vector<32x32xf32> -> vector<32x32xf32>
    %cst_33 = arith.constant dense<0.000000e+00> : vector<32x32xf32>
    %80 = tpu.matmul %78, %4, %cst_33 {dimension_numbers = #tpu.dot_dimension_numbers<[1], [0], [0], [1], [0, 0, 1, 1], [], []>} : vector<32x32xbf16>, vector<32x32xbf16>, vector<32x32xf32> -> vector<32x32xf32>
    %81 = arith.addf %79, %80 : vector<32x32xf32>
    %82 = arith.index_cast %c1_i32 : i32 to index
    %c0_34 = arith.constant 0 : index
    %c0_35 = arith.constant 0 : index
    %83 = vector.load %arg2[%82, %c0_34, %c0_35] : memref<8x32x32xf32, #tpu.memory_space<vmem>>, vector<1x32x32xf32>
    %84 = vector.shape_cast %83 : vector<1x32x32xf32> to vector<32x32xf32>
    %85 = arith.addf %81, %84 : vector<32x32xf32>
    %86 = arith.mulf %67, %46 : vector<32x32xf32>
    %cst_36 = arith.constant 1.000000e+00 : f32
    %87 = vector.broadcast %cst_36 : f32 to vector<32x32xf32>
    %88 = arith.subf %87, %67 : vector<32x32xf32>
    %89 = math.tanh %85 : vector<32x32xf32>
    %90 = arith.mulf %88, %89 : vector<32x32xf32>
    %91 = arith.addf %86, %90 : vector<32x32xf32>
    %92 = arith.index_cast %c1_i32 : i32 to index
    %c0_37 = arith.constant 0 : index
    %c0_38 = arith.constant 0 : index
    %93 = vector.load %arg7[%92, %c0_37, %c0_38] : memref<8x32x32xf32, #tpu.memory_space<vmem>>, vector<1x32x32xf32>
    %94 = vector.shape_cast %93 : vector<1x32x32xf32> to vector<32x32xf32>
    %95 = vector.shape_cast %91 : vector<32x32xf32> to vector<1x32x32xf32>
    tpu.vector_store %arg7[%92, %c0_37, %c0_38], %95 {strides = array<i32>} : memref<8x32x32xf32, #tpu.memory_space<vmem>>, vector<1x32x32xf32>,
    %c2_i32 = arith.constant 2 : i32
    %96 = arith.truncf %91 : vector<32x32xf32> to vector<32x32xbf16>
    %97 = vector.extract_strided_slice %96 {offsets = [0, 0], sizes = [16, 32], strides = [1, 1]} : vector<32x32xbf16> to vector<16x32xbf16>
    %cst_39 = arith.constant dense<0.000000e+00> : vector<32x32xf32>
    %98 = tpu.matmul %0, %97, %cst_39 {dimension_numbers = #tpu.dot_dimension_numbers<[1], [0], [0], [1], [0, 0, 1, 1], [], []>} : vector<32x16xbf16>, vector<16x32xbf16>, vector<32x32xf32> -> vector<32x32xf32>
    %99 = arith.truncf %98 : vector<32x32xf32> to vector<32x32xbf16>
    %cst_40 = arith.constant dense<0.000000e+00> : vector<32x64xf32>
    %100 = tpu.matmul %96, %1, %cst_40 {dimension_numbers = #tpu.dot_dimension_numbers<[1], [0], [0], [1], [0, 0, 1, 1], [], []>} : vector<32x32xbf16>, vector<32x64xbf16>, vector<32x64xf32> -> vector<32x64xf32>
    %cst_41 = arith.constant dense<0.000000e+00> : vector<32x64xf32>
    %101 = tpu.matmul %99, %2, %cst_41 {dimension_numbers = #tpu.dot_dimension_numbers<[1], [0], [0], [1], [0, 0, 1, 1], [], []>} : vector<32x32xbf16>, vector<32x64xbf16>, vector<32x64xf32> -> vector<32x64xf32>
    %102 = arith.addf %100, %101 : vector<32x64xf32>
    %103 = arith.index_cast %c2_i32 : i32 to index
    %c0_42 = arith.constant 0 : index
    %c0_43 = arith.constant 0 : index
    %104 = vector.load %arg1[%103, %c0_42, %c0_43] : memref<8x32x64xf32, #tpu.memory_space<vmem>>, vector<1x32x64xf32>
    %105 = vector.shape_cast %104 : vector<1x32x64xf32> to vector<32x64xf32>
    %106 = arith.addf %102, %105 : vector<32x64xf32>
    %107 = vector.extract_strided_slice %106 {offsets = [0, 0], sizes = [32, 32], strides = [1, 1]} : vector<32x64xf32> to vector<32x32xf32>
    %108 = arith.negf %107 : vector<32x32xf32>
    %109 = math.exp %108 : vector<32x32xf32>
    %cst_44 = arith.constant 1.000000e+00 : f32
    %110 = vector.broadcast %cst_44 : f32 to vector<32x32xf32>
    %111 = arith.addf %110, %109 : vector<32x32xf32>
    %112 = arith.divf %110, %111 : vector<32x32xf32>
    %113 = vector.extract_strided_slice %106 {offsets = [0, 32], sizes = [32, 32], strides = [1, 1]} : vector<32x64xf32> to vector<32x32xf32>
    %114 = arith.negf %113 : vector<32x32xf32>
    %115 = math.exp %114 : vector<32x32xf32>
    %cst_45 = arith.constant 1.000000e+00 : f32
    %116 = vector.broadcast %cst_45 : f32 to vector<32x32xf32>
    %117 = arith.addf %116, %115 : vector<32x32xf32>
    %118 = arith.divf %116, %117 : vector<32x32xf32>
    %119 = arith.mulf %91, %118 : vector<32x32xf32>
    %120 = arith.truncf %119 : vector<32x32xf32> to vector<32x32xbf16>
    %121 = vector.extract_strided_slice %120 {offsets = [0, 0], sizes = [16, 32], strides = [1, 1]} : vector<32x32xbf16> to vector<16x32xbf16>
    %cst_46 = arith.constant dense<0.000000e+00> : vector<32x32xf32>
    %122 = tpu.matmul %0, %121, %cst_46 {dimension_numbers = #tpu.dot_dimension_numbers<[1], [0], [0], [1], [0, 0, 1, 1], [], []>} : vector<32x16xbf16>, vector<16x32xbf16>, vector<32x32xf32> -> vector<32x32xf32>
    %123 = arith.truncf %122 : vector<32x32xf32> to vector<32x32xbf16>
    %cst_47 = arith.constant dense<0.000000e+00> : vector<32x32xf32>
    %124 = tpu.matmul %120, %3, %cst_47 {dimension_numbers = #tpu.dot_dimension_numbers<[1], [0], [0], [1], [0, 0, 1, 1], [], []>} : vector<32x32xbf16>, vector<32x32xbf16>, vector<32x32xf32> -> vector<32x32xf32>
    %cst_48 = arith.constant dense<0.000000e+00> : vector<32x32xf32>
    %125 = tpu.matmul %123, %4, %cst_48 {dimension_numbers = #tpu.dot_dimension_numbers<[1], [0], [0], [1], [0, 0, 1, 1], [], []>} : vector<32x32xbf16>, vector<32x32xbf16>, vector<32x32xf32> -> vector<32x32xf32>
    %126 = arith.addf %124, %125 : vector<32x32xf32>
    %127 = arith.index_cast %c2_i32 : i32 to index
    %c0_49 = arith.constant 0 : index
    %c0_50 = arith.constant 0 : index
    %128 = vector.load %arg2[%127, %c0_49, %c0_50] : memref<8x32x32xf32, #tpu.memory_space<vmem>>, vector<1x32x32xf32>
    %129 = vector.shape_cast %128 : vector<1x32x32xf32> to vector<32x32xf32>
    %130 = arith.addf %126, %129 : vector<32x32xf32>
    %131 = arith.mulf %112, %91 : vector<32x32xf32>
    %cst_51 = arith.constant 1.000000e+00 : f32
    %132 = vector.broadcast %cst_51 : f32 to vector<32x32xf32>
    %133 = arith.subf %132, %112 : vector<32x32xf32>
    %134 = math.tanh %130 : vector<32x32xf32>
    %135 = arith.mulf %133, %134 : vector<32x32xf32>
    %136 = arith.addf %131, %135 : vector<32x32xf32>
    %137 = arith.index_cast %c2_i32 : i32 to index
    %c0_52 = arith.constant 0 : index
    %c0_53 = arith.constant 0 : index
    %138 = vector.load %arg7[%137, %c0_52, %c0_53] : memref<8x32x32xf32, #tpu.memory_space<vmem>>, vector<1x32x32xf32>
    %139 = vector.shape_cast %138 : vector<1x32x32xf32> to vector<32x32xf32>
    %140 = vector.shape_cast %136 : vector<32x32xf32> to vector<1x32x32xf32>
    tpu.vector_store %arg7[%137, %c0_52, %c0_53], %140 {strides = array<i32>} : memref<8x32x32xf32, #tpu.memory_space<vmem>>, vector<1x32x32xf32>,
    %c3_i32 = arith.constant 3 : i32
    %141 = arith.truncf %136 : vector<32x32xf32> to vector<32x32xbf16>
    %142 = vector.extract_strided_slice %141 {offsets = [0, 0], sizes = [16, 32], strides = [1, 1]} : vector<32x32xbf16> to vector<16x32xbf16>
    %cst_54 = arith.constant dense<0.000000e+00> : vector<32x32xf32>
    %143 = tpu.matmul %0, %142, %cst_54 {dimension_numbers = #tpu.dot_dimension_numbers<[1], [0], [0], [1], [0, 0, 1, 1], [], []>} : vector<32x16xbf16>, vector<16x32xbf16>, vector<32x32xf32> -> vector<32x32xf32>
    %144 = arith.truncf %143 : vector<32x32xf32> to vector<32x32xbf16>
    %cst_55 = arith.constant dense<0.000000e+00> : vector<32x64xf32>
    %145 = tpu.matmul %141, %1, %cst_55 {dimension_numbers = #tpu.dot_dimension_numbers<[1], [0], [0], [1], [0, 0, 1, 1], [], []>} : vector<32x32xbf16>, vector<32x64xbf16>, vector<32x64xf32> -> vector<32x64xf32>
    %cst_56 = arith.constant dense<0.000000e+00> : vector<32x64xf32>
    %146 = tpu.matmul %144, %2, %cst_56 {dimension_numbers = #tpu.dot_dimension_numbers<[1], [0], [0], [1], [0, 0, 1, 1], [], []>} : vector<32x32xbf16>, vector<32x64xbf16>, vector<32x64xf32> -> vector<32x64xf32>
    %147 = arith.addf %145, %146 : vector<32x64xf32>
    %148 = arith.index_cast %c3_i32 : i32 to index
    %c0_57 = arith.constant 0 : index
    %c0_58 = arith.constant 0 : index
    %149 = vector.load %arg1[%148, %c0_57, %c0_58] : memref<8x32x64xf32, #tpu.memory_space<vmem>>, vector<1x32x64xf32>
    %150 = vector.shape_cast %149 : vector<1x32x64xf32> to vector<32x64xf32>
    %151 = arith.addf %147, %150 : vector<32x64xf32>
    %152 = vector.extract_strided_slice %151 {offsets = [0, 0], sizes = [32, 32], strides = [1, 1]} : vector<32x64xf32> to vector<32x32xf32>
    %153 = arith.negf %152 : vector<32x32xf32>
    %154 = math.exp %153 : vector<32x32xf32>
    %cst_59 = arith.constant 1.000000e+00 : f32
    %155 = vector.broadcast %cst_59 : f32 to vector<32x32xf32>
    %156 = arith.addf %155, %154 : vector<32x32xf32>
    %157 = arith.divf %155, %156 : vector<32x32xf32>
    %158 = vector.extract_strided_slice %151 {offsets = [0, 32], sizes = [32, 32], strides = [1, 1]} : vector<32x64xf32> to vector<32x32xf32>
    %159 = arith.negf %158 : vector<32x32xf32>
    %160 = math.exp %159 : vector<32x32xf32>
    %cst_60 = arith.constant 1.000000e+00 : f32
    %161 = vector.broadcast %cst_60 : f32 to vector<32x32xf32>
    %162 = arith.addf %161, %160 : vector<32x32xf32>
    %163 = arith.divf %161, %162 : vector<32x32xf32>
    %164 = arith.mulf %136, %163 : vector<32x32xf32>
    %165 = arith.truncf %164 : vector<32x32xf32> to vector<32x32xbf16>
    %166 = vector.extract_strided_slice %165 {offsets = [0, 0], sizes = [16, 32], strides = [1, 1]} : vector<32x32xbf16> to vector<16x32xbf16>
    %cst_61 = arith.constant dense<0.000000e+00> : vector<32x32xf32>
    %167 = tpu.matmul %0, %166, %cst_61 {dimension_numbers = #tpu.dot_dimension_numbers<[1], [0], [0], [1], [0, 0, 1, 1], [], []>} : vector<32x16xbf16>, vector<16x32xbf16>, vector<32x32xf32> -> vector<32x32xf32>
    %168 = arith.truncf %167 : vector<32x32xf32> to vector<32x32xbf16>
    %cst_62 = arith.constant dense<0.000000e+00> : vector<32x32xf32>
    %169 = tpu.matmul %165, %3, %cst_62 {dimension_numbers = #tpu.dot_dimension_numbers<[1], [0], [0], [1], [0, 0, 1, 1], [], []>} : vector<32x32xbf16>, vector<32x32xbf16>, vector<32x32xf32> -> vector<32x32xf32>
    %cst_63 = arith.constant dense<0.000000e+00> : vector<32x32xf32>
    %170 = tpu.matmul %168, %4, %cst_63 {dimension_numbers = #tpu.dot_dimension_numbers<[1], [0], [0], [1], [0, 0, 1, 1], [], []>} : vector<32x32xbf16>, vector<32x32xbf16>, vector<32x32xf32> -> vector<32x32xf32>
    %171 = arith.addf %169, %170 : vector<32x32xf32>
    %172 = arith.index_cast %c3_i32 : i32 to index
    %c0_64 = arith.constant 0 : index
    %c0_65 = arith.constant 0 : index
    %173 = vector.load %arg2[%172, %c0_64, %c0_65] : memref<8x32x32xf32, #tpu.memory_space<vmem>>, vector<1x32x32xf32>
    %174 = vector.shape_cast %173 : vector<1x32x32xf32> to vector<32x32xf32>
    %175 = arith.addf %171, %174 : vector<32x32xf32>
    %176 = arith.mulf %157, %136 : vector<32x32xf32>
    %cst_66 = arith.constant 1.000000e+00 : f32
    %177 = vector.broadcast %cst_66 : f32 to vector<32x32xf32>
    %178 = arith.subf %177, %157 : vector<32x32xf32>
    %179 = math.tanh %175 : vector<32x32xf32>
    %180 = arith.mulf %178, %179 : vector<32x32xf32>
    %181 = arith.addf %176, %180 : vector<32x32xf32>
    %182 = arith.index_cast %c3_i32 : i32 to index
    %c0_67 = arith.constant 0 : index
    %c0_68 = arith.constant 0 : index
    %183 = vector.load %arg7[%182, %c0_67, %c0_68] : memref<8x32x32xf32, #tpu.memory_space<vmem>>, vector<1x32x32xf32>
    %184 = vector.shape_cast %183 : vector<1x32x32xf32> to vector<32x32xf32>
    %185 = vector.shape_cast %181 : vector<32x32xf32> to vector<1x32x32xf32>
    tpu.vector_store %arg7[%182, %c0_67, %c0_68], %185 {strides = array<i32>} : memref<8x32x32xf32, #tpu.memory_space<vmem>>, vector<1x32x32xf32>,
    %c4_i32 = arith.constant 4 : i32
    %186 = arith.truncf %181 : vector<32x32xf32> to vector<32x32xbf16>
    %187 = vector.extract_strided_slice %186 {offsets = [0, 0], sizes = [16, 32], strides = [1, 1]} : vector<32x32xbf16> to vector<16x32xbf16>
    %cst_69 = arith.constant dense<0.000000e+00> : vector<32x32xf32>
    %188 = tpu.matmul %0, %187, %cst_69 {dimension_numbers = #tpu.dot_dimension_numbers<[1], [0], [0], [1], [0, 0, 1, 1], [], []>} : vector<32x16xbf16>, vector<16x32xbf16>, vector<32x32xf32> -> vector<32x32xf32>
    %189 = arith.truncf %188 : vector<32x32xf32> to vector<32x32xbf16>
    %cst_70 = arith.constant dense<0.000000e+00> : vector<32x64xf32>
    %190 = tpu.matmul %186, %1, %cst_70 {dimension_numbers = #tpu.dot_dimension_numbers<[1], [0], [0], [1], [0, 0, 1, 1], [], []>} : vector<32x32xbf16>, vector<32x64xbf16>, vector<32x64xf32> -> vector<32x64xf32>
    %cst_71 = arith.constant dense<0.000000e+00> : vector<32x64xf32>
    %191 = tpu.matmul %189, %2, %cst_71 {dimension_numbers = #tpu.dot_dimension_numbers<[1], [0], [0], [1], [0, 0, 1, 1], [], []>} : vector<32x32xbf16>, vector<32x64xbf16>, vector<32x64xf32> -> vector<32x64xf32>
    %192 = arith.addf %190, %191 : vector<32x64xf32>
    %193 = arith.index_cast %c4_i32 : i32 to index
    %c0_72 = arith.constant 0 : index
    %c0_73 = arith.constant 0 : index
    %194 = vector.load %arg1[%193, %c0_72, %c0_73] : memref<8x32x64xf32, #tpu.memory_space<vmem>>, vector<1x32x64xf32>
    %195 = vector.shape_cast %194 : vector<1x32x64xf32> to vector<32x64xf32>
    %196 = arith.addf %192, %195 : vector<32x64xf32>
    %197 = vector.extract_strided_slice %196 {offsets = [0, 0], sizes = [32, 32], strides = [1, 1]} : vector<32x64xf32> to vector<32x32xf32>
    %198 = arith.negf %197 : vector<32x32xf32>
    %199 = math.exp %198 : vector<32x32xf32>
    %cst_74 = arith.constant 1.000000e+00 : f32
    %200 = vector.broadcast %cst_74 : f32 to vector<32x32xf32>
    %201 = arith.addf %200, %199 : vector<32x32xf32>
    %202 = arith.divf %200, %201 : vector<32x32xf32>
    %203 = vector.extract_strided_slice %196 {offsets = [0, 32], sizes = [32, 32], strides = [1, 1]} : vector<32x64xf32> to vector<32x32xf32>
    %204 = arith.negf %203 : vector<32x32xf32>
    %205 = math.exp %204 : vector<32x32xf32>
    %cst_75 = arith.constant 1.000000e+00 : f32
    %206 = vector.broadcast %cst_75 : f32 to vector<32x32xf32>
    %207 = arith.addf %206, %205 : vector<32x32xf32>
    %208 = arith.divf %206, %207 : vector<32x32xf32>
    %209 = arith.mulf %181, %208 : vector<32x32xf32>
    %210 = arith.truncf %209 : vector<32x32xf32> to vector<32x32xbf16>
    %211 = vector.extract_strided_slice %210 {offsets = [0, 0], sizes = [16, 32], strides = [1, 1]} : vector<32x32xbf16> to vector<16x32xbf16>
    %cst_76 = arith.constant dense<0.000000e+00> : vector<32x32xf32>
    %212 = tpu.matmul %0, %211, %cst_76 {dimension_numbers = #tpu.dot_dimension_numbers<[1], [0], [0], [1], [0, 0, 1, 1], [], []>} : vector<32x16xbf16>, vector<16x32xbf16>, vector<32x32xf32> -> vector<32x32xf32>
    %213 = arith.truncf %212 : vector<32x32xf32> to vector<32x32xbf16>
    %cst_77 = arith.constant dense<0.000000e+00> : vector<32x32xf32>
    %214 = tpu.matmul %210, %3, %cst_77 {dimension_numbers = #tpu.dot_dimension_numbers<[1], [0], [0], [1], [0, 0, 1, 1], [], []>} : vector<32x32xbf16>, vector<32x32xbf16>, vector<32x32xf32> -> vector<32x32xf32>
    %cst_78 = arith.constant dense<0.000000e+00> : vector<32x32xf32>
    %215 = tpu.matmul %213, %4, %cst_78 {dimension_numbers = #tpu.dot_dimension_numbers<[1], [0], [0], [1], [0, 0, 1, 1], [], []>} : vector<32x32xbf16>, vector<32x32xbf16>, vector<32x32xf32> -> vector<32x32xf32>
    %216 = arith.addf %214, %215 : vector<32x32xf32>
    %217 = arith.index_cast %c4_i32 : i32 to index
    %c0_79 = arith.constant 0 : index
    %c0_80 = arith.constant 0 : index
    %218 = vector.load %arg2[%217, %c0_79, %c0_80] : memref<8x32x32xf32, #tpu.memory_space<vmem>>, vector<1x32x32xf32>
    %219 = vector.shape_cast %218 : vector<1x32x32xf32> to vector<32x32xf32>
    %220 = arith.addf %216, %219 : vector<32x32xf32>
    %221 = arith.mulf %202, %181 : vector<32x32xf32>
    %cst_81 = arith.constant 1.000000e+00 : f32
    %222 = vector.broadcast %cst_81 : f32 to vector<32x32xf32>
    %223 = arith.subf %222, %202 : vector<32x32xf32>
    %224 = math.tanh %220 : vector<32x32xf32>
    %225 = arith.mulf %223, %224 : vector<32x32xf32>
    %226 = arith.addf %221, %225 : vector<32x32xf32>
    %227 = arith.index_cast %c4_i32 : i32 to index
    %c0_82 = arith.constant 0 : index
    %c0_83 = arith.constant 0 : index
    %228 = vector.load %arg7[%227, %c0_82, %c0_83] : memref<8x32x32xf32, #tpu.memory_space<vmem>>, vector<1x32x32xf32>
    %229 = vector.shape_cast %228 : vector<1x32x32xf32> to vector<32x32xf32>
    %230 = vector.shape_cast %226 : vector<32x32xf32> to vector<1x32x32xf32>
    tpu.vector_store %arg7[%227, %c0_82, %c0_83], %230 {strides = array<i32>} : memref<8x32x32xf32, #tpu.memory_space<vmem>>, vector<1x32x32xf32>,
    %c5_i32 = arith.constant 5 : i32
    %231 = arith.truncf %226 : vector<32x32xf32> to vector<32x32xbf16>
    %232 = vector.extract_strided_slice %231 {offsets = [0, 0], sizes = [16, 32], strides = [1, 1]} : vector<32x32xbf16> to vector<16x32xbf16>
    %cst_84 = arith.constant dense<0.000000e+00> : vector<32x32xf32>
    %233 = tpu.matmul %0, %232, %cst_84 {dimension_numbers = #tpu.dot_dimension_numbers<[1], [0], [0], [1], [0, 0, 1, 1], [], []>} : vector<32x16xbf16>, vector<16x32xbf16>, vector<32x32xf32> -> vector<32x32xf32>
    %234 = arith.truncf %233 : vector<32x32xf32> to vector<32x32xbf16>
    %cst_85 = arith.constant dense<0.000000e+00> : vector<32x64xf32>
    %235 = tpu.matmul %231, %1, %cst_85 {dimension_numbers = #tpu.dot_dimension_numbers<[1], [0], [0], [1], [0, 0, 1, 1], [], []>} : vector<32x32xbf16>, vector<32x64xbf16>, vector<32x64xf32> -> vector<32x64xf32>
    %cst_86 = arith.constant dense<0.000000e+00> : vector<32x64xf32>
    %236 = tpu.matmul %234, %2, %cst_86 {dimension_numbers = #tpu.dot_dimension_numbers<[1], [0], [0], [1], [0, 0, 1, 1], [], []>} : vector<32x32xbf16>, vector<32x64xbf16>, vector<32x64xf32> -> vector<32x64xf32>
    %237 = arith.addf %235, %236 : vector<32x64xf32>
    %238 = arith.index_cast %c5_i32 : i32 to index
    %c0_87 = arith.constant 0 : index
    %c0_88 = arith.constant 0 : index
    %239 = vector.load %arg1[%238, %c0_87, %c0_88] : memref<8x32x64xf32, #tpu.memory_space<vmem>>, vector<1x32x64xf32>
    %240 = vector.shape_cast %239 : vector<1x32x64xf32> to vector<32x64xf32>
    %241 = arith.addf %237, %240 : vector<32x64xf32>
    %242 = vector.extract_strided_slice %241 {offsets = [0, 0], sizes = [32, 32], strides = [1, 1]} : vector<32x64xf32> to vector<32x32xf32>
    %243 = arith.negf %242 : vector<32x32xf32>
    %244 = math.exp %243 : vector<32x32xf32>
    %cst_89 = arith.constant 1.000000e+00 : f32
    %245 = vector.broadcast %cst_89 : f32 to vector<32x32xf32>
    %246 = arith.addf %245, %244 : vector<32x32xf32>
    %247 = arith.divf %245, %246 : vector<32x32xf32>
    %248 = vector.extract_strided_slice %241 {offsets = [0, 32], sizes = [32, 32], strides = [1, 1]} : vector<32x64xf32> to vector<32x32xf32>
    %249 = arith.negf %248 : vector<32x32xf32>
    %250 = math.exp %249 : vector<32x32xf32>
    %cst_90 = arith.constant 1.000000e+00 : f32
    %251 = vector.broadcast %cst_90 : f32 to vector<32x32xf32>
    %252 = arith.addf %251, %250 : vector<32x32xf32>
    %253 = arith.divf %251, %252 : vector<32x32xf32>
    %254 = arith.mulf %226, %253 : vector<32x32xf32>
    %255 = arith.truncf %254 : vector<32x32xf32> to vector<32x32xbf16>
    %256 = vector.extract_strided_slice %255 {offsets = [0, 0], sizes = [16, 32], strides = [1, 1]} : vector<32x32xbf16> to vector<16x32xbf16>
    %cst_91 = arith.constant dense<0.000000e+00> : vector<32x32xf32>
    %257 = tpu.matmul %0, %256, %cst_91 {dimension_numbers = #tpu.dot_dimension_numbers<[1], [0], [0], [1], [0, 0, 1, 1], [], []>} : vector<32x16xbf16>, vector<16x32xbf16>, vector<32x32xf32> -> vector<32x32xf32>
    %258 = arith.truncf %257 : vector<32x32xf32> to vector<32x32xbf16>
    %cst_92 = arith.constant dense<0.000000e+00> : vector<32x32xf32>
    %259 = tpu.matmul %255, %3, %cst_92 {dimension_numbers = #tpu.dot_dimension_numbers<[1], [0], [0], [1], [0, 0, 1, 1], [], []>} : vector<32x32xbf16>, vector<32x32xbf16>, vector<32x32xf32> -> vector<32x32xf32>
    %cst_93 = arith.constant dense<0.000000e+00> : vector<32x32xf32>
    %260 = tpu.matmul %258, %4, %cst_93 {dimension_numbers = #tpu.dot_dimension_numbers<[1], [0], [0], [1], [0, 0, 1, 1], [], []>} : vector<32x32xbf16>, vector<32x32xbf16>, vector<32x32xf32> -> vector<32x32xf32>
    %261 = arith.addf %259, %260 : vector<32x32xf32>
    %262 = arith.index_cast %c5_i32 : i32 to index
    %c0_94 = arith.constant 0 : index
    %c0_95 = arith.constant 0 : index
    %263 = vector.load %arg2[%262, %c0_94, %c0_95] : memref<8x32x32xf32, #tpu.memory_space<vmem>>, vector<1x32x32xf32>
    %264 = vector.shape_cast %263 : vector<1x32x32xf32> to vector<32x32xf32>
    %265 = arith.addf %261, %264 : vector<32x32xf32>
    %266 = arith.mulf %247, %226 : vector<32x32xf32>
    %cst_96 = arith.constant 1.000000e+00 : f32
    %267 = vector.broadcast %cst_96 : f32 to vector<32x32xf32>
    %268 = arith.subf %267, %247 : vector<32x32xf32>
    %269 = math.tanh %265 : vector<32x32xf32>
    %270 = arith.mulf %268, %269 : vector<32x32xf32>
    %271 = arith.addf %266, %270 : vector<32x32xf32>
    %272 = arith.index_cast %c5_i32 : i32 to index
    %c0_97 = arith.constant 0 : index
    %c0_98 = arith.constant 0 : index
    %273 = vector.load %arg7[%272, %c0_97, %c0_98] : memref<8x32x32xf32, #tpu.memory_space<vmem>>, vector<1x32x32xf32>
    %274 = vector.shape_cast %273 : vector<1x32x32xf32> to vector<32x32xf32>
    %275 = vector.shape_cast %271 : vector<32x32xf32> to vector<1x32x32xf32>
    tpu.vector_store %arg7[%272, %c0_97, %c0_98], %275 {strides = array<i32>} : memref<8x32x32xf32, #tpu.memory_space<vmem>>, vector<1x32x32xf32>,
    %c6_i32 = arith.constant 6 : i32
    %276 = arith.truncf %271 : vector<32x32xf32> to vector<32x32xbf16>
    %277 = vector.extract_strided_slice %276 {offsets = [0, 0], sizes = [16, 32], strides = [1, 1]} : vector<32x32xbf16> to vector<16x32xbf16>
    %cst_99 = arith.constant dense<0.000000e+00> : vector<32x32xf32>
    %278 = tpu.matmul %0, %277, %cst_99 {dimension_numbers = #tpu.dot_dimension_numbers<[1], [0], [0], [1], [0, 0, 1, 1], [], []>} : vector<32x16xbf16>, vector<16x32xbf16>, vector<32x32xf32> -> vector<32x32xf32>
    %279 = arith.truncf %278 : vector<32x32xf32> to vector<32x32xbf16>
    %cst_100 = arith.constant dense<0.000000e+00> : vector<32x64xf32>
    %280 = tpu.matmul %276, %1, %cst_100 {dimension_numbers = #tpu.dot_dimension_numbers<[1], [0], [0], [1], [0, 0, 1, 1], [], []>} : vector<32x32xbf16>, vector<32x64xbf16>, vector<32x64xf32> -> vector<32x64xf32>
    %cst_101 = arith.constant dense<0.000000e+00> : vector<32x64xf32>
    %281 = tpu.matmul %279, %2, %cst_101 {dimension_numbers = #tpu.dot_dimension_numbers<[1], [0], [0], [1], [0, 0, 1, 1], [], []>} : vector<32x32xbf16>, vector<32x64xbf16>, vector<32x64xf32> -> vector<32x64xf32>
    %282 = arith.addf %280, %281 : vector<32x64xf32>
    %283 = arith.index_cast %c6_i32 : i32 to index
    %c0_102 = arith.constant 0 : index
    %c0_103 = arith.constant 0 : index
    %284 = vector.load %arg1[%283, %c0_102, %c0_103] : memref<8x32x64xf32, #tpu.memory_space<vmem>>, vector<1x32x64xf32>
    %285 = vector.shape_cast %284 : vector<1x32x64xf32> to vector<32x64xf32>
    %286 = arith.addf %282, %285 : vector<32x64xf32>
    %287 = vector.extract_strided_slice %286 {offsets = [0, 0], sizes = [32, 32], strides = [1, 1]} : vector<32x64xf32> to vector<32x32xf32>
    %288 = arith.negf %287 : vector<32x32xf32>
    %289 = math.exp %288 : vector<32x32xf32>
    %cst_104 = arith.constant 1.000000e+00 : f32
    %290 = vector.broadcast %cst_104 : f32 to vector<32x32xf32>
    %291 = arith.addf %290, %289 : vector<32x32xf32>
    %292 = arith.divf %290, %291 : vector<32x32xf32>
    %293 = vector.extract_strided_slice %286 {offsets = [0, 32], sizes = [32, 32], strides = [1, 1]} : vector<32x64xf32> to vector<32x32xf32>
    %294 = arith.negf %293 : vector<32x32xf32>
    %295 = math.exp %294 : vector<32x32xf32>
    %cst_105 = arith.constant 1.000000e+00 : f32
    %296 = vector.broadcast %cst_105 : f32 to vector<32x32xf32>
    %297 = arith.addf %296, %295 : vector<32x32xf32>
    %298 = arith.divf %296, %297 : vector<32x32xf32>
    %299 = arith.mulf %271, %298 : vector<32x32xf32>
    %300 = arith.truncf %299 : vector<32x32xf32> to vector<32x32xbf16>
    %301 = vector.extract_strided_slice %300 {offsets = [0, 0], sizes = [16, 32], strides = [1, 1]} : vector<32x32xbf16> to vector<16x32xbf16>
    %cst_106 = arith.constant dense<0.000000e+00> : vector<32x32xf32>
    %302 = tpu.matmul %0, %301, %cst_106 {dimension_numbers = #tpu.dot_dimension_numbers<[1], [0], [0], [1], [0, 0, 1, 1], [], []>} : vector<32x16xbf16>, vector<16x32xbf16>, vector<32x32xf32> -> vector<32x32xf32>
    %303 = arith.truncf %302 : vector<32x32xf32> to vector<32x32xbf16>
    %cst_107 = arith.constant dense<0.000000e+00> : vector<32x32xf32>
    %304 = tpu.matmul %300, %3, %cst_107 {dimension_numbers = #tpu.dot_dimension_numbers<[1], [0], [0], [1], [0, 0, 1, 1], [], []>} : vector<32x32xbf16>, vector<32x32xbf16>, vector<32x32xf32> -> vector<32x32xf32>
    %cst_108 = arith.constant dense<0.000000e+00> : vector<32x32xf32>
    %305 = tpu.matmul %303, %4, %cst_108 {dimension_numbers = #tpu.dot_dimension_numbers<[1], [0], [0], [1], [0, 0, 1, 1], [], []>} : vector<32x32xbf16>, vector<32x32xbf16>, vector<32x32xf32> -> vector<32x32xf32>
    %306 = arith.addf %304, %305 : vector<32x32xf32>
    %307 = arith.index_cast %c6_i32 : i32 to index
    %c0_109 = arith.constant 0 : index
    %c0_110 = arith.constant 0 : index
    %308 = vector.load %arg2[%307, %c0_109, %c0_110] : memref<8x32x32xf32, #tpu.memory_space<vmem>>, vector<1x32x32xf32>
    %309 = vector.shape_cast %308 : vector<1x32x32xf32> to vector<32x32xf32>
    %310 = arith.addf %306, %309 : vector<32x32xf32>
    %311 = arith.mulf %292, %271 : vector<32x32xf32>
    %cst_111 = arith.constant 1.000000e+00 : f32
    %312 = vector.broadcast %cst_111 : f32 to vector<32x32xf32>
    %313 = arith.subf %312, %292 : vector<32x32xf32>
    %314 = math.tanh %310 : vector<32x32xf32>
    %315 = arith.mulf %313, %314 : vector<32x32xf32>
    %316 = arith.addf %311, %315 : vector<32x32xf32>
    %317 = arith.index_cast %c6_i32 : i32 to index
    %c0_112 = arith.constant 0 : index
    %c0_113 = arith.constant 0 : index
    %318 = vector.load %arg7[%317, %c0_112, %c0_113] : memref<8x32x32xf32, #tpu.memory_space<vmem>>, vector<1x32x32xf32>
    %319 = vector.shape_cast %318 : vector<1x32x32xf32> to vector<32x32xf32>
    %320 = vector.shape_cast %316 : vector<32x32xf32> to vector<1x32x32xf32>
    tpu.vector_store %arg7[%317, %c0_112, %c0_113], %320 {strides = array<i32>} : memref<8x32x32xf32, #tpu.memory_space<vmem>>, vector<1x32x32xf32>,
    %c7_i32 = arith.constant 7 : i32
    %321 = arith.truncf %316 : vector<32x32xf32> to vector<32x32xbf16>
    %322 = vector.extract_strided_slice %321 {offsets = [0, 0], sizes = [16, 32], strides = [1, 1]} : vector<32x32xbf16> to vector<16x32xbf16>
    %cst_114 = arith.constant dense<0.000000e+00> : vector<32x32xf32>
    %323 = tpu.matmul %0, %322, %cst_114 {dimension_numbers = #tpu.dot_dimension_numbers<[1], [0], [0], [1], [0, 0, 1, 1], [], []>} : vector<32x16xbf16>, vector<16x32xbf16>, vector<32x32xf32> -> vector<32x32xf32>
    %324 = arith.truncf %323 : vector<32x32xf32> to vector<32x32xbf16>
    %cst_115 = arith.constant dense<0.000000e+00> : vector<32x64xf32>
    %325 = tpu.matmul %321, %1, %cst_115 {dimension_numbers = #tpu.dot_dimension_numbers<[1], [0], [0], [1], [0, 0, 1, 1], [], []>} : vector<32x32xbf16>, vector<32x64xbf16>, vector<32x64xf32> -> vector<32x64xf32>
    %cst_116 = arith.constant dense<0.000000e+00> : vector<32x64xf32>
    %326 = tpu.matmul %324, %2, %cst_116 {dimension_numbers = #tpu.dot_dimension_numbers<[1], [0], [0], [1], [0, 0, 1, 1], [], []>} : vector<32x32xbf16>, vector<32x64xbf16>, vector<32x64xf32> -> vector<32x64xf32>
    %327 = arith.addf %325, %326 : vector<32x64xf32>
    %328 = arith.index_cast %c7_i32 : i32 to index
    %c0_117 = arith.constant 0 : index
    %c0_118 = arith.constant 0 : index
    %329 = vector.load %arg1[%328, %c0_117, %c0_118] : memref<8x32x64xf32, #tpu.memory_space<vmem>>, vector<1x32x64xf32>
    %330 = vector.shape_cast %329 : vector<1x32x64xf32> to vector<32x64xf32>
    %331 = arith.addf %327, %330 : vector<32x64xf32>
    %332 = vector.extract_strided_slice %331 {offsets = [0, 0], sizes = [32, 32], strides = [1, 1]} : vector<32x64xf32> to vector<32x32xf32>
    %333 = arith.negf %332 : vector<32x32xf32>
    %334 = math.exp %333 : vector<32x32xf32>
    %cst_119 = arith.constant 1.000000e+00 : f32
    %335 = vector.broadcast %cst_119 : f32 to vector<32x32xf32>
    %336 = arith.addf %335, %334 : vector<32x32xf32>
    %337 = arith.divf %335, %336 : vector<32x32xf32>
    %338 = vector.extract_strided_slice %331 {offsets = [0, 32], sizes = [32, 32], strides = [1, 1]} : vector<32x64xf32> to vector<32x32xf32>
    %339 = arith.negf %338 : vector<32x32xf32>
    %340 = math.exp %339 : vector<32x32xf32>
    %cst_120 = arith.constant 1.000000e+00 : f32
    %341 = vector.broadcast %cst_120 : f32 to vector<32x32xf32>
    %342 = arith.addf %341, %340 : vector<32x32xf32>
    %343 = arith.divf %341, %342 : vector<32x32xf32>
    %344 = arith.mulf %316, %343 : vector<32x32xf32>
    %345 = arith.truncf %344 : vector<32x32xf32> to vector<32x32xbf16>
    %346 = vector.extract_strided_slice %345 {offsets = [0, 0], sizes = [16, 32], strides = [1, 1]} : vector<32x32xbf16> to vector<16x32xbf16>
    %cst_121 = arith.constant dense<0.000000e+00> : vector<32x32xf32>
    %347 = tpu.matmul %0, %346, %cst_121 {dimension_numbers = #tpu.dot_dimension_numbers<[1], [0], [0], [1], [0, 0, 1, 1], [], []>} : vector<32x16xbf16>, vector<16x32xbf16>, vector<32x32xf32> -> vector<32x32xf32>
    %348 = arith.truncf %347 : vector<32x32xf32> to vector<32x32xbf16>
    %cst_122 = arith.constant dense<0.000000e+00> : vector<32x32xf32>
    %349 = tpu.matmul %345, %3, %cst_122 {dimension_numbers = #tpu.dot_dimension_numbers<[1], [0], [0], [1], [0, 0, 1, 1], [], []>} : vector<32x32xbf16>, vector<32x32xbf16>, vector<32x32xf32> -> vector<32x32xf32>
    %cst_123 = arith.constant dense<0.000000e+00> : vector<32x32xf32>
    %350 = tpu.matmul %348, %4, %cst_123 {dimension_numbers = #tpu.dot_dimension_numbers<[1], [0], [0], [1], [0, 0, 1, 1], [], []>} : vector<32x32xbf16>, vector<32x32xbf16>, vector<32x32xf32> -> vector<32x32xf32>
    %351 = arith.addf %349, %350 : vector<32x32xf32>
    %352 = arith.index_cast %c7_i32 : i32 to index
    %c0_124 = arith.constant 0 : index
    %c0_125 = arith.constant 0 : index
    %353 = vector.load %arg2[%352, %c0_124, %c0_125] : memref<8x32x32xf32, #tpu.memory_space<vmem>>, vector<1x32x32xf32>
    %354 = vector.shape_cast %353 : vector<1x32x32xf32> to vector<32x32xf32>
    %355 = arith.addf %351, %354 : vector<32x32xf32>
    %356 = arith.mulf %337, %316 : vector<32x32xf32>
    %cst_126 = arith.constant 1.000000e+00 : f32
    %357 = vector.broadcast %cst_126 : f32 to vector<32x32xf32>
    %358 = arith.subf %357, %337 : vector<32x32xf32>
    %359 = math.tanh %355 : vector<32x32xf32>
    %360 = arith.mulf %358, %359 : vector<32x32xf32>
    %361 = arith.addf %356, %360 : vector<32x32xf32>
    %362 = arith.index_cast %c7_i32 : i32 to index
    %c0_127 = arith.constant 0 : index
    %c0_128 = arith.constant 0 : index
    %363 = vector.load %arg7[%362, %c0_127, %c0_128] : memref<8x32x32xf32, #tpu.memory_space<vmem>>, vector<1x32x32xf32>
    %364 = vector.shape_cast %363 : vector<1x32x32xf32> to vector<32x32xf32>
    %365 = vector.shape_cast %361 : vector<32x32xf32> to vector<1x32x32xf32>
    tpu.vector_store %arg7[%362, %c0_127, %c0_128], %365 {strides = array<i32>} : memref<8x32x32xf32, #tpu.memory_space<vmem>>, vector<1x32x32xf32>,
    %c8_i32 = arith.constant 8 : i32
    return
  }
}

</mosaic_0001>

<llo_original>
// kernel: tgcn_forward.1
$region0: #{tgcn_forward.1}
  #allocation0 [shape = 'u32[]', space=smem, size = 0x4, offset = 0x4, fixed_abs, tag = 'smem constant byte address 0x4 - core index']
  #allocation1 [shape = 'u32[144,128]{1,0:T(1,128)}', space=vmem, size = 0x12000, scoped, tag = 'internal scratch']
  %s0 = inlined_call_operand.vmem [shape: bf16[32,16], index: 0, kind: input, shape index: {}]
  %s1 = inlined_call_operand.vmem [shape: f32[8,32,64], index: 1, kind: input, shape index: {}]
  %s2 = inlined_call_operand.vmem [shape: f32[8,32,32], index: 2, kind: input, shape index: {}]
  %s3 = inlined_call_operand.vmem [shape: bf16[32,64], index: 3, kind: input, shape index: {}]
  %s4 = inlined_call_operand.vmem [shape: bf16[32,64], index: 4, kind: input, shape index: {}]
  %s5 = inlined_call_operand.vmem [shape: bf16[32,32], index: 5, kind: input, shape index: {}]
  %s6 = inlined_call_operand.vmem [shape: bf16[32,32], index: 6, kind: input, shape index: {}]
  %s7 = inlined_call_operand.vmem [shape: f32[8,32,32], index: 7, kind: output, shape index: {}]
  %s8 = sld [smem:[#allocation0]]
  $region38: #{tgcn_forward.1} parent=0
    _
  %s10 = ssub.s32 1, %s8
  %s11 = scalar_select 0, %s10, %s8
  // Predicated region
  $region2: #{tgcn_forward.1} parent=0 // pred_check
    _
  $region3: #{tgcn_forward.1} parent=0 // pred_check_branch
    %13 = sbr.rel (0) target = $region5
  $region4: #{tgcn_forward.1} parent=0 // pred_region
    _
  $region5: #{tgcn_forward.1} parent=0 // pred_fallthru
    _
  // Predicated region
  $region6: #{tgcn_forward.1} parent=0 // pred_check
    _
  $region7: #{tgcn_forward.1} parent=0 // pred_check_branch
    %15 = sbr.rel (0) target = $region9
  $region8: #{tgcn_forward.1} parent=0 // pred_region
    _
  $region9: #{tgcn_forward.1} parent=0 // pred_fallthru
    _
  // Predicated region
  $region10: #{tgcn_forward.1} parent=0 // pred_check
    _
  $region11: #{tgcn_forward.1} parent=0 // pred_check_branch
    %17 = sbr.rel (0) target = $region13
  $region12: #{tgcn_forward.1} parent=0 // pred_region
    _
  $region13: #{tgcn_forward.1} parent=0 // pred_fallthru
    _
  // Predicated region
  $region14: #{tgcn_forward.1} parent=0 // pred_check
    _
  $region15: #{tgcn_forward.1} parent=0 // pred_check_branch
    %19 = sbr.rel (0) target = $region17
  $region16: #{tgcn_forward.1} parent=0 // pred_region
    _
  $region17: #{tgcn_forward.1} parent=0 // pred_fallthru
    _
  // Predicated region
  $region18: #{tgcn_forward.1} parent=0 // pred_check
    _
  $region19: #{tgcn_forward.1} parent=0 // pred_check_branch
    %21 = sbr.rel (0) target = $region21
  $region20: #{tgcn_forward.1} parent=0 // pred_region
    _
  $region21: #{tgcn_forward.1} parent=0 // pred_fallthru
    _
  // Predicated region
  $region22: #{tgcn_forward.1} parent=0 // pred_check
    _
  $region23: #{tgcn_forward.1} parent=0 // pred_check_branch
    %23 = sbr.rel (0) target = $region25
  $region24: #{tgcn_forward.1} parent=0 // pred_region
    _
  $region25: #{tgcn_forward.1} parent=0 // pred_fallthru
    _
  // Predicated region
  $region26: #{tgcn_forward.1} parent=0 // pred_check
    _
  $region27: #{tgcn_forward.1} parent=0 // pred_check_branch
    %25 = sbr.rel (0) target = $region29
  $region28: #{tgcn_forward.1} parent=0 // pred_region
    _
  $region29: #{tgcn_forward.1} parent=0 // pred_fallthru
    _
  %v27 = vld [vmem:[%s0] sm:$0xf]
  %v28 = vld [vmem:[%s0 + $0x4] sm:$0xf]
  %v29 = vld [vmem:[%s0 + $0x8] sm:$0xf]
  %v30 = vld [vmem:[%s0 + $0xc] sm:$0xf]
  %v31 = vld [vmem:[%s3] sm:$0xf]
  %v32 = vld [vmem:[%s3 + $0x4] sm:$0xf]
  %v33 = vld [vmem:[%s3 + $0x8] sm:$0xf]
  %v34 = vld [vmem:[%s3 + $0xc] sm:$0xf]
  %v35 = vld [vmem:[%s4] sm:$0xf]
  %v36 = vld [vmem:[%s4 + $0x4] sm:$0xf]
  %v37 = vld [vmem:[%s4 + $0x8] sm:$0xf]
  %v38 = vld [vmem:[%s4 + $0xc] sm:$0xf]
  %v39 = vld [vmem:[%s5] sm:$0xf]
  %v40 = vld [vmem:[%s5 + $0x4] sm:$0xf]
  %v41 = vld [vmem:[%s5 + $0x8] sm:$0xf]
  %v42 = vld [vmem:[%s5 + $0xc] sm:$0xf]
  %v43 = vld [vmem:[%s6] sm:$0xf]
  %v44 = vld [vmem:[%s6 + $0x4] sm:$0xf]
  %v45 = vld [vmem:[%s6 + $0x8] sm:$0xf]
  %v46 = vld [vmem:[%s6 + $0xc] sm:$0xf]
  %v51 = vunpack.c.l.b16 %v27
  %v52 = vunpack.c.l.b16 %v28
  %v53 = vunpack.c.l.b16 %v29
  %v54 = vunpack.c.l.b16 %v30
  %v55 = vpack.c.b16 %v52, %v51
  %v56 = vpack.c.b16 %v54, %v53
  %vm57 = vcmask 130048
  %v59 = vsel %vm57, %v55, 0
  %v62 = vsel %vm57, %v56, 0
  %64 = vmatprep.subr.bf16.mxu0 0
  %65 = vmatpush1.bf16.msra.mxu0 0
  %66 = vmatprep.subr.bf16.mxu0 0
  %67 = vmatpush1.bf16.msra.mxu0 0
  %68 = vmatprep.subr.bf16.mxu0 0
  %69 = vmatpush1.bf16.msra.mxu0 0
  %70 = vmatprep.subr.bf16.mxu0 0
  %71 = vmatpush1.bf16.msra.mxu0 0
  %72 = vmatprep.subr.bf16.mxu0 0
  %73 = vmatpush1.bf16.msra.mxu0 0
  %74 = vmatprep.subr.bf16.mxu0 0
  %75 = vmatpush1.bf16.msra.mxu0 0
  %76 = vmatprep.subr.bf16.mxu0 0
  %77 = vmatpush1.bf16.msra.mxu0 0
  %78 = vmatprep.subr.bf16.mxu0 0
  %79 = vmatpush1.bf16.msra.mxu0 0
  %80 = vmatprep.subr.bf16.mxu0 0
  %81 = vmatpush2.bf16.msra.mxu0 0
  %82 = vmatprep.subr.bf16.mxu0 0
  %83 = vmatpush2.bf16.msra.mxu0 0
  %84 = vmatprep.subr.bf16.mxu0 0
  %85 = vmatpush2.bf16.msra.mxu0 0
  %86 = vmatprep.subr.bf16.mxu0 0
  %87 = vmatpush2.bf16.msra.mxu0 0
  %88 = vmatprep.subr.bf16.mxu0 0
  %89 = vmatpush2.bf16.msra.mxu0 0
  %90 = vmatprep.subr.bf16.mxu0 0
  %91 = vmatpush2.bf16.msra.mxu0 0
  %92 = vmatprep.subr.bf16.mxu0 0
  %93 = vmatpush2.bf16.msra.mxu0 0
  %94 = vmatprep.subr.bf16.mxu0 0
  %95 = vmatpush2.bf16.msra.mxu0 0
  %96 = vmatprep.mubr.bf16.mxu0 0
  %97 = vmatmul.mubr.bf16.gmra.mxu0 %v59
  %v98 = vpop.f32.mrf.mxu0
  %v99 = vadd.f32 0.0, %v98
  %v100 = vpop.f32.mrf.mxu0
  %v101 = vpop.f32.mrf.mxu0
  %v102 = vadd.f32 0.0, %v101
  %v103 = vpop.f32.mrf.mxu0
  %104 = vmatprep.mubr.bf16.mxu0 0
  %105 = vmatmul.mubr.bf16.gmra.mxu0 %v62
  %v106 = vpop.f32.mrf.mxu0
  %v107 = vadd.f32 0.0, %v106
  %v108 = vpop.f32.mrf.mxu0
  %v109 = vpop.f32.mrf.mxu0
  %v110 = vadd.f32 0.0, %v109
  %v111 = vpop.f32.mrf.mxu0
  %112 = vdwg.mxu0
  %v113 = vpack.c.bf16 %v102, %v99
  %v114 = vpack.c.bf16 %v110, %v107
  %v119 = vunpack.c.l.b16 %v35
  %v120 = vunpack.c.l.b16 %v36
  %v121 = vunpack.c.l.b16 %v37
  %v122 = vunpack.c.l.b16 %v38
  %v123 = vpack.c.b16 %v120, %v119
  %v124 = vpack.c.b16 %v122, %v121
  %vm127 = vcmask 261120
  %v129 = vsel %vm127, %v113, 0
  %v132 = vsel %vm127, %v114, 0
  %134 = vmatprep.subr.bf16.mxu0 0
  %135 = vmatpush1.bf16.msra.mxu0 0
  %136 = vmatprep.subr.bf16.mxu0 0
  %137 = vmatpush1.bf16.msra.mxu0 0
  %138 = vmatprep.subr.bf16.mxu0 0
  %139 = vmatpush1.bf16.msra.mxu0 0
  %140 = vmatprep.subr.bf16.mxu0 0
  %141 = vmatpush1.bf16.msra.mxu0 0
  %142 = vmatprep.subr.bf16.mxu0 0
  %143 = vmatpush1.bf16.msra.mxu0 0
  %144 = vmatprep.subr.bf16.mxu0 0
  %145 = vmatpush1.bf16.msra.mxu0 0
  %146 = vmatprep.subr.bf16.mxu0 0
  %147 = vmatpush1.bf16.msra.mxu0 %v124
  %148 = vmatprep.subr.bf16.mxu0 0
  %149 = vmatpush1.bf16.msra.mxu0 %v123
  %150 = vmatprep.subr.bf16.mxu0 0
  %151 = vmatpush2.bf16.msra.mxu0 0
  %152 = vmatprep.subr.bf16.mxu0 0
  %153 = vmatpush2.bf16.msra.mxu0 0
  %154 = vmatprep.subr.bf16.mxu0 0
  %155 = vmatpush2.bf16.msra.mxu0 0
  %156 = vmatprep.subr.bf16.mxu0 0
  %157 = vmatpush2.bf16.msra.mxu0 0
  %158 = vmatprep.subr.bf16.mxu0 0
  %159 = vmatpush2.bf16.msra.mxu0 0
  %160 = vmatprep.subr.bf16.mxu0 0
  %161 = vmatpush2.bf16.msra.mxu0 0
  %162 = vmatprep.subr.bf16.mxu0 0
  %163 = vmatpush2.bf16.msra.mxu0 0
  %164 = vmatprep.subr.bf16.mxu0 0
  %165 = vmatpush2.bf16.msra.mxu0 0
  %166 = vmatprep.mubr.bf16.mxu0 0
  %167 = vmatmul.mubr.bf16.gmra.mxu0 %v129
  %v168 = vpop.f32.mrf.mxu0
  %v169 = vadd.f32 0.0, %v168
  %v170 = vpop.f32.mrf.mxu0
  %v171 = vpop.f32.mrf.mxu0
  %v172 = vadd.f32 0.0, %v171
  %v173 = vpop.f32.mrf.mxu0
  %174 = vmatprep.mubr.bf16.mxu0 0
  %175 = vmatmul.mubr.bf16.gmra.mxu0 %v132
  %v176 = vpop.f32.mrf.mxu0
  %v177 = vadd.f32 0.0, %v176
  %v178 = vpop.f32.mrf.mxu0
  %v179 = vpop.f32.mrf.mxu0
  %v180 = vadd.f32 0.0, %v179
  %v181 = vpop.f32.mrf.mxu0
  %182 = vdwg.mxu0
  %v187 = vunpack.c.l.b16 %v31
  %v188 = vunpack.c.l.b16 %v32
  %v189 = vunpack.c.l.b16 %v33
  %v190 = vunpack.c.l.b16 %v34
  %v191 = vpack.c.b16 %v188, %v187
  %v192 = vpack.c.b16 %v190, %v189
  %v196 = vsel %vm127, 0, 0
  %198 = vmatprep.subr.bf16.mxu0 0
  %199 = vmatpush1.bf16.msra.mxu0 0
  %200 = vmatprep.subr.bf16.mxu0 0
  %201 = vmatpush1.bf16.msra.mxu0 0
  %202 = vmatprep.subr.bf16.mxu0 0
  %203 = vmatpush1.bf16.msra.mxu0 0
  %204 = vmatprep.subr.bf16.mxu0 0
  %205 = vmatpush1.bf16.msra.mxu0 0
  %206 = vmatprep.subr.bf16.mxu0 0
  %207 = vmatpush1.bf16.msra.mxu0 0
  %208 = vmatprep.subr.bf16.mxu0 0
  %209 = vmatpush1.bf16.msra.mxu0 0
  %210 = vmatprep.subr.bf16.mxu0 0
  %211 = vmatpush1.bf16.msra.mxu0 %v192
  %212 = vmatprep.subr.bf16.mxu0 0
  %213 = vmatpush1.bf16.msra.mxu0 %v191
  %214 = vmatprep.subr.bf16.mxu0 0
  %215 = vmatpush2.bf16.msra.mxu0 0
  %216 = vmatprep.subr.bf16.mxu0 0
  %217 = vmatpush2.bf16.msra.mxu0 0
  %218 = vmatprep.subr.bf16.mxu0 0
  %219 = vmatpush2.bf16.msra.mxu0 0
  %220 = vmatprep.subr.bf16.mxu0 0
  %221 = vmatpush2.bf16.msra.mxu0 0
  %222 = vmatprep.subr.bf16.mxu0 0
  %223 = vmatpush2.bf16.msra.mxu0 0
  %224 = vmatprep.subr.bf16.mxu0 0
  %225 = vmatpush2.bf16.msra.mxu0 0
  %226 = vmatprep.subr.bf16.mxu0 0
  %227 = vmatpush2.bf16.msra.mxu0 0
  %228 = vmatprep.subr.bf16.mxu0 0
  %229 = vmatpush2.bf16.msra.mxu0 0
  %230 = vmatprep.mubr.bf16.mxu0 0
  %231 = vmatmul.mubr.bf16.gmra.mxu0 %v196
  %v232 = vpop.f32.mrf.mxu0
  %v233 = vadd.f32 %v169, %v232
  %v234 = vpop.f32.mrf.mxu0
  %v235 = vpop.f32.mrf.mxu0
  %v236 = vadd.f32 %v172, %v235
  %v237 = vpop.f32.mrf.mxu0
  %238 = vmatprep.mubr.bf16.mxu0 0
  %239 = vmatmul.mubr.bf16.gmra.mxu0 %v196
  %v240 = vpop.f32.mrf.mxu0
  %v241 = vadd.f32 %v177, %v240
  %v242 = vpop.f32.mrf.mxu0
  %v243 = vpop.f32.mrf.mxu0
  %v244 = vadd.f32 %v180, %v243
  %v245 = vpop.f32.mrf.mxu0
  %246 = vdwg.mxu0
  %v247 = vld [vmem:[%s1] sm:$0xff]
  %v248 = vld [vmem:[%s1 + $0x8] sm:$0xff]
  %v249 = vld [vmem:[%s1 + $0x10] sm:$0xff]
  %v250 = vld [vmem:[%s1 + $0x18] sm:$0xff]
  %v251 = vadd.f32 %v233, %v247
  %v252 = vadd.f32 %v236, %v248
  %v253 = vadd.f32 %v241, %v249
  %v254 = vadd.f32 %v244, %v250
  %v255 = vxor.u32 %v251, 2147483648
  %v256 = vxor.u32 %v252, 2147483648
  %v257 = vxor.u32 %v253, 2147483648
  %v258 = vxor.u32 %v254, 2147483648
  %v259 = vmul.f32 %v255, 1.442695
  %v260 = vpow.pop %v259
  %v261 = vmul.f32 %v256, 1.442695
  %v262 = vpow.pop %v261
  %v263 = vmul.f32 %v257, 1.442695
  %v264 = vpow.pop %v263
  %v265 = vmul.f32 %v258, 1.442695
  %v266 = vpow.pop %v265
  %v267 = vadd.f32 %v260, 1.0
  %v268 = vadd.f32 %v262, 1.0
  %v269 = vadd.f32 %v264, 1.0
  %v270 = vadd.f32 %v266, 1.0
  %v271 = vrcp.pop %v267
  %v272 = vmul.f32 1.0, %v271
  %v273 = vrcp.pop %v268
  %v274 = vmul.f32 1.0, %v273
  %v275 = vrcp.pop %v269
  %v276 = vmul.f32 1.0, %v275
  %v277 = vrcp.pop %v270
  %v278 = vmul.f32 1.0, %v277
  %v279 = vmul.f32 %v272, 0.0
  %v280 = vmul.f32 %v274, 0.0
  %v281 = vmul.f32 %v276, 0.0
  %v282 = vmul.f32 %v278, 0.0
  %v283 = vpack.c.bf16 %v280, %v279
  %v284 = vpack.c.bf16 %v282, %v281
  %286 = vrot.lane.b32.xlu0 %v283, 96
  %v287 = vpop.permute.xlu0 %286
  %289 = vmatprep.subr.bf16.mxu0 0
  %290 = vmatpush1.bf16.msra.mxu0 0
  %291 = vmatprep.subr.bf16.mxu0 0
  %292 = vmatpush1.bf16.msra.mxu0 0
  %293 = vmatprep.subr.bf16.mxu0 0
  %294 = vmatpush1.bf16.msra.mxu0 0
  %295 = vmatprep.subr.bf16.mxu0 0
  %296 = vmatpush1.bf16.msra.mxu0 0
  %297 = vmatprep.subr.bf16.mxu0 0
  %298 = vmatpush1.bf16.msra.mxu0 0
  %299 = vmatprep.subr.bf16.mxu0 0
  %300 = vmatpush1.bf16.msra.mxu0 0
  %301 = vmatprep.subr.bf16.mxu0 0
  %302 = vmatpush1.bf16.msra.mxu0 0
  %303 = vmatprep.subr.bf16.mxu0 0
  %304 = vmatpush1.bf16.msra.mxu0 %v287
  %305 = vmatprep.subr.bf16.mxu0 0
  %306 = vmatpush2.bf16.msra.mxu0 0
  %307 = vmatprep.subr.bf16.mxu0 0
  %308 = vmatpush2.bf16.msra.mxu0 0
  %309 = vmatprep.subr.bf16.mxu0 0
  %310 = vmatpush2.bf16.msra.mxu0 0
  %311 = vmatprep.subr.bf16.mxu0 0
  %312 = vmatpush2.bf16.msra.mxu0 0
  %313 = vmatprep.subr.bf16.mxu0 0
  %314 = vmatpush2.bf16.msra.mxu0 0
  %315 = vmatprep.subr.bf16.mxu0 0
  %316 = vmatpush2.bf16.msra.mxu0 0
  %317 = vmatprep.subr.bf16.mxu0 0
  %318 = vmatpush2.bf16.msra.mxu0 0
  %319 = vmatprep.subr.bf16.mxu0 0
  %320 = vmatpush2.bf16.msra.mxu0 0
  %321 = vmatprep.mubr.bf16.mxu0 0
  %322 = vmatmul.mubr.bf16.gmra.mxu0 %v59
  %v323 = vpop.f32.mrf.mxu0
  %v324 = vadd.f32 0.0, %v323
  %v325 = vpop.f32.mrf.mxu0
  %v326 = vpop.f32.mrf.mxu0
  %v327 = vadd.f32 0.0, %v326
  %v328 = vpop.f32.mrf.mxu0
  %329 = vmatprep.mubr.bf16.mxu0 0
  %330 = vmatmul.mubr.bf16.gmra.mxu0 %v62
  %v331 = vpop.f32.mrf.mxu0
  %v332 = vadd.f32 0.0, %v331
  %v333 = vpop.f32.mrf.mxu0
  %v334 = vpop.f32.mrf.mxu0
  %v335 = vadd.f32 0.0, %v334
  %v336 = vpop.f32.mrf.mxu0
  %337 = vdwg.mxu0
  %v338 = vpack.c.bf16 %v327, %v324
  %v339 = vpack.c.bf16 %v335, %v332
  %v344 = vunpack.c.l.b16 %v43
  %v345 = vunpack.c.l.b16 %v44
  %v346 = vunpack.c.l.b16 %v45
  %v347 = vunpack.c.l.b16 %v46
  %v348 = vpack.c.b16 %v345, %v344
  %v349 = vpack.c.b16 %v347, %v346
  %v353 = vsel %vm127, %v338, 0
  %v356 = vsel %vm127, %v339, 0
  %358 = vmatprep.subr.bf16.mxu0 0
  %359 = vmatpush1.bf16.msra.mxu0 0
  %360 = vmatprep.subr.bf16.mxu0 0
  %361 = vmatpush1.bf16.msra.mxu0 0
  %362 = vmatprep.subr.bf16.mxu0 0
  %363 = vmatpush1.bf16.msra.mxu0 0
  %364 = vmatprep.subr.bf16.mxu0 0
  %365 = vmatpush1.bf16.msra.mxu0 0
  %366 = vmatprep.subr.bf16.mxu0 0
  %367 = vmatpush1.bf16.msra.mxu0 0
  %368 = vmatprep.subr.bf16.mxu0 0
  %369 = vmatpush1.bf16.msra.mxu0 0
  %370 = vmatprep.subr.bf16.mxu0 0
  %371 = vmatpush1.bf16.msra.mxu0 %v349
  %372 = vmatprep.subr.bf16.mxu0 0
  %373 = vmatpush1.bf16.msra.mxu0 %v348
  %374 = vmatprep.subr.bf16.mxu0 0
  %375 = vmatpush2.bf16.msra.mxu0 0
  %376 = vmatprep.subr.bf16.mxu0 0
  %377 = vmatpush2.bf16.msra.mxu0 0
  %378 = vmatprep.subr.bf16.mxu0 0
  %379 = vmatpush2.bf16.msra.mxu0 0
  %380 = vmatprep.subr.bf16.mxu0 0
  %381 = vmatpush2.bf16.msra.mxu0 0
  %382 = vmatprep.subr.bf16.mxu0 0
  %383 = vmatpush2.bf16.msra.mxu0 0
  %384 = vmatprep.subr.bf16.mxu0 0
  %385 = vmatpush2.bf16.msra.mxu0 0
  %386 = vmatprep.subr.bf16.mxu0 0
  %387 = vmatpush2.bf16.msra.mxu0 0
  %388 = vmatprep.subr.bf16.mxu0 0
  %389 = vmatpush2.bf16.msra.mxu0 0
  %390 = vmatprep.mubr.bf16.mxu0 0
  %391 = vmatmul.mubr.bf16.gmra.mxu0 %v353
  %v392 = vpop.f32.mrf.mxu0
  %v393 = vadd.f32 0.0, %v392
  %v394 = vpop.f32.mrf.mxu0
  %v395 = vpop.f32.mrf.mxu0
  %v396 = vadd.f32 0.0, %v395
  %v397 = vpop.f32.mrf.mxu0
  %398 = vmatprep.mubr.bf16.mxu0 0
  %399 = vmatmul.mubr.bf16.gmra.mxu0 %v356
  %v400 = vpop.f32.mrf.mxu0
  %v401 = vadd.f32 0.0, %v400
  %v402 = vpop.f32.mrf.mxu0
  %v403 = vpop.f32.mrf.mxu0
  %v404 = vadd.f32 0.0, %v403
  %v405 = vpop.f32.mrf.mxu0
  %406 = vdwg.mxu0
  %408 = vrot.lane.b32.xlu0 %v284, 96
  %v409 = vpop.permute.xlu0 %408
  %v414 = vunpack.c.l.b16 %v39
  %v415 = vunpack.c.l.b16 %v40
  %v416 = vunpack.c.l.b16 %v41
  %v417 = vunpack.c.l.b16 %v42
  %v418 = vpack.c.b16 %v415, %v414
  %v419 = vpack.c.b16 %v417, %v416
  %v423 = vsel %vm127, %v287, 0
  %v426 = vsel %vm127, %v409, 0
  %428 = vmatprep.subr.bf16.mxu0 0
  %429 = vmatpush1.bf16.msra.mxu0 0
  %430 = vmatprep.subr.bf16.mxu0 0
  %431 = vmatpush1.bf16.msra.mxu0 0
  %432 = vmatprep.subr.bf16.mxu0 0
  %433 = vmatpush1.bf16.msra.mxu0 0
  %434 = vmatprep.subr.bf16.mxu0 0
  %435 = vmatpush1.bf16.msra.mxu0 0
  %436 = vmatprep.subr.bf16.mxu0 0
  %437 = vmatpush1.bf16.msra.mxu0 0
  %438 = vmatprep.subr.bf16.mxu0 0
  %439 = vmatpush1.bf16.msra.mxu0 0
  %440 = vmatprep.subr.bf16.mxu0 0
  %441 = vmatpush1.bf16.msra.mxu0 %v419
  %442 = vmatprep.subr.bf16.mxu0 0
  %443 = vmatpush1.bf16.msra.mxu0 %v418
  %444 = vmatprep.subr.bf16.mxu0 0
  %445 = vmatpush2.bf16.msra.mxu0 0
  %446 = vmatprep.subr.bf16.mxu0 0
  %447 = vmatpush2.bf16.msra.mxu0 0
  %448 = vmatprep.subr.bf16.mxu0 0
  %449 = vmatpush2.bf16.msra.mxu0 0
  %450 = vmatprep.subr.bf16.mxu0 0
  %451 = vmatpush2.bf16.msra.mxu0 0
  %452 = vmatprep.subr.bf16.mxu0 0
  %453 = vmatpush2.bf16.msra.mxu0 0
  %454 = vmatprep.subr.bf16.mxu0 0
  %455 = vmatpush2.bf16.msra.mxu0 0
  %456 = vmatprep.subr.bf16.mxu0 0
  %457 = vmatpush2.bf16.msra.mxu0 0
  %458 = vmatprep.subr.bf16.mxu0 0
  %459 = vmatpush2.bf16.msra.mxu0 0
  %460 = vmatprep.mubr.bf16.mxu0 0
  %461 = vmatmul.mubr.bf16.gmra.mxu0 %v423
  %v462 = vpop.f32.mrf.mxu0
  %v463 = vadd.f32 %v393, %v462
  %v464 = vpop.f32.mrf.mxu0
  %v465 = vpop.f32.mrf.mxu0
  %v466 = vadd.f32 %v396, %v465
  %v467 = vpop.f32.mrf.mxu0
  %468 = vmatprep.mubr.bf16.mxu0 0
  %469 = vmatmul.mubr.bf16.gmra.mxu0 %v426
  %v470 = vpop.f32.mrf.mxu0
  %v471 = vadd.f32 %v401, %v470
  %v472 = vpop.f32.mrf.mxu0
  %v473 = vpop.f32.mrf.mxu0
  %v474 = vadd.f32 %v404, %v473
  %v475 = vpop.f32.mrf.mxu0
  %476 = vdwg.mxu0
  %v477 = vld [vmem:[%s2] sm:$0xff]
  %v478 = vld [vmem:[%s2 + $0x8] sm:$0xff]
  %v479 = vld [vmem:[%s2 + $0x10] sm:$0xff]
  %v480 = vld [vmem:[%s2 + $0x18] sm:$0xff]
  %v481 = vadd.f32 %v463, %v477
  %v482 = vadd.f32 %v466, %v478
  %v483 = vadd.f32 %v471, %v479
  %v484 = vadd.f32 %v474, %v480
  %v485 = vsub.f32 1.0, %v272
  %v486 = vsub.f32 1.0, %v274
  %v487 = vsub.f32 1.0, %v276
  %v488 = vsub.f32 1.0, %v278
  %v489 = vtanh.pop %v481
  %v490 = vtanh.pop %v482
  %v491 = vtanh.pop %v483
  %v492 = vtanh.pop %v484
  %v493 = vmul.f32 %v485, %v489
  %v494 = vmul.f32 %v486, %v490
  %v495 = vmul.f32 %v487, %v491
  %v496 = vmul.f32 %v488, %v492
  %v497 = vadd.f32 %v279, %v493
  %v498 = vadd.f32 %v280, %v494
  %v499 = vadd.f32 %v281, %v495
  %v500 = vadd.f32 %v282, %v496
  %501 = vst.msk [vmem:[%s7] sm:$0xff] %vm127, %v497
  %502 = vst.msk [vmem:[%s7 + $0x8] sm:$0xff] %vm127, %v498
  %503 = vst.msk [vmem:[%s7 + $0x10] sm:$0xff] %vm127, %v499
  %504 = vst.msk [vmem:[%s7 + $0x18] sm:$0xff] %vm127, %v500
  %v505 = vpack.c.bf16 %v498, %v497
  %v506 = vpack.c.bf16 %v500, %v499
  %507 = vmatprep.subr.bf16.mxu0 0
  %508 = vmatpush1.bf16.msra.mxu0 0
  %509 = vmatprep.subr.bf16.mxu0 0
  %510 = vmatpush1.bf16.msra.mxu0 0
  %511 = vmatprep.subr.bf16.mxu0 0
  %512 = vmatpush1.bf16.msra.mxu0 0
  %513 = vmatprep.subr.bf16.mxu0 0
  %514 = vmatpush1.bf16.msra.mxu0 0
  %515 = vmatprep.subr.bf16.mxu0 0
  %516 = vmatpush1.bf16.msra.mxu0 0
  %517 = vmatprep.subr.bf16.mxu0 0
  %518 = vmatpush1.bf16.msra.mxu0 0
  %519 = vmatprep.subr.bf16.mxu0 0
  %520 = vmatpush1.bf16.msra.mxu0 0
  %521 = vmatprep.subr.bf16.mxu0 0
  %522 = vmatpush1.bf16.msra.mxu0 %v505
  %523 = vmatprep.subr.bf16.mxu0 0
  %524 = vmatpush2.bf16.msra.mxu0 0
  %525 = vmatprep.subr.bf16.mxu0 0
  %526 = vmatpush2.bf16.msra.mxu0 0
  %527 = vmatprep.subr.bf16.mxu0 0
  %528 = vmatpush2.bf16.msra.mxu0 0
  %529 = vmatprep.subr.bf16.mxu0 0
  %530 = vmatpush2.bf16.msra.mxu0 0
  %531 = vmatprep.subr.bf16.mxu0 0
  %532 = vmatpush2.bf16.msra.mxu0 0
  %533 = vmatprep.subr.bf16.mxu0 0
  %534 = vmatpush2.bf16.msra.mxu0 0
  %535 = vmatprep.subr.bf16.mxu0 0
  %536 = vmatpush2.bf16.msra.mxu0 0
  %537 = vmatprep.subr.bf16.mxu0 0
  %538 = vmatpush2.bf16.msra.mxu0 0
  %539 = vmatprep.mubr.bf16.mxu0 0
  %540 = vmatmul.mubr.bf16.gmra.mxu0 %v59
  %v541 = vpop.f32.mrf.mxu0
  %v542 = vadd.f32 0.0, %v541
  %v543 = vpop.f32.mrf.mxu0
  %v544 = vpop.f32.mrf.mxu0
  %v545 = vadd.f32 0.0, %v544
  %v546 = vpop.f32.mrf.mxu0
  %547 = vmatprep.mubr.bf16.mxu0 0
  %548 = vmatmul.mubr.bf16.gmra.mxu0 %v62
  %v549 = vpop.f32.mrf.mxu0
  %v550 = vadd.f32 0.0, %v549
  %v551 = vpop.f32.mrf.mxu0
  %v552 = vpop.f32.mrf.mxu0
  %v553 = vadd.f32 0.0, %v552
  %v554 = vpop.f32.mrf.mxu0
  %555 = vdwg.mxu0
  %v556 = vpack.c.bf16 %v545, %v542
  %v557 = vpack.c.bf16 %v553, %v550
  %v559 = vsel %vm127, %v556, 0
  %v562 = vsel %vm127, %v557, 0
  %564 = vmatprep.subr.bf16.mxu0 0
  %565 = vmatpush1.bf16.msra.mxu0 0
  %566 = vmatprep.subr.bf16.mxu0 0
  %567 = vmatpush1.bf16.msra.mxu0 0
  %568 = vmatprep.subr.bf16.mxu0 0
  %569 = vmatpush1.bf16.msra.mxu0 0
  %570 = vmatprep.subr.bf16.mxu0 0
  %571 = vmatpush1.bf16.msra.mxu0 0
  %572 = vmatprep.subr.bf16.mxu0 0
  %573 = vmatpush1.bf16.msra.mxu0 0
  %574 = vmatprep.subr.bf16.mxu0 0
  %575 = vmatpush1.bf16.msra.mxu0 0
  %576 = vmatprep.subr.bf16.mxu0 0
  %577 = vmatpush1.bf16.msra.mxu0 %v124
  %578 = vmatprep.subr.bf16.mxu0 0
  %579 = vmatpush1.bf16.msra.mxu0 %v123
  %580 = vmatprep.subr.bf16.mxu0 0
  %581 = vmatpush2.bf16.msra.mxu0 0
  %582 = vmatprep.subr.bf16.mxu0 0
  %583 = vmatpush2.bf16.msra.mxu0 0
  %584 = vmatprep.subr.bf16.mxu0 0
  %585 = vmatpush2.bf16.msra.mxu0 0
  %586 = vmatprep.subr.bf16.mxu0 0
  %587 = vmatpush2.bf16.msra.mxu0 0
  %588 = vmatprep.subr.bf16.mxu0 0
  %589 = vmatpush2.bf16.msra.mxu0 0
  %590 = vmatprep.subr.bf16.mxu0 0
  %591 = vmatpush2.bf16.msra.mxu0 0
  %592 = vmatprep.subr.bf16.mxu0 0
  %593 = vmatpush2.bf16.msra.mxu0 0
  %594 = vmatprep.subr.bf16.mxu0 0
  %595 = vmatpush2.bf16.msra.mxu0 0
  %596 = vmatprep.mubr.bf16.mxu0 0
  %597 = vmatmul.mubr.bf16.gmra.mxu0 %v559
  %v598 = vpop.f32.mrf.mxu0
  %v599 = vadd.f32 0.0, %v598
  %v600 = vpop.f32.mrf.mxu0
  %v601 = vpop.f32.mrf.mxu0
  %v602 = vadd.f32 0.0, %v601
  %v603 = vpop.f32.mrf.mxu0
  %604 = vmatprep.mubr.bf16.mxu0 0
  %605 = vmatmul.mubr.bf16.gmra.mxu0 %v562
  %v606 = vpop.f32.mrf.mxu0
  %v607 = vadd.f32 0.0, %v606
  %v608 = vpop.f32.mrf.mxu0
  %v609 = vpop.f32.mrf.mxu0
  %v610 = vadd.f32 0.0, %v609
  %v611 = vpop.f32.mrf.mxu0
  %612 = vdwg.mxu0
  %v614 = vsel %vm127, %v505, 0
  %v617 = vsel %vm127, %v506, 0
  %619 = vmatprep.subr.bf16.mxu0 0
  %620 = vmatpush1.bf16.msra.mxu0 0
  %621 = vmatprep.subr.bf16.mxu0 0
  %622 = vmatpush1.bf16.msra.mxu0 0
  %623 = vmatprep.subr.bf16.mxu0 0
  %624 = vmatpush1.bf16.msra.mxu0 0
  %625 = vmatprep.subr.bf16.mxu0 0
  %626 = vmatpush1.bf16.msra.mxu0 0
  %627 = vmatprep.subr.bf16.mxu0 0
  %628 = vmatpush1.bf16.msra.mxu0 0
  %629 = vmatprep.subr.bf16.mxu0 0
  %630 = vmatpush1.bf16.msra.mxu0 0
  %631 = vmatprep.subr.bf16.mxu0 0
  %632 = vmatpush1.bf16.msra.mxu0 %v192
  %633 = vmatprep.subr.bf16.mxu0 0
  %634 = vmatpush1.bf16.msra.mxu0 %v191
  %635 = vmatprep.subr.bf16.mxu0 0
  %636 = vmatpush2.bf16.msra.mxu0 0
  %637 = vmatprep.subr.bf16.mxu0 0
  %638 = vmatpush2.bf16.msra.mxu0 0
  %639 = vmatprep.subr.bf16.mxu0 0
  %640 = vmatpush2.bf16.msra.mxu0 0
  %641 = vmatprep.subr.bf16.mxu0 0
  %642 = vmatpush2.bf16.msra.mxu0 0
  %643 = vmatprep.subr.bf16.mxu0 0
  %644 = vmatpush2.bf16.msra.mxu0 0
  %645 = vmatprep.subr.bf16.mxu0 0
  %646 = vmatpush2.bf16.msra.mxu0 0
  %647 = vmatprep.subr.bf16.mxu0 0
  %648 = vmatpush2.bf16.msra.mxu0 0
  %649 = vmatprep.subr.bf16.mxu0 0
  %650 = vmatpush2.bf16.msra.mxu0 0
  %651 = vmatprep.mubr.bf16.mxu0 0
  %652 = vmatmul.mubr.bf16.gmra.mxu0 %v614
  %v653 = vpop.f32.mrf.mxu0
  %v654 = vadd.f32 %v599, %v653
  %v655 = vpop.f32.mrf.mxu0
  %v656 = vpop.f32.mrf.mxu0
  %v657 = vadd.f32 %v602, %v656
  %v658 = vpop.f32.mrf.mxu0
  %659 = vmatprep.mubr.bf16.mxu0 0
  %660 = vmatmul.mubr.bf16.gmra.mxu0 %v617
  %v661 = vpop.f32.mrf.mxu0
  %v662 = vadd.f32 %v607, %v661
  %v663 = vpop.f32.mrf.mxu0
  %v664 = vpop.f32.mrf.mxu0
  %v665 = vadd.f32 %v610, %v664
  %v666 = vpop.f32.mrf.mxu0
  %667 = vdwg.mxu0
  %s668 = scalar_lea.vmem %s1, 32
  %v669 = vld [vmem:[%s668] sm:$0xff]
  %v670 = vld [vmem:[%s668 + $0x8] sm:$0xff]
  %v671 = vld [vmem:[%s668 + $0x10] sm:$0xff]
  %v672 = vld [vmem:[%s668 + $0x18] sm:$0xff]
  %v673 = vadd.f32 %v654, %v669
  %v674 = vadd.f32 %v657, %v670
  %v675 = vadd.f32 %v662, %v671
  %v676 = vadd.f32 %v665, %v672
  %v677 = vxor.u32 %v673, 2147483648
  %v678 = vxor.u32 %v674, 2147483648
  %v679 = vxor.u32 %v675, 2147483648
  %v680 = vxor.u32 %v676, 2147483648
  %v681 = vmul.f32 %v677, 1.442695
  %v682 = vpow.pop %v681
  %v683 = vmul.f32 %v678, 1.442695
  %v684 = vpow.pop %v683
  %v685 = vmul.f32 %v679, 1.442695
  %v686 = vpow.pop %v685
  %v687 = vmul.f32 %v680, 1.442695
  %v688 = vpow.pop %v687
  %v689 = vadd.f32 %v682, 1.0
  %v690 = vadd.f32 %v684, 1.0
  %v691 = vadd.f32 %v686, 1.0
  %v692 = vadd.f32 %v688, 1.0
  %v693 = vrcp.pop %v689
  %v694 = vmul.f32 1.0, %v693
  %v695 = vrcp.pop %v690
  %v696 = vmul.f32 1.0, %v695
  %v697 = vrcp.pop %v691
  %v698 = vmul.f32 1.0, %v697
  %v699 = vrcp.pop %v692
  %v700 = vmul.f32 1.0, %v699
  %705 = vrot.lane.b32.xlu0 %v694, 96
  %v706 = vpop.permute.xlu0 %705
  %707 = vrot.lane.b32.xlu0 %v696, 96
  %v708 = vpop.permute.xlu0 %707
  %709 = vrot.lane.b32.xlu0 %v698, 96
  %v710 = vpop.permute.xlu0 %709
  %711 = vrot.lane.b32.xlu0 %v700, 96
  %v712 = vpop.permute.xlu0 %711
  %v717 = vmul.f32 %v497, %v706
  %v718 = vmul.f32 %v498, %v708
  %v719 = vmul.f32 %v499, %v710
  %v720 = vmul.f32 %v500, %v712
  %v721 = vpack.c.bf16 %v718, %v717
  %v722 = vpack.c.bf16 %v720, %v719
  %723 = vmatprep.subr.bf16.mxu0 0
  %724 = vmatpush1.bf16.msra.mxu0 0
  %725 = vmatprep.subr.bf16.mxu0 0
  %726 = vmatpush1.bf16.msra.mxu0 0
  %727 = vmatprep.subr.bf16.mxu0 0
  %728 = vmatpush1.bf16.msra.mxu0 0
  %729 = vmatprep.subr.bf16.mxu0 0
  %730 = vmatpush1.bf16.msra.mxu0 0
  %731 = vmatprep.subr.bf16.mxu0 0
  %732 = vmatpush1.bf16.msra.mxu0 0
  %733 = vmatprep.subr.bf16.mxu0 0
  %734 = vmatpush1.bf16.msra.mxu0 0
  %735 = vmatprep.subr.bf16.mxu0 0
  %736 = vmatpush1.bf16.msra.mxu0 0
  %737 = vmatprep.subr.bf16.mxu0 0
  %738 = vmatpush1.bf16.msra.mxu0 %v721
  %739 = vmatprep.subr.bf16.mxu0 0
  %740 = vmatpush2.bf16.msra.mxu0 0
  %741 = vmatprep.subr.bf16.mxu0 0
  %742 = vmatpush2.bf16.msra.mxu0 0
  %743 = vmatprep.subr.bf16.mxu0 0
  %744 = vmatpush2.bf16.msra.mxu0 0
  %745 = vmatprep.subr.bf16.mxu0 0
  %746 = vmatpush2.bf16.msra.mxu0 0
  %747 = vmatprep.subr.bf16.mxu0 0
  %748 = vmatpush2.bf16.msra.mxu0 0
  %749 = vmatprep.subr.bf16.mxu0 0
  %750 = vmatpush2.bf16.msra.mxu0 0
  %751 = vmatprep.subr.bf16.mxu0 0
  %752 = vmatpush2.bf16.msra.mxu0 0
  %753 = vmatprep.subr.bf16.mxu0 0
  %754 = vmatpush2.bf16.msra.mxu0 0
  %755 = vmatprep.mubr.bf16.mxu0 0
  %756 = vmatmul.mubr.bf16.gmra.mxu0 %v59
  %v757 = vpop.f32.mrf.mxu0
  %v758 = vadd.f32 0.0, %v757
  %v759 = vpop.f32.mrf.mxu0
  %v760 = vpop.f32.mrf.mxu0
  %v761 = vadd.f32 0.0, %v760
  %v762 = vpop.f32.mrf.mxu0
  %763 = vmatprep.mubr.bf16.mxu0 0
  %764 = vmatmul.mubr.bf16.gmra.mxu0 %v62
  %v765 = vpop.f32.mrf.mxu0
  %v766 = vadd.f32 0.0, %v765
  %v767 = vpop.f32.mrf.mxu0
  %v768 = vpop.f32.mrf.mxu0
  %v769 = vadd.f32 0.0, %v768
  %v770 = vpop.f32.mrf.mxu0
  %771 = vdwg.mxu0
  %v772 = vpack.c.bf16 %v761, %v758
  %v773 = vpack.c.bf16 %v769, %v766
  %v775 = vsel %vm127, %v772, 0
  %v778 = vsel %vm127, %v773, 0
  %780 = vmatprep.subr.bf16.mxu0 0
  %781 = vmatpush1.bf16.msra.mxu0 0
  %782 = vmatprep.subr.bf16.mxu0 0
  %783 = vmatpush1.bf16.msra.mxu0 0
  %784 = vmatprep.subr.bf16.mxu0 0
  %785 = vmatpush1.bf16.msra.mxu0 0
  %786 = vmatprep.subr.bf16.mxu0 0
  %787 = vmatpush1.bf16.msra.mxu0 0
  %788 = vmatprep.subr.bf16.mxu0 0
  %789 = vmatpush1.bf16.msra.mxu0 0
  %790 = vmatprep.subr.bf16.mxu0 0
  %791 = vmatpush1.bf16.msra.mxu0 0
  %792 = vmatprep.subr.bf16.mxu0 0
  %793 = vmatpush1.bf16.msra.mxu0 %v349
  %794 = vmatprep.subr.bf16.mxu0 0
  %795 = vmatpush1.bf16.msra.mxu0 %v348
  %796 = vmatprep.subr.bf16.mxu0 0
  %797 = vmatpush2.bf16.msra.mxu0 0
  %798 = vmatprep.subr.bf16.mxu0 0
  %799 = vmatpush2.bf16.msra.mxu0 0
  %800 = vmatprep.subr.bf16.mxu0 0
  %801 = vmatpush2.bf16.msra.mxu0 0
  %802 = vmatprep.subr.bf16.mxu0 0
  %803 = vmatpush2.bf16.msra.mxu0 0
  %804 = vmatprep.subr.bf16.mxu0 0
  %805 = vmatpush2.bf16.msra.mxu0 0
  %806 = vmatprep.subr.bf16.mxu0 0
  %807 = vmatpush2.bf16.msra.mxu0 0
  %808 = vmatprep.subr.bf16.mxu0 0
  %809 = vmatpush2.bf16.msra.mxu0 0
  %810 = vmatprep.subr.bf16.mxu0 0
  %811 = vmatpush2.bf16.msra.mxu0 0
  %812 = vmatprep.mubr.bf16.mxu0 0
  %813 = vmatmul.mubr.bf16.gmra.mxu0 %v775
  %v814 = vpop.f32.mrf.mxu0
  %v815 = vadd.f32 0.0, %v814
  %v816 = vpop.f32.mrf.mxu0
  %v817 = vpop.f32.mrf.mxu0
  %v818 = vadd.f32 0.0, %v817
  %v819 = vpop.f32.mrf.mxu0
  %820 = vmatprep.mubr.bf16.mxu0 0
  %821 = vmatmul.mubr.bf16.gmra.mxu0 %v778
  %v822 = vpop.f32.mrf.mxu0
  %v823 = vadd.f32 0.0, %v822
  %v824 = vpop.f32.mrf.mxu0
  %v825 = vpop.f32.mrf.mxu0
  %v826 = vadd.f32 0.0, %v825
  %v827 = vpop.f32.mrf.mxu0
  %828 = vdwg.mxu0
  %v830 = vsel %vm127, %v721, 0
  %v833 = vsel %vm127, %v722, 0
  %835 = vmatprep.subr.bf16.mxu0 0
  %836 = vmatpush1.bf16.msra.mxu0 0
  %837 = vmatprep.subr.bf16.mxu0 0
  %838 = vmatpush1.bf16.msra.mxu0 0
  %839 = vmatprep.subr.bf16.mxu0 0
  %840 = vmatpush1.bf16.msra.mxu0 0
  %841 = vmatprep.subr.bf16.mxu0 0
  %842 = vmatpush1.bf16.msra.mxu0 0
  %843 = vmatprep.subr.bf16.mxu0 0
  %844 = vmatpush1.bf16.msra.mxu0 0
  %845 = vmatprep.subr.bf16.mxu0 0
  %846 = vmatpush1.bf16.msra.mxu0 0
  %847 = vmatprep.subr.bf16.mxu0 0
  %848 = vmatpush1.bf16.msra.mxu0 %v419
  %849 = vmatprep.subr.bf16.mxu0 0
  %850 = vmatpush1.bf16.msra.mxu0 %v418
  %851 = vmatprep.subr.bf16.mxu0 0
  %852 = vmatpush2.bf16.msra.mxu0 0
  %853 = vmatprep.subr.bf16.mxu0 0
  %854 = vmatpush2.bf16.msra.mxu0 0
  %855 = vmatprep.subr.bf16.mxu0 0
  %856 = vmatpush2.bf16.msra.mxu0 0
  %857 = vmatprep.subr.bf16.mxu0 0
  %858 = vmatpush2.bf16.msra.mxu0 0
  %859 = vmatprep.subr.bf16.mxu0 0
  %860 = vmatpush2.bf16.msra.mxu0 0
  %861 = vmatprep.subr.bf16.mxu0 0
  %862 = vmatpush2.bf16.msra.mxu0 0
  %863 = vmatprep.subr.bf16.mxu0 0
  %864 = vmatpush2.bf16.msra.mxu0 0
  %865 = vmatprep.subr.bf16.mxu0 0
  %866 = vmatpush2.bf16.msra.mxu0 0
  %867 = vmatprep.mubr.bf16.mxu0 0
  %868 = vmatmul.mubr.bf16.gmra.mxu0 %v830
  %v869 = vpop.f32.mrf.mxu0
  %v870 = vadd.f32 %v815, %v869
  %v871 = vpop.f32.mrf.mxu0
  %v872 = vpop.f32.mrf.mxu0
  %v873 = vadd.f32 %v818, %v872
  %v874 = vpop.f32.mrf.mxu0
  %875 = vmatprep.mubr.bf16.mxu0 0
  %876 = vmatmul.mubr.bf16.gmra.mxu0 %v833
  %v877 = vpop.f32.mrf.mxu0
  %v878 = vadd.f32 %v823, %v877
  %v879 = vpop.f32.mrf.mxu0
  %v880 = vpop.f32.mrf.mxu0
  %v881 = vadd.f32 %v826, %v880
  %v882 = vpop.f32.mrf.mxu0
  %883 = vdwg.mxu0
  %s884 = scalar_lea.vmem %s2, 32
  %v885 = vld [vmem:[%s884] sm:$0xff]
  %v886 = vld [vmem:[%s884 + $0x8] sm:$0xff]
  %v887 = vld [vmem:[%s884 + $0x10] sm:$0xff]
  %v888 = vld [vmem:[%s884 + $0x18] sm:$0xff]
  %v889 = vadd.f32 %v870, %v885
  %v890 = vadd.f32 %v873, %v886
  %v891 = vadd.f32 %v878, %v887
  %v892 = vadd.f32 %v881, %v888
  %v893 = vmul.f32 %v694, %v497
  %v894 = vmul.f32 %v696, %v498
  %v895 = vmul.f32 %v698, %v499
  %v896 = vmul.f32 %v700, %v500
  %v897 = vsub.f32 1.0, %v694
  %v898 = vsub.f32 1.0, %v696
  %v899 = vsub.f32 1.0, %v698
  %v900 = vsub.f32 1.0, %v700
  %v901 = vtanh.pop %v889
  %v902 = vtanh.pop %v890
  %v903 = vtanh.pop %v891
  %v904 = vtanh.pop %v892
  %v905 = vmul.f32 %v897, %v901
  %v906 = vmul.f32 %v898, %v902
  %v907 = vmul.f32 %v899, %v903
  %v908 = vmul.f32 %v900, %v904
  %v909 = vadd.f32 %v893, %v905
  %v910 = vadd.f32 %v894, %v906
  %v911 = vadd.f32 %v895, %v907
  %v912 = vadd.f32 %v896, %v908
  %s913 = scalar_lea.vmem %s7, 32
  %914 = vst.msk [vmem:[%s913] sm:$0xff] %vm127, %v909
  %915 = vst.msk [vmem:[%s913 + $0x8] sm:$0xff] %vm127, %v910
  %916 = vst.msk [vmem:[%s913 + $0x10] sm:$0xff] %vm127, %v911
  %917 = vst.msk [vmem:[%s913 + $0x18] sm:$0xff] %vm127, %v912
  %v918 = vpack.c.bf16 %v910, %v909
  %v919 = vpack.c.bf16 %v912, %v911
  %920 = vmatprep.subr.bf16.mxu0 0
  %921 = vmatpush1.bf16.msra.mxu0 0
  %922 = vmatprep.subr.bf16.mxu0 0
  %923 = vmatpush1.bf16.msra.mxu0 0
  %924 = vmatprep.subr.bf16.mxu0 0
  %925 = vmatpush1.bf16.msra.mxu0 0
  %926 = vmatprep.subr.bf16.mxu0 0
  %927 = vmatpush1.bf16.msra.mxu0 0
  %928 = vmatprep.subr.bf16.mxu0 0
  %929 = vmatpush1.bf16.msra.mxu0 0
  %930 = vmatprep.subr.bf16.mxu0 0
  %931 = vmatpush1.bf16.msra.mxu0 0
  %932 = vmatprep.subr.bf16.mxu0 0
  %933 = vmatpush1.bf16.msra.mxu0 0
  %934 = vmatprep.subr.bf16.mxu0 0
  %935 = vmatpush1.bf16.msra.mxu0 %v918
  %936 = vmatprep.subr.bf16.mxu0 0
  %937 = vmatpush2.bf16.msra.mxu0 0
  %938 = vmatprep.subr.bf16.mxu0 0
  %939 = vmatpush2.bf16.msra.mxu0 0
  %940 = vmatprep.subr.bf16.mxu0 0
  %941 = vmatpush2.bf16.msra.mxu0 0
  %942 = vmatprep.subr.bf16.mxu0 0
  %943 = vmatpush2.bf16.msra.mxu0 0
  %944 = vmatprep.subr.bf16.mxu0 0
  %945 = vmatpush2.bf16.msra.mxu0 0
  %946 = vmatprep.subr.bf16.mxu0 0
  %947 = vmatpush2.bf16.msra.mxu0 0
  %948 = vmatprep.subr.bf16.mxu0 0
  %949 = vmatpush2.bf16.msra.mxu0 0
  %950 = vmatprep.subr.bf16.mxu0 0
  %951 = vmatpush2.bf16.msra.mxu0 0
  %952 = vmatprep.mubr.bf16.mxu0 0
  %953 = vmatmul.mubr.bf16.gmra.mxu0 %v59
  %v954 = vpop.f32.mrf.mxu0
  %v955 = vadd.f32 0.0, %v954
  %v956 = vpop.f32.mrf.mxu0
  %v957 = vpop.f32.mrf.mxu0
  %v958 = vadd.f32 0.0, %v957
  %v959 = vpop.f32.mrf.mxu0
  %960 = vmatprep.mubr.bf16.mxu0 0
  %961 = vmatmul.mubr.bf16.gmra.mxu0 %v62
  %v962 = vpop.f32.mrf.mxu0
  %v963 = vadd.f32 0.0, %v962
  %v964 = vpop.f32.mrf.mxu0
  %v965 = vpop.f32.mrf.mxu0
  %v966 = vadd.f32 0.0, %v965
  %v967 = vpop.f32.mrf.mxu0
  %968 = vdwg.mxu0
  %v969 = vpack.c.bf16 %v958, %v955
  %v970 = vpack.c.bf16 %v966, %v963
  %v972 = vsel %vm127, %v969, 0
  %v975 = vsel %vm127, %v970, 0
  %977 = vmatprep.subr.bf16.mxu0 0
  %978 = vmatpush1.bf16.msra.mxu0 0
  %979 = vmatprep.subr.bf16.mxu0 0
  %980 = vmatpush1.bf16.msra.mxu0 0
  %981 = vmatprep.subr.bf16.mxu0 0
  %982 = vmatpush1.bf16.msra.mxu0 0
  %983 = vmatprep.subr.bf16.mxu0 0
  %984 = vmatpush1.bf16.msra.mxu0 0
  %985 = vmatprep.subr.bf16.mxu0 0
  %986 = vmatpush1.bf16.msra.mxu0 0
  %987 = vmatprep.subr.bf16.mxu0 0
  %988 = vmatpush1.bf16.msra.mxu0 0
  %989 = vmatprep.subr.bf16.mxu0 0
  %990 = vmatpush1.bf16.msra.mxu0 %v124
  %991 = vmatprep.subr.bf16.mxu0 0
  %992 = vmatpush1.bf16.msra.mxu0 %v123
  %993 = vmatprep.subr.bf16.mxu0 0
  %994 = vmatpush2.bf16.msra.mxu0 0
  %995 = vmatprep.subr.bf16.mxu0 0
  %996 = vmatpush2.bf16.msra.mxu0 0
  %997 = vmatprep.subr.bf16.mxu0 0
  %998 = vmatpush2.bf16.msra.mxu0 0
  %999 = vmatprep.subr.bf16.mxu0 0
  %1000 = vmatpush2.bf16.msra.mxu0 0
  %1001 = vmatprep.subr.bf16.mxu0 0
  %1002 = vmatpush2.bf16.msra.mxu0 0
  %1003 = vmatprep.subr.bf16.mxu0 0
  %1004 = vmatpush2.bf16.msra.mxu0 0
  %1005 = vmatprep.subr.bf16.mxu0 0
  %1006 = vmatpush2.bf16.msra.mxu0 0
  %1007 = vmatprep.subr.bf16.mxu0 0
  %1008 = vmatpush2.bf16.msra.mxu0 0
  %1009 = vmatprep.mubr.bf16.mxu0 0
  %1010 = vmatmul.mubr.bf16.gmra.mxu0 %v972
  %v1011 = vpop.f32.mrf.mxu0
  %v1012 = vadd.f32 0.0, %v1011
  %v1013 = vpop.f32.mrf.mxu0
  %v1014 = vpop.f32.mrf.mxu0
  %v1015 = vadd.f32 0.0, %v1014
  %v1016 = vpop.f32.mrf.mxu0
  %1017 = vmatprep.mubr.bf16.mxu0 0
  %1018 = vmatmul.mubr.bf16.gmra.mxu0 %v975
  %v1019 = vpop.f32.mrf.mxu0
  %v1020 = vadd.f32 0.0, %v1019
  %v1021 = vpop.f32.mrf.mxu0
  %v1022 = vpop.f32.mrf.mxu0
  %v1023 = vadd.f32 0.0, %v1022
  %v1024 = vpop.f32.mrf.mxu0
  %1025 = vdwg.mxu0
  %v1027 = vsel %vm127, %v918, 0
  %v1030 = vsel %vm127, %v919, 0
  %1032 = vmatprep.subr.bf16.mxu0 0
  %1033 = vmatpush1.bf16.msra.mxu0 0
  %1034 = vmatprep.subr.bf16.mxu0 0
  %1035 = vmatpush1.bf16.msra.mxu0 0
  %1036 = vmatprep.subr.bf16.mxu0 0
  %1037 = vmatpush1.bf16.msra.mxu0 0
  %1038 = vmatprep.subr.bf16.mxu0 0
  %1039 = vmatpush1.bf16.msra.mxu0 0
  %1040 = vmatprep.subr.bf16.mxu0 0
  %1041 = vmatpush1.bf16.msra.mxu0 0
  %1042 = vmatprep.subr.bf16.mxu0 0
  %1043 = vmatpush1.bf16.msra.mxu0 0
  %1044 = vmatprep.subr.bf16.mxu0 0
  %1045 = vmatpush1.bf16.msra.mxu0 %v192
  %1046 = vmatprep.subr.bf16.mxu0 0
  %1047 = vmatpush1.bf16.msra.mxu0 %v191
  %1048 = vmatprep.subr.bf16.mxu0 0
  %1049 = vmatpush2.bf16.msra.mxu0 0
  %1050 = vmatprep.subr.bf16.mxu0 0
  %1051 = vmatpush2.bf16.msra.mxu0 0
  %1052 = vmatprep.subr.bf16.mxu0 0
  %1053 = vmatpush2.bf16.msra.mxu0 0
  %1054 = vmatprep.subr.bf16.mxu0 0
  %1055 = vmatpush2.bf16.msra.mxu0 0
  %1056 = vmatprep.subr.bf16.mxu0 0
  %1057 = vmatpush2.bf16.msra.mxu0 0
  %1058 = vmatprep.subr.bf16.mxu0 0
  %1059 = vmatpush2.bf16.msra.mxu0 0
  %1060 = vmatprep.subr.bf16.mxu0 0
  %1061 = vmatpush2.bf16.msra.mxu0 0
  %1062 = vmatprep.subr.bf16.mxu0 0
  %1063 = vmatpush2.bf16.msra.mxu0 0
  %1064 = vmatprep.mubr.bf16.mxu0 0
  %1065 = vmatmul.mubr.bf16.gmra.mxu0 %v1027
  %v1066 = vpop.f32.mrf.mxu0
  %v1067 = vadd.f32 %v1012, %v1066
  %v1068 = vpop.f32.mrf.mxu0
  %v1069 = vpop.f32.mrf.mxu0
  %v1070 = vadd.f32 %v1015, %v1069
  %v1071 = vpop.f32.mrf.mxu0
  %1072 = vmatprep.mubr.bf16.mxu0 0
  %1073 = vmatmul.mubr.bf16.gmra.mxu0 %v1030
  %v1074 = vpop.f32.mrf.mxu0
  %v1075 = vadd.f32 %v1020, %v1074
  %v1076 = vpop.f32.mrf.mxu0
  %v1077 = vpop.f32.mrf.mxu0
  %v1078 = vadd.f32 %v1023, %v1077
  %v1079 = vpop.f32.mrf.mxu0
  %1080 = vdwg.mxu0
  %s1081 = scalar_lea.vmem %s1, 64
  %v1082 = vld [vmem:[%s1081] sm:$0xff]
  %v1083 = vld [vmem:[%s1081 + $0x8] sm:$0xff]
  %v1084 = vld [vmem:[%s1081 + $0x10] sm:$0xff]
  %v1085 = vld [vmem:[%s1081 + $0x18] sm:$0xff]
  %v1086 = vadd.f32 %v1067, %v1082
  %v1087 = vadd.f32 %v1070, %v1083
  %v1088 = vadd.f32 %v1075, %v1084
  %v1089 = vadd.f32 %v1078, %v1085
  %v1090 = vxor.u32 %v1086, 2147483648
  %v1091 = vxor.u32 %v1087, 2147483648
  %v1092 = vxor.u32 %v1088, 2147483648
  %v1093 = vxor.u32 %v1089, 2147483648
  %v1094 = vmul.f32 %v1090, 1.442695
  %v1095 = vpow.pop %v1094
  %v1096 = vmul.f32 %v1091, 1.442695
  %v1097 = vpow.pop %v1096
  %v1098 = vmul.f32 %v1092, 1.442695
  %v1099 = vpow.pop %v1098
  %v1100 = vmul.f32 %v1093, 1.442695
  %v1101 = vpow.pop %v1100
  %v1102 = vadd.f32 %v1095, 1.0
  %v1103 = vadd.f32 %v1097, 1.0
  %v1104 = vadd.f32 %v1099, 1.0
  %v1105 = vadd.f32 %v1101, 1.0
  %v1106 = vrcp.pop %v1102
  %v1107 = vmul.f32 1.0, %v1106
  %v1108 = vrcp.pop %v1103
  %v1109 = vmul.f32 1.0, %v1108
  %v1110 = vrcp.pop %v1104
  %v1111 = vmul.f32 1.0, %v1110
  %v1112 = vrcp.pop %v1105
  %v1113 = vmul.f32 1.0, %v1112
  %1118 = vrot.lane.b32.xlu0 %v1107, 96
  %v1119 = vpop.permute.xlu0 %1118
  %1120 = vrot.lane.b32.xlu0 %v1109, 96
  %v1121 = vpop.permute.xlu0 %1120
  %1122 = vrot.lane.b32.xlu0 %v1111, 96
  %v1123 = vpop.permute.xlu0 %1122
  %1124 = vrot.lane.b32.xlu0 %v1113, 96
  %v1125 = vpop.permute.xlu0 %1124
  %v1130 = vmul.f32 %v909, %v1119
  %v1131 = vmul.f32 %v910, %v1121
  %v1132 = vmul.f32 %v911, %v1123
  %v1133 = vmul.f32 %v912, %v1125
  %v1134 = vpack.c.bf16 %v1131, %v1130
  %v1135 = vpack.c.bf16 %v1133, %v1132
  %1136 = vmatprep.subr.bf16.mxu0 0
  %1137 = vmatpush1.bf16.msra.mxu0 0
  %1138 = vmatprep.subr.bf16.mxu0 0
  %1139 = vmatpush1.bf16.msra.mxu0 0
  %1140 = vmatprep.subr.bf16.mxu0 0
  %1141 = vmatpush1.bf16.msra.mxu0 0
  %1142 = vmatprep.subr.bf16.mxu0 0
  %1143 = vmatpush1.bf16.msra.mxu0 0
  %1144 = vmatprep.subr.bf16.mxu0 0
  %1145 = vmatpush1.bf16.msra.mxu0 0
  %1146 = vmatprep.subr.bf16.mxu0 0
  %1147 = vmatpush1.bf16.msra.mxu0 0
  %1148 = vmatprep.subr.bf16.mxu0 0
  %1149 = vmatpush1.bf16.msra.mxu0 0
  %1150 = vmatprep.subr.bf16.mxu0 0
  %1151 = vmatpush1.bf16.msra.mxu0 %v1134
  %1152 = vmatprep.subr.bf16.mxu0 0
  %1153 = vmatpush2.bf16.msra.mxu0 0
  %1154 = vmatprep.subr.bf16.mxu0 0
  %1155 = vmatpush2.bf16.msra.mxu0 0
  %1156 = vmatprep.subr.bf16.mxu0 0
  %1157 = vmatpush2.bf16.msra.mxu0 0
  %1158 = vmatprep.subr.bf16.mxu0 0
  %1159 = vmatpush2.bf16.msra.mxu0 0
  %1160 = vmatprep.subr.bf16.mxu0 0
  %1161 = vmatpush2.bf16.msra.mxu0 0
  %1162 = vmatprep.subr.bf16.mxu0 0
  %1163 = vmatpush2.bf16.msra.mxu0 0
  %1164 = vmatprep.subr.bf16.mxu0 0
  %1165 = vmatpush2.bf16.msra.mxu0 0
  %1166 = vmatprep.subr.bf16.mxu0 0
  %1167 = vmatpush2.bf16.msra.mxu0 0
  %1168 = vmatprep.mubr.bf16.mxu0 0
  %1169 = vmatmul.mubr.bf16.gmra.mxu0 %v59
  %v1170 = vpop.f32.mrf.mxu0
  %v1171 = vadd.f32 0.0, %v1170
  %v1172 = vpop.f32.mrf.mxu0
  %v1173 = vpop.f32.mrf.mxu0
  %v1174 = vadd.f32 0.0, %v1173
  %v1175 = vpop.f32.mrf.mxu0
  %1176 = vmatprep.mubr.bf16.mxu0 0
  %1177 = vmatmul.mubr.bf16.gmra.mxu0 %v62
  %v1178 = vpop.f32.mrf.mxu0
  %v1179 = vadd.f32 0.0, %v1178
  %v1180 = vpop.f32.mrf.mxu0
  %v1181 = vpop.f32.mrf.mxu0
  %v1182 = vadd.f32 0.0, %v1181
  %v1183 = vpop.f32.mrf.mxu0
  %1184 = vdwg.mxu0
  %v1185 = vpack.c.bf16 %v1174, %v1171
  %v1186 = vpack.c.bf16 %v1182, %v1179
  %v1188 = vsel %vm127, %v1185, 0
  %v1191 = vsel %vm127, %v1186, 0
  %1193 = vmatprep.subr.bf16.mxu0 0
  %1194 = vmatpush1.bf16.msra.mxu0 0
  %1195 = vmatprep.subr.bf16.mxu0 0
  %1196 = vmatpush1.bf16.msra.mxu0 0
  %1197 = vmatprep.subr.bf16.mxu0 0
  %1198 = vmatpush1.bf16.msra.mxu0 0
  %1199 = vmatprep.subr.bf16.mxu0 0
  %1200 = vmatpush1.bf16.msra.mxu0 0
  %1201 = vmatprep.subr.bf16.mxu0 0
  %1202 = vmatpush1.bf16.msra.mxu0 0
  %1203 = vmatprep.subr.bf16.mxu0 0
  %1204 = vmatpush1.bf16.msra.mxu0 0
  %1205 = vmatprep.subr.bf16.mxu0 0
  %1206 = vmatpush1.bf16.msra.mxu0 %v349
  %1207 = vmatprep.subr.bf16.mxu0 0
  %1208 = vmatpush1.bf16.msra.mxu0 %v348
  %1209 = vmatprep.subr.bf16.mxu0 0
  %1210 = vmatpush2.bf16.msra.mxu0 0
  %1211 = vmatprep.subr.bf16.mxu0 0
  %1212 = vmatpush2.bf16.msra.mxu0 0
  %1213 = vmatprep.subr.bf16.mxu0 0
  %1214 = vmatpush2.bf16.msra.mxu0 0
  %1215 = vmatprep.subr.bf16.mxu0 0
  %1216 = vmatpush2.bf16.msra.mxu0 0
  %1217 = vmatprep.subr.bf16.mxu0 0
  %1218 = vmatpush2.bf16.msra.mxu0 0
  %1219 = vmatprep.subr.bf16.mxu0 0
  %1220 = vmatpush2.bf16.msra.mxu0 0
  %1221 = vmatprep.subr.bf16.mxu0 0
  %1222 = vmatpush2.bf16.msra.mxu0 0
  %1223 = vmatprep.subr.bf16.mxu0 0
  %1224 = vmatpush2.bf16.msra.mxu0 0
  %1225 = vmatprep.mubr.bf16.mxu0 0
  %1226 = vmatmul.mubr.bf16.gmra.mxu0 %v1188
  %v1227 = vpop.f32.mrf.mxu0
  %v1228 = vadd.f32 0.0, %v1227
  %v1229 = vpop.f32.mrf.mxu0
  %v1230 = vpop.f32.mrf.mxu0
  %v1231 = vadd.f32 0.0, %v1230
  %v1232 = vpop.f32.mrf.mxu0
  %1233 = vmatprep.mubr.bf16.mxu0 0
  %1234 = vmatmul.mubr.bf16.gmra.mxu0 %v1191
  %v1235 = vpop.f32.mrf.mxu0
  %v1236 = vadd.f32 0.0, %v1235
  %v1237 = vpop.f32.mrf.mxu0
  %v1238 = vpop.f32.mrf.mxu0
  %v1239 = vadd.f32 0.0, %v1238
  %v1240 = vpop.f32.mrf.mxu0
  %1241 = vdwg.mxu0
  %v1243 = vsel %vm127, %v1134, 0
  %v1246 = vsel %vm127, %v1135, 0
  %1248 = vmatprep.subr.bf16.mxu0 0
  %1249 = vmatpush1.bf16.msra.mxu0 0
  %1250 = vmatprep.subr.bf16.mxu0 0
  %1251 = vmatpush1.bf16.msra.mxu0 0
  %1252 = vmatprep.subr.bf16.mxu0 0
  %1253 = vmatpush1.bf16.msra.mxu0 0
  %1254 = vmatprep.subr.bf16.mxu0 0
  %1255 = vmatpush1.bf16.msra.mxu0 0
  %1256 = vmatprep.subr.bf16.mxu0 0
  %1257 = vmatpush1.bf16.msra.mxu0 0
  %1258 = vmatprep.subr.bf16.mxu0 0
  %1259 = vmatpush1.bf16.msra.mxu0 0
  %1260 = vmatprep.subr.bf16.mxu0 0
  %1261 = vmatpush1.bf16.msra.mxu0 %v419
  %1262 = vmatprep.subr.bf16.mxu0 0
  %1263 = vmatpush1.bf16.msra.mxu0 %v418
  %1264 = vmatprep.subr.bf16.mxu0 0
  %1265 = vmatpush2.bf16.msra.mxu0 0
  %1266 = vmatprep.subr.bf16.mxu0 0
  %1267 = vmatpush2.bf16.msra.mxu0 0
  %1268 = vmatprep.subr.bf16.mxu0 0
  %1269 = vmatpush2.bf16.msra.mxu0 0
  %1270 = vmatprep.subr.bf16.mxu0 0
  %1271 = vmatpush2.bf16.msra.mxu0 0
  %1272 = vmatprep.subr.bf16.mxu0 0
  %1273 = vmatpush2.bf16.msra.mxu0 0
  %1274 = vmatprep.subr.bf16.mxu0 0
  %1275 = vmatpush2.bf16.msra.mxu0 0
  %1276 = vmatprep.subr.bf16.mxu0 0
  %1277 = vmatpush2.bf16.msra.mxu0 0
  %1278 = vmatprep.subr.bf16.mxu0 0
  %1279 = vmatpush2.bf16.msra.mxu0 0
  %1280 = vmatprep.mubr.bf16.mxu0 0
  %1281 = vmatmul.mubr.bf16.gmra.mxu0 %v1243
  %v1282 = vpop.f32.mrf.mxu0
  %v1283 = vadd.f32 %v1228, %v1282
  %v1284 = vpop.f32.mrf.mxu0
  %v1285 = vpop.f32.mrf.mxu0
  %v1286 = vadd.f32 %v1231, %v1285
  %v1287 = vpop.f32.mrf.mxu0
  %1288 = vmatprep.mubr.bf16.mxu0 0
  %1289 = vmatmul.mubr.bf16.gmra.mxu0 %v1246
  %v1290 = vpop.f32.mrf.mxu0
  %v1291 = vadd.f32 %v1236, %v1290
  %v1292 = vpop.f32.mrf.mxu0
  %v1293 = vpop.f32.mrf.mxu0
  %v1294 = vadd.f32 %v1239, %v1293
  %v1295 = vpop.f32.mrf.mxu0
  %1296 = vdwg.mxu0
  %s1297 = scalar_lea.vmem %s2, 64
  %v1298 = vld [vmem:[%s1297] sm:$0xff]
  %v1299 = vld [vmem:[%s1297 + $0x8] sm:$0xff]
  %v1300 = vld [vmem:[%s1297 + $0x10] sm:$0xff]
  %v1301 = vld [vmem:[%s1297 + $0x18] sm:$0xff]
  %v1302 = vadd.f32 %v1283, %v1298
  %v1303 = vadd.f32 %v1286, %v1299
  %v1304 = vadd.f32 %v1291, %v1300
  %v1305 = vadd.f32 %v1294, %v1301
  %v1306 = vmul.f32 %v1107, %v909
  %v1307 = vmul.f32 %v1109, %v910
  %v1308 = vmul.f32 %v1111, %v911
  %v1309 = vmul.f32 %v1113, %v912
  %v1310 = vsub.f32 1.0, %v1107
  %v1311 = vsub.f32 1.0, %v1109
  %v1312 = vsub.f32 1.0, %v1111
  %v1313 = vsub.f32 1.0, %v1113
  %v1314 = vtanh.pop %v1302
  %v1315 = vtanh.pop %v1303
  %v1316 = vtanh.pop %v1304
  %v1317 = vtanh.pop %v1305
  %v1318 = vmul.f32 %v1310, %v1314
  %v1319 = vmul.f32 %v1311, %v1315
  %v1320 = vmul.f32 %v1312, %v1316
  %v1321 = vmul.f32 %v1313, %v1317
  %v1322 = vadd.f32 %v1306, %v1318
  %v1323 = vadd.f32 %v1307, %v1319
  %v1324 = vadd.f32 %v1308, %v1320
  %v1325 = vadd.f32 %v1309, %v1321
  %s1326 = scalar_lea.vmem %s7, 64
  %1327 = vst.msk [vmem:[%s1326] sm:$0xff] %vm127, %v1322
  %1328 = vst.msk [vmem:[%s1326 + $0x8] sm:$0xff] %vm127, %v1323
  %1329 = vst.msk [vmem:[%s1326 + $0x10] sm:$0xff] %vm127, %v1324
  %1330 = vst.msk [vmem:[%s1326 + $0x18] sm:$0xff] %vm127, %v1325
  %v1331 = vpack.c.bf16 %v1323, %v1322
  %v1332 = vpack.c.bf16 %v1325, %v1324
  %1333 = vmatprep.subr.bf16.mxu0 0
  %1334 = vmatpush1.bf16.msra.mxu0 0
  %1335 = vmatprep.subr.bf16.mxu0 0
  %1336 = vmatpush1.bf16.msra.mxu0 0
  %1337 = vmatprep.subr.bf16.mxu0 0
  %1338 = vmatpush1.bf16.msra.mxu0 0
  %1339 = vmatprep.subr.bf16.mxu0 0
  %1340 = vmatpush1.bf16.msra.mxu0 0
  %1341 = vmatprep.subr.bf16.mxu0 0
  %1342 = vmatpush1.bf16.msra.mxu0 0
  %1343 = vmatprep.subr.bf16.mxu0 0
  %1344 = vmatpush1.bf16.msra.mxu0 0
  %1345 = vmatprep.subr.bf16.mxu0 0
  %1346 = vmatpush1.bf16.msra.mxu0 0
  %1347 = vmatprep.subr.bf16.mxu0 0
  %1348 = vmatpush1.bf16.msra.mxu0 %v1331
  %1349 = vmatprep.subr.bf16.mxu0 0
  %1350 = vmatpush2.bf16.msra.mxu0 0
  %1351 = vmatprep.subr.bf16.mxu0 0
  %1352 = vmatpush2.bf16.msra.mxu0 0
  %1353 = vmatprep.subr.bf16.mxu0 0
  %1354 = vmatpush2.bf16.msra.mxu0 0
  %1355 = vmatprep.subr.bf16.mxu0 0
  %1356 = vmatpush2.bf16.msra.mxu0 0
  %1357 = vmatprep.subr.bf16.mxu0 0
  %1358 = vmatpush2.bf16.msra.mxu0 0
  %1359 = vmatprep.subr.bf16.mxu0 0
  %1360 = vmatpush2.bf16.msra.mxu0 0
  %1361 = vmatprep.subr.bf16.mxu0 0
  %1362 = vmatpush2.bf16.msra.mxu0 0
  %1363 = vmatprep.subr.bf16.mxu0 0
  %1364 = vmatpush2.bf16.msra.mxu0 0
  %1365 = vmatprep.mubr.bf16.mxu0 0
  %1366 = vmatmul.mubr.bf16.gmra.mxu0 %v59
  %v1367 = vpop.f32.mrf.mxu0
  %v1368 = vadd.f32 0.0, %v1367
  %v1369 = vpop.f32.mrf.mxu0
  %v1370 = vpop.f32.mrf.mxu0
  %v1371 = vadd.f32 0.0, %v1370
  %v1372 = vpop.f32.mrf.mxu0
  %1373 = vmatprep.mubr.bf16.mxu0 0
  %1374 = vmatmul.mubr.bf16.gmra.mxu0 %v62
  %v1375 = vpop.f32.mrf.mxu0
  %v1376 = vadd.f32 0.0, %v1375
  %v1377 = vpop.f32.mrf.mxu0
  %v1378 = vpop.f32.mrf.mxu0
  %v1379 = vadd.f32 0.0, %v1378
  %v1380 = vpop.f32.mrf.mxu0
  %1381 = vdwg.mxu0
  %v1382 = vpack.c.bf16 %v1371, %v1368
  %v1383 = vpack.c.bf16 %v1379, %v1376
  %v1385 = vsel %vm127, %v1382, 0
  %v1388 = vsel %vm127, %v1383, 0
  %1390 = vmatprep.subr.bf16.mxu0 0
  %1391 = vmatpush1.bf16.msra.mxu0 0
  %1392 = vmatprep.subr.bf16.mxu0 0
  %1393 = vmatpush1.bf16.msra.mxu0 0
  %1394 = vmatprep.subr.bf16.mxu0 0
  %1395 = vmatpush1.bf16.msra.mxu0 0
  %1396 = vmatprep.subr.bf16.mxu0 0
  %1397 = vmatpush1.bf16.msra.mxu0 0
  %1398 = vmatprep.subr.bf16.mxu0 0
  %1399 = vmatpush1.bf16.msra.mxu0 0
  %1400 = vmatprep.subr.bf16.mxu0 0
  %1401 = vmatpush1.bf16.msra.mxu0 0
  %1402 = vmatprep.subr.bf16.mxu0 0
  %1403 = vmatpush1.bf16.msra.mxu0 %v124
  %1404 = vmatprep.subr.bf16.mxu0 0
  %1405 = vmatpush1.bf16.msra.mxu0 %v123
  %1406 = vmatprep.subr.bf16.mxu0 0
  %1407 = vmatpush2.bf16.msra.mxu0 0
  %1408 = vmatprep.subr.bf16.mxu0 0
  %1409 = vmatpush2.bf16.msra.mxu0 0
  %1410 = vmatprep.subr.bf16.mxu0 0
  %1411 = vmatpush2.bf16.msra.mxu0 0
  %1412 = vmatprep.subr.bf16.mxu0 0
  %1413 = vmatpush2.bf16.msra.mxu0 0
  %1414 = vmatprep.subr.bf16.mxu0 0
  %1415 = vmatpush2.bf16.msra.mxu0 0
  %1416 = vmatprep.subr.bf16.mxu0 0
  %1417 = vmatpush2.bf16.msra.mxu0 0
  %1418 = vmatprep.subr.bf16.mxu0 0
  %1419 = vmatpush2.bf16.msra.mxu0 0
  %1420 = vmatprep.subr.bf16.mxu0 0
  %1421 = vmatpush2.bf16.msra.mxu0 0
  %1422 = vmatprep.mubr.bf16.mxu0 0
  %1423 = vmatmul.mubr.bf16.gmra.mxu0 %v1385
  %v1424 = vpop.f32.mrf.mxu0
  %v1425 = vadd.f32 0.0, %v1424
  %v1426 = vpop.f32.mrf.mxu0
  %v1427 = vpop.f32.mrf.mxu0
  %v1428 = vadd.f32 0.0, %v1427
  %v1429 = vpop.f32.mrf.mxu0
  %1430 = vmatprep.mubr.bf16.mxu0 0
  %1431 = vmatmul.mubr.bf16.gmra.mxu0 %v1388
  %v1432 = vpop.f32.mrf.mxu0
  %v1433 = vadd.f32 0.0, %v1432
  %v1434 = vpop.f32.mrf.mxu0
  %v1435 = vpop.f32.mrf.mxu0
  %v1436 = vadd.f32 0.0, %v1435
  %v1437 = vpop.f32.mrf.mxu0
  %1438 = vdwg.mxu0
  %v1440 = vsel %vm127, %v1331, 0
  %v1443 = vsel %vm127, %v1332, 0
  %1445 = vmatprep.subr.bf16.mxu0 0
  %1446 = vmatpush1.bf16.msra.mxu0 0
  %1447 = vmatprep.subr.bf16.mxu0 0
  %1448 = vmatpush1.bf16.msra.mxu0 0
  %1449 = vmatprep.subr.bf16.mxu0 0
  %1450 = vmatpush1.bf16.msra.mxu0 0
  %1451 = vmatprep.subr.bf16.mxu0 0
  %1452 = vmatpush1.bf16.msra.mxu0 0
  %1453 = vmatprep.subr.bf16.mxu0 0
  %1454 = vmatpush1.bf16.msra.mxu0 0
  %1455 = vmatprep.subr.bf16.mxu0 0
  %1456 = vmatpush1.bf16.msra.mxu0 0
  %1457 = vmatprep.subr.bf16.mxu0 0
  %1458 = vmatpush1.bf16.msra.mxu0 %v192
  %1459 = vmatprep.subr.bf16.mxu0 0
  %1460 = vmatpush1.bf16.msra.mxu0 %v191
  %1461 = vmatprep.subr.bf16.mxu0 0
  %1462 = vmatpush2.bf16.msra.mxu0 0
  %1463 = vmatprep.subr.bf16.mxu0 0
  %1464 = vmatpush2.bf16.msra.mxu0 0
  %1465 = vmatprep.subr.bf16.mxu0 0
  %1466 = vmatpush2.bf16.msra.mxu0 0
  %1467 = vmatprep.subr.bf16.mxu0 0
  %1468 = vmatpush2.bf16.msra.mxu0 0
  %1469 = vmatprep.subr.bf16.mxu0 0
  %1470 = vmatpush2.bf16.msra.mxu0 0
  %1471 = vmatprep.subr.bf16.mxu0 0
  %1472 = vmatpush2.bf16.msra.mxu0 0
  %1473 = vmatprep.subr.bf16.mxu0 0
  %1474 = vmatpush2.bf16.msra.mxu0 0
  %1475 = vmatprep.subr.bf16.mxu0 0
  %1476 = vmatpush2.bf16.msra.mxu0 0
  %1477 = vmatprep.mubr.bf16.mxu0 0
  %1478 = vmatmul.mubr.bf16.gmra.mxu0 %v1440
  %v1479 = vpop.f32.mrf.mxu0
  %v1480 = vadd.f32 %v1425, %v1479
  %v1481 = vpop.f32.mrf.mxu0
  %v1482 = vpop.f32.mrf.mxu0
  %v1483 = vadd.f32 %v1428, %v1482
  %v1484 = vpop.f32.mrf.mxu0
  %1485 = vmatprep.mubr.bf16.mxu0 0
  %1486 = vmatmul.mubr.bf16.gmra.mxu0 %v1443
  %v1487 = vpop.f32.mrf.mxu0
  %v1488 = vadd.f32 %v1433, %v1487
  %v1489 = vpop.f32.mrf.mxu0
  %v1490 = vpop.f32.mrf.mxu0
  %v1491 = vadd.f32 %v1436, %v1490
  %v1492 = vpop.f32.mrf.mxu0
  %1493 = vdwg.mxu0
  %s1494 = scalar_lea.vmem %s1, 96
  %v1495 = vld [vmem:[%s1494] sm:$0xff]
  %v1496 = vld [vmem:[%s1494 + $0x8] sm:$0xff]
  %v1497 = vld [vmem:[%s1494 + $0x10] sm:$0xff]
  %v1498 = vld [vmem:[%s1494 + $0x18] sm:$0xff]
  %v1499 = vadd.f32 %v1480, %v1495
  %v1500 = vadd.f32 %v1483, %v1496
  %v1501 = vadd.f32 %v1488, %v1497
  %v1502 = vadd.f32 %v1491, %v1498
  %v1503 = vxor.u32 %v1499, 2147483648
  %v1504 = vxor.u32 %v1500, 2147483648
  %v1505 = vxor.u32 %v1501, 2147483648
  %v1506 = vxor.u32 %v1502, 2147483648
  %v1507 = vmul.f32 %v1503, 1.442695
  %v1508 = vpow.pop %v1507
  %v1509 = vmul.f32 %v1504, 1.442695
  %v1510 = vpow.pop %v1509
  %v1511 = vmul.f32 %v1505, 1.442695
  %v1512 = vpow.pop %v1511
  %v1513 = vmul.f32 %v1506, 1.442695
  %v1514 = vpow.pop %v1513
  %v1515 = vadd.f32 %v1508, 1.0
  %v1516 = vadd.f32 %v1510, 1.0
  %v1517 = vadd.f32 %v1512, 1.0
  %v1518 = vadd.f32 %v1514, 1.0
  %v1519 = vrcp.pop %v1515
  %v1520 = vmul.f32 1.0, %v1519
  %v1521 = vrcp.pop %v1516
  %v1522 = vmul.f32 1.0, %v1521
  %v1523 = vrcp.pop %v1517
  %v1524 = vmul.f32 1.0, %v1523
  %v1525 = vrcp.pop %v1518
  %v1526 = vmul.f32 1.0, %v1525
  %1531 = vrot.lane.b32.xlu0 %v1520, 96
  %v1532 = vpop.permute.xlu0 %1531
  %1533 = vrot.lane.b32.xlu0 %v1522, 96
  %v1534 = vpop.permute.xlu0 %1533
  %1535 = vrot.lane.b32.xlu0 %v1524, 96
  %v1536 = vpop.permute.xlu0 %1535
  %1537 = vrot.lane.b32.xlu0 %v1526, 96
  %v1538 = vpop.permute.xlu0 %1537
  %v1543 = vmul.f32 %v1322, %v1532
  %v1544 = vmul.f32 %v1323, %v1534
  %v1545 = vmul.f32 %v1324, %v1536
  %v1546 = vmul.f32 %v1325, %v1538
  %v1547 = vpack.c.bf16 %v1544, %v1543
  %v1548 = vpack.c.bf16 %v1546, %v1545
  %1549 = vmatprep.subr.bf16.mxu0 0
  %1550 = vmatpush1.bf16.msra.mxu0 0
  %1551 = vmatprep.subr.bf16.mxu0 0
  %1552 = vmatpush1.bf16.msra.mxu0 0
  %1553 = vmatprep.subr.bf16.mxu0 0
  %1554 = vmatpush1.bf16.msra.mxu0 0
  %1555 = vmatprep.subr.bf16.mxu0 0
  %1556 = vmatpush1.bf16.msra.mxu0 0
  %1557 = vmatprep.subr.bf16.mxu0 0
  %1558 = vmatpush1.bf16.msra.mxu0 0
  %1559 = vmatprep.subr.bf16.mxu0 0
  %1560 = vmatpush1.bf16.msra.mxu0 0
  %1561 = vmatprep.subr.bf16.mxu0 0
  %1562 = vmatpush1.bf16.msra.mxu0 0
  %1563 = vmatprep.subr.bf16.mxu0 0
  %1564 = vmatpush1.bf16.msra.mxu0 %v1547
  %1565 = vmatprep.subr.bf16.mxu0 0
  %1566 = vmatpush2.bf16.msra.mxu0 0
  %1567 = vmatprep.subr.bf16.mxu0 0
  %1568 = vmatpush2.bf16.msra.mxu0 0
  %1569 = vmatprep.subr.bf16.mxu0 0
  %1570 = vmatpush2.bf16.msra.mxu0 0
  %1571 = vmatprep.subr.bf16.mxu0 0
  %1572 = vmatpush2.bf16.msra.mxu0 0
  %1573 = vmatprep.subr.bf16.mxu0 0
  %1574 = vmatpush2.bf16.msra.mxu0 0
  %1575 = vmatprep.subr.bf16.mxu0 0
  %1576 = vmatpush2.bf16.msra.mxu0 0
  %1577 = vmatprep.subr.bf16.mxu0 0
  %1578 = vmatpush2.bf16.msra.mxu0 0
  %1579 = vmatprep.subr.bf16.mxu0 0
  %1580 = vmatpush2.bf16.msra.mxu0 0
  %1581 = vmatprep.mubr.bf16.mxu0 0
  %1582 = vmatmul.mubr.bf16.gmra.mxu0 %v59
  %v1583 = vpop.f32.mrf.mxu0
  %v1584 = vadd.f32 0.0, %v1583
  %v1585 = vpop.f32.mrf.mxu0
  %v1586 = vpop.f32.mrf.mxu0
  %v1587 = vadd.f32 0.0, %v1586
  %v1588 = vpop.f32.mrf.mxu0
  %1589 = vmatprep.mubr.bf16.mxu0 0
  %1590 = vmatmul.mubr.bf16.gmra.mxu0 %v62
  %v1591 = vpop.f32.mrf.mxu0
  %v1592 = vadd.f32 0.0, %v1591
  %v1593 = vpop.f32.mrf.mxu0
  %v1594 = vpop.f32.mrf.mxu0
  %v1595 = vadd.f32 0.0, %v1594
  %v1596 = vpop.f32.mrf.mxu0
  %1597 = vdwg.mxu0
  %v1598 = vpack.c.bf16 %v1587, %v1584
  %v1599 = vpack.c.bf16 %v1595, %v1592
  %v1601 = vsel %vm127, %v1598, 0
  %v1604 = vsel %vm127, %v1599, 0
  %1606 = vmatprep.subr.bf16.mxu0 0
  %1607 = vmatpush1.bf16.msra.mxu0 0
  %1608 = vmatprep.subr.bf16.mxu0 0
  %1609 = vmatpush1.bf16.msra.mxu0 0
  %1610 = vmatprep.subr.bf16.mxu0 0
  %1611 = vmatpush1.bf16.msra.mxu0 0
  %1612 = vmatprep.subr.bf16.mxu0 0
  %1613 = vmatpush1.bf16.msra.mxu0 0
  %1614 = vmatprep.subr.bf16.mxu0 0
  %1615 = vmatpush1.bf16.msra.mxu0 0
  %1616 = vmatprep.subr.bf16.mxu0 0
  %1617 = vmatpush1.bf16.msra.mxu0 0
  %1618 = vmatprep.subr.bf16.mxu0 0
  %1619 = vmatpush1.bf16.msra.mxu0 %v349
  %1620 = vmatprep.subr.bf16.mxu0 0
  %1621 = vmatpush1.bf16.msra.mxu0 %v348
  %1622 = vmatprep.subr.bf16.mxu0 0
  %1623 = vmatpush2.bf16.msra.mxu0 0
  %1624 = vmatprep.subr.bf16.mxu0 0
  %1625 = vmatpush2.bf16.msra.mxu0 0
  %1626 = vmatprep.subr.bf16.mxu0 0
  %1627 = vmatpush2.bf16.msra.mxu0 0
  %1628 = vmatprep.subr.bf16.mxu0 0
  %1629 = vmatpush2.bf16.msra.mxu0 0
  %1630 = vmatprep.subr.bf16.mxu0 0
  %1631 = vmatpush2.bf16.msra.mxu0 0
  %1632 = vmatprep.subr.bf16.mxu0 0
  %1633 = vmatpush2.bf16.msra.mxu0 0
  %1634 = vmatprep.subr.bf16.mxu0 0
  %1635 = vmatpush2.bf16.msra.mxu0 0
  %1636 = vmatprep.subr.bf16.mxu0 0
  %1637 = vmatpush2.bf16.msra.mxu0 0
  %1638 = vmatprep.mubr.bf16.mxu0 0
  %1639 = vmatmul.mubr.bf16.gmra.mxu0 %v1601
  %v1640 = vpop.f32.mrf.mxu0
  %v1641 = vadd.f32 0.0, %v1640
  %v1642 = vpop.f32.mrf.mxu0
  %v1643 = vpop.f32.mrf.mxu0
  %v1644 = vadd.f32 0.0, %v1643
  %v1645 = vpop.f32.mrf.mxu0
  %1646 = vmatprep.mubr.bf16.mxu0 0
  %1647 = vmatmul.mubr.bf16.gmra.mxu0 %v1604
  %v1648 = vpop.f32.mrf.mxu0
  %v1649 = vadd.f32 0.0, %v1648
  %v1650 = vpop.f32.mrf.mxu0
  %v1651 = vpop.f32.mrf.mxu0
  %v1652 = vadd.f32 0.0, %v1651
  %v1653 = vpop.f32.mrf.mxu0
  %1654 = vdwg.mxu0
  %v1656 = vsel %vm127, %v1547, 0
  %v1659 = vsel %vm127, %v1548, 0
  %1661 = vmatprep.subr.bf16.mxu0 0
  %1662 = vmatpush1.bf16.msra.mxu0 0
  %1663 = vmatprep.subr.bf16.mxu0 0
  %1664 = vmatpush1.bf16.msra.mxu0 0
  %1665 = vmatprep.subr.bf16.mxu0 0
  %1666 = vmatpush1.bf16.msra.mxu0 0
  %1667 = vmatprep.subr.bf16.mxu0 0
  %1668 = vmatpush1.bf16.msra.mxu0 0
  %1669 = vmatprep.subr.bf16.mxu0 0
  %1670 = vmatpush1.bf16.msra.mxu0 0
  %1671 = vmatprep.subr.bf16.mxu0 0
  %1672 = vmatpush1.bf16.msra.mxu0 0
  %1673 = vmatprep.subr.bf16.mxu0 0
  %1674 = vmatpush1.bf16.msra.mxu0 %v419
  %1675 = vmatprep.subr.bf16.mxu0 0
  %1676 = vmatpush1.bf16.msra.mxu0 %v418
  %1677 = vmatprep.subr.bf16.mxu0 0
  %1678 = vmatpush2.bf16.msra.mxu0 0
  %1679 = vmatprep.subr.bf16.mxu0 0
  %1680 = vmatpush2.bf16.msra.mxu0 0
  %1681 = vmatprep.subr.bf16.mxu0 0
  %1682 = vmatpush2.bf16.msra.mxu0 0
  %1683 = vmatprep.subr.bf16.mxu0 0
  %1684 = vmatpush2.bf16.msra.mxu0 0
  %1685 = vmatprep.subr.bf16.mxu0 0
  %1686 = vmatpush2.bf16.msra.mxu0 0
  %1687 = vmatprep.subr.bf16.mxu0 0
  %1688 = vmatpush2.bf16.msra.mxu0 0
  %1689 = vmatprep.subr.bf16.mxu0 0
  %1690 = vmatpush2.bf16.msra.mxu0 0
  %1691 = vmatprep.subr.bf16.mxu0 0
  %1692 = vmatpush2.bf16.msra.mxu0 0
  %1693 = vmatprep.mubr.bf16.mxu0 0
  %1694 = vmatmul.mubr.bf16.gmra.mxu0 %v1656
  %v1695 = vpop.f32.mrf.mxu0
  %v1696 = vadd.f32 %v1641, %v1695
  %v1697 = vpop.f32.mrf.mxu0
  %v1698 = vpop.f32.mrf.mxu0
  %v1699 = vadd.f32 %v1644, %v1698
  %v1700 = vpop.f32.mrf.mxu0
  %1701 = vmatprep.mubr.bf16.mxu0 0
  %1702 = vmatmul.mubr.bf16.gmra.mxu0 %v1659
  %v1703 = vpop.f32.mrf.mxu0
  %v1704 = vadd.f32 %v1649, %v1703
  %v1705 = vpop.f32.mrf.mxu0
  %v1706 = vpop.f32.mrf.mxu0
  %v1707 = vadd.f32 %v1652, %v1706
  %v1708 = vpop.f32.mrf.mxu0
  %1709 = vdwg.mxu0
  %s1710 = scalar_lea.vmem %s2, 96
  %v1711 = vld [vmem:[%s1710] sm:$0xff]
  %v1712 = vld [vmem:[%s1710 + $0x8] sm:$0xff]
  %v1713 = vld [vmem:[%s1710 + $0x10] sm:$0xff]
  %v1714 = vld [vmem:[%s1710 + $0x18] sm:$0xff]
  %v1715 = vadd.f32 %v1696, %v1711
  %v1716 = vadd.f32 %v1699, %v1712
  %v1717 = vadd.f32 %v1704, %v1713
  %v1718 = vadd.f32 %v1707, %v1714
  %v1719 = vmul.f32 %v1520, %v1322
  %v1720 = vmul.f32 %v1522, %v1323
  %v1721 = vmul.f32 %v1524, %v1324
  %v1722 = vmul.f32 %v1526, %v1325
  %v1723 = vsub.f32 1.0, %v1520
  %v1724 = vsub.f32 1.0, %v1522
  %v1725 = vsub.f32 1.0, %v1524
  %v1726 = vsub.f32 1.0, %v1526
  %v1727 = vtanh.pop %v1715
  %v1728 = vtanh.pop %v1716
  %v1729 = vtanh.pop %v1717
  %v1730 = vtanh.pop %v1718
  %v1731 = vmul.f32 %v1723, %v1727
  %v1732 = vmul.f32 %v1724, %v1728
  %v1733 = vmul.f32 %v1725, %v1729
  %v1734 = vmul.f32 %v1726, %v1730
  %v1735 = vadd.f32 %v1719, %v1731
  %v1736 = vadd.f32 %v1720, %v1732
  %v1737 = vadd.f32 %v1721, %v1733
  %v1738 = vadd.f32 %v1722, %v1734
  %s1739 = scalar_lea.vmem %s7, 96
  %1740 = vst.msk [vmem:[%s1739] sm:$0xff] %vm127, %v1735
  %1741 = vst.msk [vmem:[%s1739 + $0x8] sm:$0xff] %vm127, %v1736
  %1742 = vst.msk [vmem:[%s1739 + $0x10] sm:$0xff] %vm127, %v1737
  %1743 = vst.msk [vmem:[%s1739 + $0x18] sm:$0xff] %vm127, %v1738
  %v1744 = vpack.c.bf16 %v1736, %v1735
  %v1745 = vpack.c.bf16 %v1738, %v1737
  %1746 = vmatprep.subr.bf16.mxu0 0
  %1747 = vmatpush1.bf16.msra.mxu0 0
  %1748 = vmatprep.subr.bf16.mxu0 0
  %1749 = vmatpush1.bf16.msra.mxu0 0
  %1750 = vmatprep.subr.bf16.mxu0 0
  %1751 = vmatpush1.bf16.msra.mxu0 0
  %1752 = vmatprep.subr.bf16.mxu0 0
  %1753 = vmatpush1.bf16.msra.mxu0 0
  %1754 = vmatprep.subr.bf16.mxu0 0
  %1755 = vmatpush1.bf16.msra.mxu0 0
  %1756 = vmatprep.subr.bf16.mxu0 0
  %1757 = vmatpush1.bf16.msra.mxu0 0
  %1758 = vmatprep.subr.bf16.mxu0 0
  %1759 = vmatpush1.bf16.msra.mxu0 0
  %1760 = vmatprep.subr.bf16.mxu0 0
  %1761 = vmatpush1.bf16.msra.mxu0 %v1744
  %1762 = vmatprep.subr.bf16.mxu0 0
  %1763 = vmatpush2.bf16.msra.mxu0 0
  %1764 = vmatprep.subr.bf16.mxu0 0
  %1765 = vmatpush2.bf16.msra.mxu0 0
  %1766 = vmatprep.subr.bf16.mxu0 0
  %1767 = vmatpush2.bf16.msra.mxu0 0
  %1768 = vmatprep.subr.bf16.mxu0 0
  %1769 = vmatpush2.bf16.msra.mxu0 0
  %1770 = vmatprep.subr.bf16.mxu0 0
  %1771 = vmatpush2.bf16.msra.mxu0 0
  %1772 = vmatprep.subr.bf16.mxu0 0
  %1773 = vmatpush2.bf16.msra.mxu0 0
  %1774 = vmatprep.subr.bf16.mxu0 0
  %1775 = vmatpush2.bf16.msra.mxu0 0
  %1776 = vmatprep.subr.bf16.mxu0 0
  %1777 = vmatpush2.bf16.msra.mxu0 0
  %1778 = vmatprep.mubr.bf16.mxu0 0
  %1779 = vmatmul.mubr.bf16.gmra.mxu0 %v59
  %v1780 = vpop.f32.mrf.mxu0
  %v1781 = vadd.f32 0.0, %v1780
  %v1782 = vpop.f32.mrf.mxu0
  %v1783 = vpop.f32.mrf.mxu0
  %v1784 = vadd.f32 0.0, %v1783
  %v1785 = vpop.f32.mrf.mxu0
  %1786 = vmatprep.mubr.bf16.mxu0 0
  %1787 = vmatmul.mubr.bf16.gmra.mxu0 %v62
  %v1788 = vpop.f32.mrf.mxu0
  %v1789 = vadd.f32 0.0, %v1788
  %v1790 = vpop.f32.mrf.mxu0
  %v1791 = vpop.f32.mrf.mxu0
  %v1792 = vadd.f32 0.0, %v1791
  %v1793 = vpop.f32.mrf.mxu0
  %1794 = vdwg.mxu0
  %v1795 = vpack.c.bf16 %v1784, %v1781
  %v1796 = vpack.c.bf16 %v1792, %v1789
  %v1798 = vsel %vm127, %v1795, 0
  %v1801 = vsel %vm127, %v1796, 0
  %1803 = vmatprep.subr.bf16.mxu0 0
  %1804 = vmatpush1.bf16.msra.mxu0 0
  %1805 = vmatprep.subr.bf16.mxu0 0
  %1806 = vmatpush1.bf16.msra.mxu0 0
  %1807 = vmatprep.subr.bf16.mxu0 0
  %1808 = vmatpush1.bf16.msra.mxu0 0
  %1809 = vmatprep.subr.bf16.mxu0 0
  %1810 = vmatpush1.bf16.msra.mxu0 0
  %1811 = vmatprep.subr.bf16.mxu0 0
  %1812 = vmatpush1.bf16.msra.mxu0 0
  %1813 = vmatprep.subr.bf16.mxu0 0
  %1814 = vmatpush1.bf16.msra.mxu0 0
  %1815 = vmatprep.subr.bf16.mxu0 0
  %1816 = vmatpush1.bf16.msra.mxu0 %v124
  %1817 = vmatprep.subr.bf16.mxu0 0
  %1818 = vmatpush1.bf16.msra.mxu0 %v123
  %1819 = vmatprep.subr.bf16.mxu0 0
  %1820 = vmatpush2.bf16.msra.mxu0 0
  %1821 = vmatprep.subr.bf16.mxu0 0
  %1822 = vmatpush2.bf16.msra.mxu0 0
  %1823 = vmatprep.subr.bf16.mxu0 0
  %1824 = vmatpush2.bf16.msra.mxu0 0
  %1825 = vmatprep.subr.bf16.mxu0 0
  %1826 = vmatpush2.bf16.msra.mxu0 0
  %1827 = vmatprep.subr.bf16.mxu0 0
  %1828 = vmatpush2.bf16.msra.mxu0 0
  %1829 = vmatprep.subr.bf16.mxu0 0
  %1830 = vmatpush2.bf16.msra.mxu0 0
  %1831 = vmatprep.subr.bf16.mxu0 0
  %1832 = vmatpush2.bf16.msra.mxu0 0
  %1833 = vmatprep.subr.bf16.mxu0 0
  %1834 = vmatpush2.bf16.msra.mxu0 0
  %1835 = vmatprep.mubr.bf16.mxu0 0
  %1836 = vmatmul.mubr.bf16.gmra.mxu0 %v1798
  %v1837 = vpop.f32.mrf.mxu0
  %v1838 = vadd.f32 0.0, %v1837
  %v1839 = vpop.f32.mrf.mxu0
  %v1840 = vpop.f32.mrf.mxu0
  %v1841 = vadd.f32 0.0, %v1840
  %v1842 = vpop.f32.mrf.mxu0
  %1843 = vmatprep.mubr.bf16.mxu0 0
  %1844 = vmatmul.mubr.bf16.gmra.mxu0 %v1801
  %v1845 = vpop.f32.mrf.mxu0
  %v1846 = vadd.f32 0.0, %v1845
  %v1847 = vpop.f32.mrf.mxu0
  %v1848 = vpop.f32.mrf.mxu0
  %v1849 = vadd.f32 0.0, %v1848
  %v1850 = vpop.f32.mrf.mxu0
  %1851 = vdwg.mxu0
  %v1853 = vsel %vm127, %v1744, 0
  %v1856 = vsel %vm127, %v1745, 0
  %1858 = vmatprep.subr.bf16.mxu0 0
  %1859 = vmatpush1.bf16.msra.mxu0 0
  %1860 = vmatprep.subr.bf16.mxu0 0
  %1861 = vmatpush1.bf16.msra.mxu0 0
  %1862 = vmatprep.subr.bf16.mxu0 0
  %1863 = vmatpush1.bf16.msra.mxu0 0
  %1864 = vmatprep.subr.bf16.mxu0 0
  %1865 = vmatpush1.bf16.msra.mxu0 0
  %1866 = vmatprep.subr.bf16.mxu0 0
  %1867 = vmatpush1.bf16.msra.mxu0 0
  %1868 = vmatprep.subr.bf16.mxu0 0
  %1869 = vmatpush1.bf16.msra.mxu0 0
  %1870 = vmatprep.subr.bf16.mxu0 0
  %1871 = vmatpush1.bf16.msra.mxu0 %v192
  %1872 = vmatprep.subr.bf16.mxu0 0
  %1873 = vmatpush1.bf16.msra.mxu0 %v191
  %1874 = vmatprep.subr.bf16.mxu0 0
  %1875 = vmatpush2.bf16.msra.mxu0 0
  %1876 = vmatprep.subr.bf16.mxu0 0
  %1877 = vmatpush2.bf16.msra.mxu0 0
  %1878 = vmatprep.subr.bf16.mxu0 0
  %1879 = vmatpush2.bf16.msra.mxu0 0
  %1880 = vmatprep.subr.bf16.mxu0 0
  %1881 = vmatpush2.bf16.msra.mxu0 0
  %1882 = vmatprep.subr.bf16.mxu0 0
  %1883 = vmatpush2.bf16.msra.mxu0 0
  %1884 = vmatprep.subr.bf16.mxu0 0
  %1885 = vmatpush2.bf16.msra.mxu0 0
  %1886 = vmatprep.subr.bf16.mxu0 0
  %1887 = vmatpush2.bf16.msra.mxu0 0
  %1888 = vmatprep.subr.bf16.mxu0 0
  %1889 = vmatpush2.bf16.msra.mxu0 0
  %1890 = vmatprep.mubr.bf16.mxu0 0
  %1891 = vmatmul.mubr.bf16.gmra.mxu0 %v1853
  %v1892 = vpop.f32.mrf.mxu0
  %v1893 = vadd.f32 %v1838, %v1892
  %v1894 = vpop.f32.mrf.mxu0
  %v1895 = vpop.f32.mrf.mxu0
  %v1896 = vadd.f32 %v1841, %v1895
  %v1897 = vpop.f32.mrf.mxu0
  %1898 = vmatprep.mubr.bf16.mxu0 0
  %1899 = vmatmul.mubr.bf16.gmra.mxu0 %v1856
  %v1900 = vpop.f32.mrf.mxu0
  %v1901 = vadd.f32 %v1846, %v1900
  %v1902 = vpop.f32.mrf.mxu0
  %v1903 = vpop.f32.mrf.mxu0
  %v1904 = vadd.f32 %v1849, %v1903
  %v1905 = vpop.f32.mrf.mxu0
  %1906 = vdwg.mxu0
  %s1907 = scalar_lea.vmem %s1, 128
  %v1908 = vld [vmem:[%s1907] sm:$0xff]
  %v1909 = vld [vmem:[%s1907 + $0x8] sm:$0xff]
  %v1910 = vld [vmem:[%s1907 + $0x10] sm:$0xff]
  %v1911 = vld [vmem:[%s1907 + $0x18] sm:$0xff]
  %v1912 = vadd.f32 %v1893, %v1908
  %v1913 = vadd.f32 %v1896, %v1909
  %v1914 = vadd.f32 %v1901, %v1910
  %v1915 = vadd.f32 %v1904, %v1911
  %v1916 = vxor.u32 %v1912, 2147483648
  %v1917 = vxor.u32 %v1913, 2147483648
  %v1918 = vxor.u32 %v1914, 2147483648
  %v1919 = vxor.u32 %v1915, 2147483648
  %v1920 = vmul.f32 %v1916, 1.442695
  %v1921 = vpow.pop %v1920
  %v1922 = vmul.f32 %v1917, 1.442695
  %v1923 = vpow.pop %v1922
  %v1924 = vmul.f32 %v1918, 1.442695
  %v1925 = vpow.pop %v1924
  %v1926 = vmul.f32 %v1919, 1.442695
  %v1927 = vpow.pop %v1926
  %v1928 = vadd.f32 %v1921, 1.0
  %v1929 = vadd.f32 %v1923, 1.0
  %v1930 = vadd.f32 %v1925, 1.0
  %v1931 = vadd.f32 %v1927, 1.0
  %v1932 = vrcp.pop %v1928
  %v1933 = vmul.f32 1.0, %v1932
  %v1934 = vrcp.pop %v1929
  %v1935 = vmul.f32 1.0, %v1934
  %v1936 = vrcp.pop %v1930
  %v1937 = vmul.f32 1.0, %v1936
  %v1938 = vrcp.pop %v1931
  %v1939 = vmul.f32 1.0, %v1938
  %1944 = vrot.lane.b32.xlu0 %v1933, 96
  %v1945 = vpop.permute.xlu0 %1944
  %1946 = vrot.lane.b32.xlu0 %v1935, 96
  %v1947 = vpop.permute.xlu0 %1946
  %1948 = vrot.lane.b32.xlu0 %v1937, 96
  %v1949 = vpop.permute.xlu0 %1948
  %1950 = vrot.lane.b32.xlu0 %v1939, 96
  %v1951 = vpop.permute.xlu0 %1950
  %v1956 = vmul.f32 %v1735, %v1945
  %v1957 = vmul.f32 %v1736, %v1947
  %v1958 = vmul.f32 %v1737, %v1949
  %v1959 = vmul.f32 %v1738, %v1951
  %v1960 = vpack.c.bf16 %v1957, %v1956
  %v1961 = vpack.c.bf16 %v1959, %v1958
  %1962 = vmatprep.subr.bf16.mxu0 0
  %1963 = vmatpush1.bf16.msra.mxu0 0
  %1964 = vmatprep.subr.bf16.mxu0 0
  %1965 = vmatpush1.bf16.msra.mxu0 0
  %1966 = vmatprep.subr.bf16.mxu0 0
  %1967 = vmatpush1.bf16.msra.mxu0 0
  %1968 = vmatprep.subr.bf16.mxu0 0
  %1969 = vmatpush1.bf16.msra.mxu0 0
  %1970 = vmatprep.subr.bf16.mxu0 0
  %1971 = vmatpush1.bf16.msra.mxu0 0
  %1972 = vmatprep.subr.bf16.mxu0 0
  %1973 = vmatpush1.bf16.msra.mxu0 0
  %1974 = vmatprep.subr.bf16.mxu0 0
  %1975 = vmatpush1.bf16.msra.mxu0 0
  %1976 = vmatprep.subr.bf16.mxu0 0
  %1977 = vmatpush1.bf16.msra.mxu0 %v1960
  %1978 = vmatprep.subr.bf16.mxu0 0
  %1979 = vmatpush2.bf16.msra.mxu0 0
  %1980 = vmatprep.subr.bf16.mxu0 0
  %1981 = vmatpush2.bf16.msra.mxu0 0
  %1982 = vmatprep.subr.bf16.mxu0 0
  %1983 = vmatpush2.bf16.msra.mxu0 0
  %1984 = vmatprep.subr.bf16.mxu0 0
  %1985 = vmatpush2.bf16.msra.mxu0 0
  %1986 = vmatprep.subr.bf16.mxu0 0
  %1987 = vmatpush2.bf16.msra.mxu0 0
  %1988 = vmatprep.subr.bf16.mxu0 0
  %1989 = vmatpush2.bf16.msra.mxu0 0
  %1990 = vmatprep.subr.bf16.mxu0 0
  %1991 = vmatpush2.bf16.msra.mxu0 0
  %1992 = vmatprep.subr.bf16.mxu0 0
  %1993 = vmatpush2.bf16.msra.mxu0 0
  %1994 = vmatprep.mubr.bf16.mxu0 0
  %1995 = vmatmul.mubr.bf16.gmra.mxu0 %v59
  %v1996 = vpop.f32.mrf.mxu0
  %v1997 = vadd.f32 0.0, %v1996
  %v1998 = vpop.f32.mrf.mxu0
  %v1999 = vpop.f32.mrf.mxu0
  %v2000 = vadd.f32 0.0, %v1999
  %v2001 = vpop.f32.mrf.mxu0
  %2002 = vmatprep.mubr.bf16.mxu0 0
  %2003 = vmatmul.mubr.bf16.gmra.mxu0 %v62
  %v2004 = vpop.f32.mrf.mxu0
  %v2005 = vadd.f32 0.0, %v2004
  %v2006 = vpop.f32.mrf.mxu0
  %v2007 = vpop.f32.mrf.mxu0
  %v2008 = vadd.f32 0.0, %v2007
  %v2009 = vpop.f32.mrf.mxu0
  %2010 = vdwg.mxu0
  %v2011 = vpack.c.bf16 %v2000, %v1997
  %v2012 = vpack.c.bf16 %v2008, %v2005
  %v2014 = vsel %vm127, %v2011, 0
  %v2017 = vsel %vm127, %v2012, 0
  %2019 = vmatprep.subr.bf16.mxu0 0
  %2020 = vmatpush1.bf16.msra.mxu0 0
  %2021 = vmatprep.subr.bf16.mxu0 0
  %2022 = vmatpush1.bf16.msra.mxu0 0
  %2023 = vmatprep.subr.bf16.mxu0 0
  %2024 = vmatpush1.bf16.msra.mxu0 0
  %2025 = vmatprep.subr.bf16.mxu0 0
  %2026 = vmatpush1.bf16.msra.mxu0 0
  %2027 = vmatprep.subr.bf16.mxu0 0
  %2028 = vmatpush1.bf16.msra.mxu0 0
  %2029 = vmatprep.subr.bf16.mxu0 0
  %2030 = vmatpush1.bf16.msra.mxu0 0
  %2031 = vmatprep.subr.bf16.mxu0 0
  %2032 = vmatpush1.bf16.msra.mxu0 %v349
  %2033 = vmatprep.subr.bf16.mxu0 0
  %2034 = vmatpush1.bf16.msra.mxu0 %v348
  %2035 = vmatprep.subr.bf16.mxu0 0
  %2036 = vmatpush2.bf16.msra.mxu0 0
  %2037 = vmatprep.subr.bf16.mxu0 0
  %2038 = vmatpush2.bf16.msra.mxu0 0
  %2039 = vmatprep.subr.bf16.mxu0 0
  %2040 = vmatpush2.bf16.msra.mxu0 0
  %2041 = vmatprep.subr.bf16.mxu0 0
  %2042 = vmatpush2.bf16.msra.mxu0 0
  %2043 = vmatprep.subr.bf16.mxu0 0
  %2044 = vmatpush2.bf16.msra.mxu0 0
  %2045 = vmatprep.subr.bf16.mxu0 0
  %2046 = vmatpush2.bf16.msra.mxu0 0
  %2047 = vmatprep.subr.bf16.mxu0 0
  %2048 = vmatpush2.bf16.msra.mxu0 0
  %2049 = vmatprep.subr.bf16.mxu0 0
  %2050 = vmatpush2.bf16.msra.mxu0 0
  %2051 = vmatprep.mubr.bf16.mxu0 0
  %2052 = vmatmul.mubr.bf16.gmra.mxu0 %v2014
  %v2053 = vpop.f32.mrf.mxu0
  %v2054 = vadd.f32 0.0, %v2053
  %v2055 = vpop.f32.mrf.mxu0
  %v2056 = vpop.f32.mrf.mxu0
  %v2057 = vadd.f32 0.0, %v2056
  %v2058 = vpop.f32.mrf.mxu0
  %2059 = vmatprep.mubr.bf16.mxu0 0
  %2060 = vmatmul.mubr.bf16.gmra.mxu0 %v2017
  %v2061 = vpop.f32.mrf.mxu0
  %v2062 = vadd.f32 0.0, %v2061
  %v2063 = vpop.f32.mrf.mxu0
  %v2064 = vpop.f32.mrf.mxu0
  %v2065 = vadd.f32 0.0, %v2064
  %v2066 = vpop.f32.mrf.mxu0
  %2067 = vdwg.mxu0
  %v2069 = vsel %vm127, %v1960, 0
  %v2072 = vsel %vm127, %v1961, 0
  %2074 = vmatprep.subr.bf16.mxu0 0
  %2075 = vmatpush1.bf16.msra.mxu0 0
  %2076 = vmatprep.subr.bf16.mxu0 0
  %2077 = vmatpush1.bf16.msra.mxu0 0
  %2078 = vmatprep.subr.bf16.mxu0 0
  %2079 = vmatpush1.bf16.msra.mxu0 0
  %2080 = vmatprep.subr.bf16.mxu0 0
  %2081 = vmatpush1.bf16.msra.mxu0 0
  %2082 = vmatprep.subr.bf16.mxu0 0
  %2083 = vmatpush1.bf16.msra.mxu0 0
  %2084 = vmatprep.subr.bf16.mxu0 0
  %2085 = vmatpush1.bf16.msra.mxu0 0
  %2086 = vmatprep.subr.bf16.mxu0 0
  %2087 = vmatpush1.bf16.msra.mxu0 %v419
  %2088 = vmatprep.subr.bf16.mxu0 0
  %2089 = vmatpush1.bf16.msra.mxu0 %v418
  %2090 = vmatprep.subr.bf16.mxu0 0
  %2091 = vmatpush2.bf16.msra.mxu0 0
  %2092 = vmatprep.subr.bf16.mxu0 0
  %2093 = vmatpush2.bf16.msra.mxu0 0
  %2094 = vmatprep.subr.bf16.mxu0 0
  %2095 = vmatpush2.bf16.msra.mxu0 0
  %2096 = vmatprep.subr.bf16.mxu0 0
  %2097 = vmatpush2.bf16.msra.mxu0 0
  %2098 = vmatprep.subr.bf16.mxu0 0
  %2099 = vmatpush2.bf16.msra.mxu0 0
  %2100 = vmatprep.subr.bf16.mxu0 0
  %2101 = vmatpush2.bf16.msra.mxu0 0
  %2102 = vmatprep.subr.bf16.mxu0 0
  %2103 = vmatpush2.bf16.msra.mxu0 0
  %2104 = vmatprep.subr.bf16.mxu0 0
  %2105 = vmatpush2.bf16.msra.mxu0 0
  %2106 = vmatprep.mubr.bf16.mxu0 0
  %2107 = vmatmul.mubr.bf16.gmra.mxu0 %v2069
  %v2108 = vpop.f32.mrf.mxu0
  %v2109 = vadd.f32 %v2054, %v2108
  %v2110 = vpop.f32.mrf.mxu0
  %v2111 = vpop.f32.mrf.mxu0
  %v2112 = vadd.f32 %v2057, %v2111
  %v2113 = vpop.f32.mrf.mxu0
  %2114 = vmatprep.mubr.bf16.mxu0 0
  %2115 = vmatmul.mubr.bf16.gmra.mxu0 %v2072
  %v2116 = vpop.f32.mrf.mxu0
  %v2117 = vadd.f32 %v2062, %v2116
  %v2118 = vpop.f32.mrf.mxu0
  %v2119 = vpop.f32.mrf.mxu0
  %v2120 = vadd.f32 %v2065, %v2119
  %v2121 = vpop.f32.mrf.mxu0
  %2122 = vdwg.mxu0
  %s2123 = scalar_lea.vmem %s2, 128
  %v2124 = vld [vmem:[%s2123] sm:$0xff]
  %v2125 = vld [vmem:[%s2123 + $0x8] sm:$0xff]
  %v2126 = vld [vmem:[%s2123 + $0x10] sm:$0xff]
  %v2127 = vld [vmem:[%s2123 + $0x18] sm:$0xff]
  %v2128 = vadd.f32 %v2109, %v2124
  %v2129 = vadd.f32 %v2112, %v2125
  %v2130 = vadd.f32 %v2117, %v2126
  %v2131 = vadd.f32 %v2120, %v2127
  %v2132 = vmul.f32 %v1933, %v1735
  %v2133 = vmul.f32 %v1935, %v1736
  %v2134 = vmul.f32 %v1937, %v1737
  %v2135 = vmul.f32 %v1939, %v1738
  %v2136 = vsub.f32 1.0, %v1933
  %v2137 = vsub.f32 1.0, %v1935
  %v2138 = vsub.f32 1.0, %v1937
  %v2139 = vsub.f32 1.0, %v1939
  %v2140 = vtanh.pop %v2128
  %v2141 = vtanh.pop %v2129
  %v2142 = vtanh.pop %v2130
  %v2143 = vtanh.pop %v2131
  %v2144 = vmul.f32 %v2136, %v2140
  %v2145 = vmul.f32 %v2137, %v2141
  %v2146 = vmul.f32 %v2138, %v2142
  %v2147 = vmul.f32 %v2139, %v2143
  %v2148 = vadd.f32 %v2132, %v2144
  %v2149 = vadd.f32 %v2133, %v2145
  %v2150 = vadd.f32 %v2134, %v2146
  %v2151 = vadd.f32 %v2135, %v2147
  %s2152 = scalar_lea.vmem %s7, 128
  %2153 = vst.msk [vmem:[%s2152] sm:$0xff] %vm127, %v2148
  %2154 = vst.msk [vmem:[%s2152 + $0x8] sm:$0xff] %vm127, %v2149
  %2155 = vst.msk [vmem:[%s2152 + $0x10] sm:$0xff] %vm127, %v2150
  %2156 = vst.msk [vmem:[%s2152 + $0x18] sm:$0xff] %vm127, %v2151
  %v2157 = vpack.c.bf16 %v2149, %v2148
  %v2158 = vpack.c.bf16 %v2151, %v2150
  %2159 = vmatprep.subr.bf16.mxu0 0
  %2160 = vmatpush1.bf16.msra.mxu0 0
  %2161 = vmatprep.subr.bf16.mxu0 0
  %2162 = vmatpush1.bf16.msra.mxu0 0
  %2163 = vmatprep.subr.bf16.mxu0 0
  %2164 = vmatpush1.bf16.msra.mxu0 0
  %2165 = vmatprep.subr.bf16.mxu0 0
  %2166 = vmatpush1.bf16.msra.mxu0 0
  %2167 = vmatprep.subr.bf16.mxu0 0
  %2168 = vmatpush1.bf16.msra.mxu0 0
  %2169 = vmatprep.subr.bf16.mxu0 0
  %2170 = vmatpush1.bf16.msra.mxu0 0
  %2171 = vmatprep.subr.bf16.mxu0 0
  %2172 = vmatpush1.bf16.msra.mxu0 0
  %2173 = vmatprep.subr.bf16.mxu0 0
  %2174 = vmatpush1.bf16.msra.mxu0 %v2157
  %2175 = vmatprep.subr.bf16.mxu0 0
  %2176 = vmatpush2.bf16.msra.mxu0 0
  %2177 = vmatprep.subr.bf16.mxu0 0
  %2178 = vmatpush2.bf16.msra.mxu0 0
  %2179 = vmatprep.subr.bf16.mxu0 0
  %2180 = vmatpush2.bf16.msra.mxu0 0
  %2181 = vmatprep.subr.bf16.mxu0 0
  %2182 = vmatpush2.bf16.msra.mxu0 0
  %2183 = vmatprep.subr.bf16.mxu0 0
  %2184 = vmatpush2.bf16.msra.mxu0 0
  %2185 = vmatprep.subr.bf16.mxu0 0
  %2186 = vmatpush2.bf16.msra.mxu0 0
  %2187 = vmatprep.subr.bf16.mxu0 0
  %2188 = vmatpush2.bf16.msra.mxu0 0
  %2189 = vmatprep.subr.bf16.mxu0 0
  %2190 = vmatpush2.bf16.msra.mxu0 0
  %2191 = vmatprep.mubr.bf16.mxu0 0
  %2192 = vmatmul.mubr.bf16.gmra.mxu0 %v59
  %v2193 = vpop.f32.mrf.mxu0
  %v2194 = vadd.f32 0.0, %v2193
  %v2195 = vpop.f32.mrf.mxu0
  %v2196 = vpop.f32.mrf.mxu0
  %v2197 = vadd.f32 0.0, %v2196
  %v2198 = vpop.f32.mrf.mxu0
  %2199 = vmatprep.mubr.bf16.mxu0 0
  %2200 = vmatmul.mubr.bf16.gmra.mxu0 %v62
  %v2201 = vpop.f32.mrf.mxu0
  %v2202 = vadd.f32 0.0, %v2201
  %v2203 = vpop.f32.mrf.mxu0
  %v2204 = vpop.f32.mrf.mxu0
  %v2205 = vadd.f32 0.0, %v2204
  %v2206 = vpop.f32.mrf.mxu0
  %2207 = vdwg.mxu0
  %v2208 = vpack.c.bf16 %v2197, %v2194
  %v2209 = vpack.c.bf16 %v2205, %v2202
  %v2211 = vsel %vm127, %v2208, 0
  %v2214 = vsel %vm127, %v2209, 0
  %2216 = vmatprep.subr.bf16.mxu0 0
  %2217 = vmatpush1.bf16.msra.mxu0 0
  %2218 = vmatprep.subr.bf16.mxu0 0
  %2219 = vmatpush1.bf16.msra.mxu0 0
  %2220 = vmatprep.subr.bf16.mxu0 0
  %2221 = vmatpush1.bf16.msra.mxu0 0
  %2222 = vmatprep.subr.bf16.mxu0 0
  %2223 = vmatpush1.bf16.msra.mxu0 0
  %2224 = vmatprep.subr.bf16.mxu0 0
  %2225 = vmatpush1.bf16.msra.mxu0 0
  %2226 = vmatprep.subr.bf16.mxu0 0
  %2227 = vmatpush1.bf16.msra.mxu0 0
  %2228 = vmatprep.subr.bf16.mxu0 0
  %2229 = vmatpush1.bf16.msra.mxu0 %v124
  %2230 = vmatprep.subr.bf16.mxu0 0
  %2231 = vmatpush1.bf16.msra.mxu0 %v123
  %2232 = vmatprep.subr.bf16.mxu0 0
  %2233 = vmatpush2.bf16.msra.mxu0 0
  %2234 = vmatprep.subr.bf16.mxu0 0
  %2235 = vmatpush2.bf16.msra.mxu0 0
  %2236 = vmatprep.subr.bf16.mxu0 0
  %2237 = vmatpush2.bf16.msra.mxu0 0
  %2238 = vmatprep.subr.bf16.mxu0 0
  %2239 = vmatpush2.bf16.msra.mxu0 0
  %2240 = vmatprep.subr.bf16.mxu0 0
  %2241 = vmatpush2.bf16.msra.mxu0 0
  %2242 = vmatprep.subr.bf16.mxu0 0
  %2243 = vmatpush2.bf16.msra.mxu0 0
  %2244 = vmatprep.subr.bf16.mxu0 0
  %2245 = vmatpush2.bf16.msra.mxu0 0
  %2246 = vmatprep.subr.bf16.mxu0 0
  %2247 = vmatpush2.bf16.msra.mxu0 0
  %2248 = vmatprep.mubr.bf16.mxu0 0
  %2249 = vmatmul.mubr.bf16.gmra.mxu0 %v2211
  %v2250 = vpop.f32.mrf.mxu0
  %v2251 = vadd.f32 0.0, %v2250
  %v2252 = vpop.f32.mrf.mxu0
  %v2253 = vpop.f32.mrf.mxu0
  %v2254 = vadd.f32 0.0, %v2253
  %v2255 = vpop.f32.mrf.mxu0
  %2256 = vmatprep.mubr.bf16.mxu0 0
  %2257 = vmatmul.mubr.bf16.gmra.mxu0 %v2214
  %v2258 = vpop.f32.mrf.mxu0
  %v2259 = vadd.f32 0.0, %v2258
  %v2260 = vpop.f32.mrf.mxu0
  %v2261 = vpop.f32.mrf.mxu0
  %v2262 = vadd.f32 0.0, %v2261
  %v2263 = vpop.f32.mrf.mxu0
  %2264 = vdwg.mxu0
  %v2266 = vsel %vm127, %v2157, 0
  %v2269 = vsel %vm127, %v2158, 0
  %2271 = vmatprep.subr.bf16.mxu0 0
  %2272 = vmatpush1.bf16.msra.mxu0 0
  %2273 = vmatprep.subr.bf16.mxu0 0
  %2274 = vmatpush1.bf16.msra.mxu0 0
  %2275 = vmatprep.subr.bf16.mxu0 0
  %2276 = vmatpush1.bf16.msra.mxu0 0
  %2277 = vmatprep.subr.bf16.mxu0 0
  %2278 = vmatpush1.bf16.msra.mxu0 0
  %2279 = vmatprep.subr.bf16.mxu0 0
  %2280 = vmatpush1.bf16.msra.mxu0 0
  %2281 = vmatprep.subr.bf16.mxu0 0
  %2282 = vmatpush1.bf16.msra.mxu0 0
  %2283 = vmatprep.subr.bf16.mxu0 0
  %2284 = vmatpush1.bf16.msra.mxu0 %v192
  %2285 = vmatprep.subr.bf16.mxu0 0
  %2286 = vmatpush1.bf16.msra.mxu0 %v191
  %2287 = vmatprep.subr.bf16.mxu0 0
  %2288 = vmatpush2.bf16.msra.mxu0 0
  %2289 = vmatprep.subr.bf16.mxu0 0
  %2290 = vmatpush2.bf16.msra.mxu0 0
  %2291 = vmatprep.subr.bf16.mxu0 0
  %2292 = vmatpush2.bf16.msra.mxu0 0
  %2293 = vmatprep.subr.bf16.mxu0 0
  %2294 = vmatpush2.bf16.msra.mxu0 0
  %2295 = vmatprep.subr.bf16.mxu0 0
  %2296 = vmatpush2.bf16.msra.mxu0 0
  %2297 = vmatprep.subr.bf16.mxu0 0
  %2298 = vmatpush2.bf16.msra.mxu0 0
  %2299 = vmatprep.subr.bf16.mxu0 0
  %2300 = vmatpush2.bf16.msra.mxu0 0
  %2301 = vmatprep.subr.bf16.mxu0 0
  %2302 = vmatpush2.bf16.msra.mxu0 0
  %2303 = vmatprep.mubr.bf16.mxu0 0
  %2304 = vmatmul.mubr.bf16.gmra.mxu0 %v2266
  %v2305 = vpop.f32.mrf.mxu0
  %v2306 = vadd.f32 %v2251, %v2305
  %v2307 = vpop.f32.mrf.mxu0
  %v2308 = vpop.f32.mrf.mxu0
  %v2309 = vadd.f32 %v2254, %v2308
  %v2310 = vpop.f32.mrf.mxu0
  %2311 = vmatprep.mubr.bf16.mxu0 0
  %2312 = vmatmul.mubr.bf16.gmra.mxu0 %v2269
  %v2313 = vpop.f32.mrf.mxu0
  %v2314 = vadd.f32 %v2259, %v2313
  %v2315 = vpop.f32.mrf.mxu0
  %v2316 = vpop.f32.mrf.mxu0
  %v2317 = vadd.f32 %v2262, %v2316
  %v2318 = vpop.f32.mrf.mxu0
  %2319 = vdwg.mxu0
  %s2320 = scalar_lea.vmem %s1, 160
  %v2321 = vld [vmem:[%s2320] sm:$0xff]
  %v2322 = vld [vmem:[%s2320 + $0x8] sm:$0xff]
  %v2323 = vld [vmem:[%s2320 + $0x10] sm:$0xff]
  %v2324 = vld [vmem:[%s2320 + $0x18] sm:$0xff]
  %v2325 = vadd.f32 %v2306, %v2321
  %v2326 = vadd.f32 %v2309, %v2322
  %v2327 = vadd.f32 %v2314, %v2323
  %v2328 = vadd.f32 %v2317, %v2324
  %v2329 = vxor.u32 %v2325, 2147483648
  %v2330 = vxor.u32 %v2326, 2147483648
  %v2331 = vxor.u32 %v2327, 2147483648
  %v2332 = vxor.u32 %v2328, 2147483648
  %v2333 = vmul.f32 %v2329, 1.442695
  %v2334 = vpow.pop %v2333
  %v2335 = vmul.f32 %v2330, 1.442695
  %v2336 = vpow.pop %v2335
  %v2337 = vmul.f32 %v2331, 1.442695
  %v2338 = vpow.pop %v2337
  %v2339 = vmul.f32 %v2332, 1.442695
  %v2340 = vpow.pop %v2339
  %v2341 = vadd.f32 %v2334, 1.0
  %v2342 = vadd.f32 %v2336, 1.0
  %v2343 = vadd.f32 %v2338, 1.0
  %v2344 = vadd.f32 %v2340, 1.0
  %v2345 = vrcp.pop %v2341
  %v2346 = vmul.f32 1.0, %v2345
  %v2347 = vrcp.pop %v2342
  %v2348 = vmul.f32 1.0, %v2347
  %v2349 = vrcp.pop %v2343
  %v2350 = vmul.f32 1.0, %v2349
  %v2351 = vrcp.pop %v2344
  %v2352 = vmul.f32 1.0, %v2351
  %2357 = vrot.lane.b32.xlu0 %v2346, 96
  %v2358 = vpop.permute.xlu0 %2357
  %2359 = vrot.lane.b32.xlu0 %v2348, 96
  %v2360 = vpop.permute.xlu0 %2359
  %2361 = vrot.lane.b32.xlu0 %v2350, 96
  %v2362 = vpop.permute.xlu0 %2361
  %2363 = vrot.lane.b32.xlu0 %v2352, 96
  %v2364 = vpop.permute.xlu0 %2363
  %v2369 = vmul.f32 %v2148, %v2358
  %v2370 = vmul.f32 %v2149, %v2360
  %v2371 = vmul.f32 %v2150, %v2362
  %v2372 = vmul.f32 %v2151, %v2364
  %v2373 = vpack.c.bf16 %v2370, %v2369
  %v2374 = vpack.c.bf16 %v2372, %v2371
  %2375 = vmatprep.subr.bf16.mxu0 0
  %2376 = vmatpush1.bf16.msra.mxu0 0
  %2377 = vmatprep.subr.bf16.mxu0 0
  %2378 = vmatpush1.bf16.msra.mxu0 0
  %2379 = vmatprep.subr.bf16.mxu0 0
  %2380 = vmatpush1.bf16.msra.mxu0 0
  %2381 = vmatprep.subr.bf16.mxu0 0
  %2382 = vmatpush1.bf16.msra.mxu0 0
  %2383 = vmatprep.subr.bf16.mxu0 0
  %2384 = vmatpush1.bf16.msra.mxu0 0
  %2385 = vmatprep.subr.bf16.mxu0 0
  %2386 = vmatpush1.bf16.msra.mxu0 0
  %2387 = vmatprep.subr.bf16.mxu0 0
  %2388 = vmatpush1.bf16.msra.mxu0 0
  %2389 = vmatprep.subr.bf16.mxu0 0
  %2390 = vmatpush1.bf16.msra.mxu0 %v2373
  %2391 = vmatprep.subr.bf16.mxu0 0
  %2392 = vmatpush2.bf16.msra.mxu0 0
  %2393 = vmatprep.subr.bf16.mxu0 0
  %2394 = vmatpush2.bf16.msra.mxu0 0
  %2395 = vmatprep.subr.bf16.mxu0 0
  %2396 = vmatpush2.bf16.msra.mxu0 0
  %2397 = vmatprep.subr.bf16.mxu0 0
  %2398 = vmatpush2.bf16.msra.mxu0 0
  %2399 = vmatprep.subr.bf16.mxu0 0
  %2400 = vmatpush2.bf16.msra.mxu0 0
  %2401 = vmatprep.subr.bf16.mxu0 0
  %2402 = vmatpush2.bf16.msra.mxu0 0
  %2403 = vmatprep.subr.bf16.mxu0 0
  %2404 = vmatpush2.bf16.msra.mxu0 0
  %2405 = vmatprep.subr.bf16.mxu0 0
  %2406 = vmatpush2.bf16.msra.mxu0 0
  %2407 = vmatprep.mubr.bf16.mxu0 0
  %2408 = vmatmul.mubr.bf16.gmra.mxu0 %v59
  %v2409 = vpop.f32.mrf.mxu0
  %v2410 = vadd.f32 0.0, %v2409
  %v2411 = vpop.f32.mrf.mxu0
  %v2412 = vpop.f32.mrf.mxu0
  %v2413 = vadd.f32 0.0, %v2412
  %v2414 = vpop.f32.mrf.mxu0
  %2415 = vmatprep.mubr.bf16.mxu0 0
  %2416 = vmatmul.mubr.bf16.gmra.mxu0 %v62
  %v2417 = vpop.f32.mrf.mxu0
  %v2418 = vadd.f32 0.0, %v2417
  %v2419 = vpop.f32.mrf.mxu0
  %v2420 = vpop.f32.mrf.mxu0
  %v2421 = vadd.f32 0.0, %v2420
  %v2422 = vpop.f32.mrf.mxu0
  %2423 = vdwg.mxu0
  %v2424 = vpack.c.bf16 %v2413, %v2410
  %v2425 = vpack.c.bf16 %v2421, %v2418
  %v2427 = vsel %vm127, %v2424, 0
  %v2430 = vsel %vm127, %v2425, 0
  %2432 = vmatprep.subr.bf16.mxu0 0
  %2433 = vmatpush1.bf16.msra.mxu0 0
  %2434 = vmatprep.subr.bf16.mxu0 0
  %2435 = vmatpush1.bf16.msra.mxu0 0
  %2436 = vmatprep.subr.bf16.mxu0 0
  %2437 = vmatpush1.bf16.msra.mxu0 0
  %2438 = vmatprep.subr.bf16.mxu0 0
  %2439 = vmatpush1.bf16.msra.mxu0 0
  %2440 = vmatprep.subr.bf16.mxu0 0
  %2441 = vmatpush1.bf16.msra.mxu0 0
  %2442 = vmatprep.subr.bf16.mxu0 0
  %2443 = vmatpush1.bf16.msra.mxu0 0
  %2444 = vmatprep.subr.bf16.mxu0 0
  %2445 = vmatpush1.bf16.msra.mxu0 %v349
  %2446 = vmatprep.subr.bf16.mxu0 0
  %2447 = vmatpush1.bf16.msra.mxu0 %v348
  %2448 = vmatprep.subr.bf16.mxu0 0
  %2449 = vmatpush2.bf16.msra.mxu0 0
  %2450 = vmatprep.subr.bf16.mxu0 0
  %2451 = vmatpush2.bf16.msra.mxu0 0
  %2452 = vmatprep.subr.bf16.mxu0 0
  %2453 = vmatpush2.bf16.msra.mxu0 0
  %2454 = vmatprep.subr.bf16.mxu0 0
  %2455 = vmatpush2.bf16.msra.mxu0 0
  %2456 = vmatprep.subr.bf16.mxu0 0
  %2457 = vmatpush2.bf16.msra.mxu0 0
  %2458 = vmatprep.subr.bf16.mxu0 0
  %2459 = vmatpush2.bf16.msra.mxu0 0
  %2460 = vmatprep.subr.bf16.mxu0 0
  %2461 = vmatpush2.bf16.msra.mxu0 0
  %2462 = vmatprep.subr.bf16.mxu0 0
  %2463 = vmatpush2.bf16.msra.mxu0 0
  %2464 = vmatprep.mubr.bf16.mxu0 0
  %2465 = vmatmul.mubr.bf16.gmra.mxu0 %v2427
  %v2466 = vpop.f32.mrf.mxu0
  %v2467 = vadd.f32 0.0, %v2466
  %v2468 = vpop.f32.mrf.mxu0
  %v2469 = vpop.f32.mrf.mxu0
  %v2470 = vadd.f32 0.0, %v2469
  %v2471 = vpop.f32.mrf.mxu0
  %2472 = vmatprep.mubr.bf16.mxu0 0
  %2473 = vmatmul.mubr.bf16.gmra.mxu0 %v2430
  %v2474 = vpop.f32.mrf.mxu0
  %v2475 = vadd.f32 0.0, %v2474
  %v2476 = vpop.f32.mrf.mxu0
  %v2477 = vpop.f32.mrf.mxu0
  %v2478 = vadd.f32 0.0, %v2477
  %v2479 = vpop.f32.mrf.mxu0
  %2480 = vdwg.mxu0
  %v2482 = vsel %vm127, %v2373, 0
  %v2485 = vsel %vm127, %v2374, 0
  %2487 = vmatprep.subr.bf16.mxu0 0
  %2488 = vmatpush1.bf16.msra.mxu0 0
  %2489 = vmatprep.subr.bf16.mxu0 0
  %2490 = vmatpush1.bf16.msra.mxu0 0
  %2491 = vmatprep.subr.bf16.mxu0 0
  %2492 = vmatpush1.bf16.msra.mxu0 0
  %2493 = vmatprep.subr.bf16.mxu0 0
  %2494 = vmatpush1.bf16.msra.mxu0 0
  %2495 = vmatprep.subr.bf16.mxu0 0
  %2496 = vmatpush1.bf16.msra.mxu0 0
  %2497 = vmatprep.subr.bf16.mxu0 0
  %2498 = vmatpush1.bf16.msra.mxu0 0
  %2499 = vmatprep.subr.bf16.mxu0 0
  %2500 = vmatpush1.bf16.msra.mxu0 %v419
  %2501 = vmatprep.subr.bf16.mxu0 0
  %2502 = vmatpush1.bf16.msra.mxu0 %v418
  %2503 = vmatprep.subr.bf16.mxu0 0
  %2504 = vmatpush2.bf16.msra.mxu0 0
  %2505 = vmatprep.subr.bf16.mxu0 0
  %2506 = vmatpush2.bf16.msra.mxu0 0
  %2507 = vmatprep.subr.bf16.mxu0 0
  %2508 = vmatpush2.bf16.msra.mxu0 0
  %2509 = vmatprep.subr.bf16.mxu0 0
  %2510 = vmatpush2.bf16.msra.mxu0 0
  %2511 = vmatprep.subr.bf16.mxu0 0
  %2512 = vmatpush2.bf16.msra.mxu0 0
  %2513 = vmatprep.subr.bf16.mxu0 0
  %2514 = vmatpush2.bf16.msra.mxu0 0
  %2515 = vmatprep.subr.bf16.mxu0 0
  %2516 = vmatpush2.bf16.msra.mxu0 0
  %2517 = vmatprep.subr.bf16.mxu0 0
  %2518 = vmatpush2.bf16.msra.mxu0 0
  %2519 = vmatprep.mubr.bf16.mxu0 0
  %2520 = vmatmul.mubr.bf16.gmra.mxu0 %v2482
  %v2521 = vpop.f32.mrf.mxu0
  %v2522 = vadd.f32 %v2467, %v2521
  %v2523 = vpop.f32.mrf.mxu0
  %v2524 = vpop.f32.mrf.mxu0
  %v2525 = vadd.f32 %v2470, %v2524
  %v2526 = vpop.f32.mrf.mxu0
  %2527 = vmatprep.mubr.bf16.mxu0 0
  %2528 = vmatmul.mubr.bf16.gmra.mxu0 %v2485
  %v2529 = vpop.f32.mrf.mxu0
  %v2530 = vadd.f32 %v2475, %v2529
  %v2531 = vpop.f32.mrf.mxu0
  %v2532 = vpop.f32.mrf.mxu0
  %v2533 = vadd.f32 %v2478, %v2532
  %v2534 = vpop.f32.mrf.mxu0
  %2535 = vdwg.mxu0
  %s2536 = scalar_lea.vmem %s2, 160
  %v2537 = vld [vmem:[%s2536] sm:$0xff]
  %v2538 = vld [vmem:[%s2536 + $0x8] sm:$0xff]
  %v2539 = vld [vmem:[%s2536 + $0x10] sm:$0xff]
  %v2540 = vld [vmem:[%s2536 + $0x18] sm:$0xff]
  %v2541 = vadd.f32 %v2522, %v2537
  %v2542 = vadd.f32 %v2525, %v2538
  %v2543 = vadd.f32 %v2530, %v2539
  %v2544 = vadd.f32 %v2533, %v2540
  %v2545 = vmul.f32 %v2346, %v2148
  %v2546 = vmul.f32 %v2348, %v2149
  %v2547 = vmul.f32 %v2350, %v2150
  %v2548 = vmul.f32 %v2352, %v2151
  %v2549 = vsub.f32 1.0, %v2346
  %v2550 = vsub.f32 1.0, %v2348
  %v2551 = vsub.f32 1.0, %v2350
  %v2552 = vsub.f32 1.0, %v2352
  %v2553 = vtanh.pop %v2541
  %v2554 = vtanh.pop %v2542
  %v2555 = vtanh.pop %v2543
  %v2556 = vtanh.pop %v2544
  %v2557 = vmul.f32 %v2549, %v2553
  %v2558 = vmul.f32 %v2550, %v2554
  %v2559 = vmul.f32 %v2551, %v2555
  %v2560 = vmul.f32 %v2552, %v2556
  %v2561 = vadd.f32 %v2545, %v2557
  %v2562 = vadd.f32 %v2546, %v2558
  %v2563 = vadd.f32 %v2547, %v2559
  %v2564 = vadd.f32 %v2548, %v2560
  %s2565 = scalar_lea.vmem %s7, 160
  %2566 = vst.msk [vmem:[%s2565] sm:$0xff] %vm127, %v2561
  %2567 = vst.msk [vmem:[%s2565 + $0x8] sm:$0xff] %vm127, %v2562
  %2568 = vst.msk [vmem:[%s2565 + $0x10] sm:$0xff] %vm127, %v2563
  %2569 = vst.msk [vmem:[%s2565 + $0x18] sm:$0xff] %vm127, %v2564
  %v2570 = vpack.c.bf16 %v2562, %v2561
  %v2571 = vpack.c.bf16 %v2564, %v2563
  %2572 = vmatprep.subr.bf16.mxu0 0
  %2573 = vmatpush1.bf16.msra.mxu0 0
  %2574 = vmatprep.subr.bf16.mxu0 0
  %2575 = vmatpush1.bf16.msra.mxu0 0
  %2576 = vmatprep.subr.bf16.mxu0 0
  %2577 = vmatpush1.bf16.msra.mxu0 0
  %2578 = vmatprep.subr.bf16.mxu0 0
  %2579 = vmatpush1.bf16.msra.mxu0 0
  %2580 = vmatprep.subr.bf16.mxu0 0
  %2581 = vmatpush1.bf16.msra.mxu0 0
  %2582 = vmatprep.subr.bf16.mxu0 0
  %2583 = vmatpush1.bf16.msra.mxu0 0
  %2584 = vmatprep.subr.bf16.mxu0 0
  %2585 = vmatpush1.bf16.msra.mxu0 0
  %2586 = vmatprep.subr.bf16.mxu0 0
  %2587 = vmatpush1.bf16.msra.mxu0 %v2570
  %2588 = vmatprep.subr.bf16.mxu0 0
  %2589 = vmatpush2.bf16.msra.mxu0 0
  %2590 = vmatprep.subr.bf16.mxu0 0
  %2591 = vmatpush2.bf16.msra.mxu0 0
  %2592 = vmatprep.subr.bf16.mxu0 0
  %2593 = vmatpush2.bf16.msra.mxu0 0
  %2594 = vmatprep.subr.bf16.mxu0 0
  %2595 = vmatpush2.bf16.msra.mxu0 0
  %2596 = vmatprep.subr.bf16.mxu0 0
  %2597 = vmatpush2.bf16.msra.mxu0 0
  %2598 = vmatprep.subr.bf16.mxu0 0
  %2599 = vmatpush2.bf16.msra.mxu0 0
  %2600 = vmatprep.subr.bf16.mxu0 0
  %2601 = vmatpush2.bf16.msra.mxu0 0
  %2602 = vmatprep.subr.bf16.mxu0 0
  %2603 = vmatpush2.bf16.msra.mxu0 0
  %2604 = vmatprep.mubr.bf16.mxu0 0
  %2605 = vmatmul.mubr.bf16.gmra.mxu0 %v59
  %v2606 = vpop.f32.mrf.mxu0
  %v2607 = vadd.f32 0.0, %v2606
  %v2608 = vpop.f32.mrf.mxu0
  %v2609 = vpop.f32.mrf.mxu0
  %v2610 = vadd.f32 0.0, %v2609
  %v2611 = vpop.f32.mrf.mxu0
  %2612 = vmatprep.mubr.bf16.mxu0 0
  %2613 = vmatmul.mubr.bf16.gmra.mxu0 %v62
  %v2614 = vpop.f32.mrf.mxu0
  %v2615 = vadd.f32 0.0, %v2614
  %v2616 = vpop.f32.mrf.mxu0
  %v2617 = vpop.f32.mrf.mxu0
  %v2618 = vadd.f32 0.0, %v2617
  %v2619 = vpop.f32.mrf.mxu0
  %2620 = vdwg.mxu0
  %v2621 = vpack.c.bf16 %v2610, %v2607
  %v2622 = vpack.c.bf16 %v2618, %v2615
  %v2624 = vsel %vm127, %v2621, 0
  %v2627 = vsel %vm127, %v2622, 0
  %2629 = vmatprep.subr.bf16.mxu0 0
  %2630 = vmatpush1.bf16.msra.mxu0 0
  %2631 = vmatprep.subr.bf16.mxu0 0
  %2632 = vmatpush1.bf16.msra.mxu0 0
  %2633 = vmatprep.subr.bf16.mxu0 0
  %2634 = vmatpush1.bf16.msra.mxu0 0
  %2635 = vmatprep.subr.bf16.mxu0 0
  %2636 = vmatpush1.bf16.msra.mxu0 0
  %2637 = vmatprep.subr.bf16.mxu0 0
  %2638 = vmatpush1.bf16.msra.mxu0 0
  %2639 = vmatprep.subr.bf16.mxu0 0
  %2640 = vmatpush1.bf16.msra.mxu0 0
  %2641 = vmatprep.subr.bf16.mxu0 0
  %2642 = vmatpush1.bf16.msra.mxu0 %v124
  %2643 = vmatprep.subr.bf16.mxu0 0
  %2644 = vmatpush1.bf16.msra.mxu0 %v123
  %2645 = vmatprep.subr.bf16.mxu0 0
  %2646 = vmatpush2.bf16.msra.mxu0 0
  %2647 = vmatprep.subr.bf16.mxu0 0
  %2648 = vmatpush2.bf16.msra.mxu0 0
  %2649 = vmatprep.subr.bf16.mxu0 0
  %2650 = vmatpush2.bf16.msra.mxu0 0
  %2651 = vmatprep.subr.bf16.mxu0 0
  %2652 = vmatpush2.bf16.msra.mxu0 0
  %2653 = vmatprep.subr.bf16.mxu0 0
  %2654 = vmatpush2.bf16.msra.mxu0 0
  %2655 = vmatprep.subr.bf16.mxu0 0
  %2656 = vmatpush2.bf16.msra.mxu0 0
  %2657 = vmatprep.subr.bf16.mxu0 0
  %2658 = vmatpush2.bf16.msra.mxu0 0
  %2659 = vmatprep.subr.bf16.mxu0 0
  %2660 = vmatpush2.bf16.msra.mxu0 0
  %2661 = vmatprep.mubr.bf16.mxu0 0
  %2662 = vmatmul.mubr.bf16.gmra.mxu0 %v2624
  %v2663 = vpop.f32.mrf.mxu0
  %v2664 = vadd.f32 0.0, %v2663
  %v2665 = vpop.f32.mrf.mxu0
  %v2666 = vpop.f32.mrf.mxu0
  %v2667 = vadd.f32 0.0, %v2666
  %v2668 = vpop.f32.mrf.mxu0
  %2669 = vmatprep.mubr.bf16.mxu0 0
  %2670 = vmatmul.mubr.bf16.gmra.mxu0 %v2627
  %v2671 = vpop.f32.mrf.mxu0
  %v2672 = vadd.f32 0.0, %v2671
  %v2673 = vpop.f32.mrf.mxu0
  %v2674 = vpop.f32.mrf.mxu0
  %v2675 = vadd.f32 0.0, %v2674
  %v2676 = vpop.f32.mrf.mxu0
  %2677 = vdwg.mxu0
  %v2679 = vsel %vm127, %v2570, 0
  %v2682 = vsel %vm127, %v2571, 0
  %2684 = vmatprep.subr.bf16.mxu0 0
  %2685 = vmatpush1.bf16.msra.mxu0 0
  %2686 = vmatprep.subr.bf16.mxu0 0
  %2687 = vmatpush1.bf16.msra.mxu0 0
  %2688 = vmatprep.subr.bf16.mxu0 0
  %2689 = vmatpush1.bf16.msra.mxu0 0
  %2690 = vmatprep.subr.bf16.mxu0 0
  %2691 = vmatpush1.bf16.msra.mxu0 0
  %2692 = vmatprep.subr.bf16.mxu0 0
  %2693 = vmatpush1.bf16.msra.mxu0 0
  %2694 = vmatprep.subr.bf16.mxu0 0
  %2695 = vmatpush1.bf16.msra.mxu0 0
  %2696 = vmatprep.subr.bf16.mxu0 0
  %2697 = vmatpush1.bf16.msra.mxu0 %v192
  %2698 = vmatprep.subr.bf16.mxu0 0
  %2699 = vmatpush1.bf16.msra.mxu0 %v191
  %2700 = vmatprep.subr.bf16.mxu0 0
  %2701 = vmatpush2.bf16.msra.mxu0 0
  %2702 = vmatprep.subr.bf16.mxu0 0
  %2703 = vmatpush2.bf16.msra.mxu0 0
  %2704 = vmatprep.subr.bf16.mxu0 0
  %2705 = vmatpush2.bf16.msra.mxu0 0
  %2706 = vmatprep.subr.bf16.mxu0 0
  %2707 = vmatpush2.bf16.msra.mxu0 0
  %2708 = vmatprep.subr.bf16.mxu0 0
  %2709 = vmatpush2.bf16.msra.mxu0 0
  %2710 = vmatprep.subr.bf16.mxu0 0
  %2711 = vmatpush2.bf16.msra.mxu0 0
  %2712 = vmatprep.subr.bf16.mxu0 0
  %2713 = vmatpush2.bf16.msra.mxu0 0
  %2714 = vmatprep.subr.bf16.mxu0 0
  %2715 = vmatpush2.bf16.msra.mxu0 0
  %2716 = vmatprep.mubr.bf16.mxu0 0
  %2717 = vmatmul.mubr.bf16.gmra.mxu0 %v2679
  %v2718 = vpop.f32.mrf.mxu0
  %v2719 = vadd.f32 %v2664, %v2718
  %v2720 = vpop.f32.mrf.mxu0
  %v2721 = vpop.f32.mrf.mxu0
  %v2722 = vadd.f32 %v2667, %v2721
  %v2723 = vpop.f32.mrf.mxu0
  %2724 = vmatprep.mubr.bf16.mxu0 0
  %2725 = vmatmul.mubr.bf16.gmra.mxu0 %v2682
  %v2726 = vpop.f32.mrf.mxu0
  %v2727 = vadd.f32 %v2672, %v2726
  %v2728 = vpop.f32.mrf.mxu0
  %v2729 = vpop.f32.mrf.mxu0
  %v2730 = vadd.f32 %v2675, %v2729
  %v2731 = vpop.f32.mrf.mxu0
  %2732 = vdwg.mxu0
  %s2733 = scalar_lea.vmem %s1, 192
  %v2734 = vld [vmem:[%s2733] sm:$0xff]
  %v2735 = vld [vmem:[%s2733 + $0x8] sm:$0xff]
  %v2736 = vld [vmem:[%s2733 + $0x10] sm:$0xff]
  %v2737 = vld [vmem:[%s2733 + $0x18] sm:$0xff]
  %v2738 = vadd.f32 %v2719, %v2734
  %v2739 = vadd.f32 %v2722, %v2735
  %v2740 = vadd.f32 %v2727, %v2736
  %v2741 = vadd.f32 %v2730, %v2737
  %v2742 = vxor.u32 %v2738, 2147483648
  %v2743 = vxor.u32 %v2739, 2147483648
  %v2744 = vxor.u32 %v2740, 2147483648
  %v2745 = vxor.u32 %v2741, 2147483648
  %v2746 = vmul.f32 %v2742, 1.442695
  %v2747 = vpow.pop %v2746
  %v2748 = vmul.f32 %v2743, 1.442695
  %v2749 = vpow.pop %v2748
  %v2750 = vmul.f32 %v2744, 1.442695
  %v2751 = vpow.pop %v2750
  %v2752 = vmul.f32 %v2745, 1.442695
  %v2753 = vpow.pop %v2752
  %v2754 = vadd.f32 %v2747, 1.0
  %v2755 = vadd.f32 %v2749, 1.0
  %v2756 = vadd.f32 %v2751, 1.0
  %v2757 = vadd.f32 %v2753, 1.0
  %v2758 = vrcp.pop %v2754
  %v2759 = vmul.f32 1.0, %v2758
  %v2760 = vrcp.pop %v2755
  %v2761 = vmul.f32 1.0, %v2760
  %v2762 = vrcp.pop %v2756
  %v2763 = vmul.f32 1.0, %v2762
  %v2764 = vrcp.pop %v2757
  %v2765 = vmul.f32 1.0, %v2764
  %2770 = vrot.lane.b32.xlu0 %v2759, 96
  %v2771 = vpop.permute.xlu0 %2770
  %2772 = vrot.lane.b32.xlu0 %v2761, 96
  %v2773 = vpop.permute.xlu0 %2772
  %2774 = vrot.lane.b32.xlu0 %v2763, 96
  %v2775 = vpop.permute.xlu0 %2774
  %2776 = vrot.lane.b32.xlu0 %v2765, 96
  %v2777 = vpop.permute.xlu0 %2776
  %v2782 = vmul.f32 %v2561, %v2771
  %v2783 = vmul.f32 %v2562, %v2773
  %v2784 = vmul.f32 %v2563, %v2775
  %v2785 = vmul.f32 %v2564, %v2777
  %v2786 = vpack.c.bf16 %v2783, %v2782
  %v2787 = vpack.c.bf16 %v2785, %v2784
  %2788 = vmatprep.subr.bf16.mxu0 0
  %2789 = vmatpush1.bf16.msra.mxu0 0
  %2790 = vmatprep.subr.bf16.mxu0 0
  %2791 = vmatpush1.bf16.msra.mxu0 0
  %2792 = vmatprep.subr.bf16.mxu0 0
  %2793 = vmatpush1.bf16.msra.mxu0 0
  %2794 = vmatprep.subr.bf16.mxu0 0
  %2795 = vmatpush1.bf16.msra.mxu0 0
  %2796 = vmatprep.subr.bf16.mxu0 0
  %2797 = vmatpush1.bf16.msra.mxu0 0
  %2798 = vmatprep.subr.bf16.mxu0 0
  %2799 = vmatpush1.bf16.msra.mxu0 0
  %2800 = vmatprep.subr.bf16.mxu0 0
  %2801 = vmatpush1.bf16.msra.mxu0 0
  %2802 = vmatprep.subr.bf16.mxu0 0
  %2803 = vmatpush1.bf16.msra.mxu0 %v2786
  %2804 = vmatprep.subr.bf16.mxu0 0
  %2805 = vmatpush2.bf16.msra.mxu0 0
  %2806 = vmatprep.subr.bf16.mxu0 0
  %2807 = vmatpush2.bf16.msra.mxu0 0
  %2808 = vmatprep.subr.bf16.mxu0 0
  %2809 = vmatpush2.bf16.msra.mxu0 0
  %2810 = vmatprep.subr.bf16.mxu0 0
  %2811 = vmatpush2.bf16.msra.mxu0 0
  %2812 = vmatprep.subr.bf16.mxu0 0
  %2813 = vmatpush2.bf16.msra.mxu0 0
  %2814 = vmatprep.subr.bf16.mxu0 0
  %2815 = vmatpush2.bf16.msra.mxu0 0
  %2816 = vmatprep.subr.bf16.mxu0 0
  %2817 = vmatpush2.bf16.msra.mxu0 0
  %2818 = vmatprep.subr.bf16.mxu0 0
  %2819 = vmatpush2.bf16.msra.mxu0 0
  %2820 = vmatprep.mubr.bf16.mxu0 0
  %2821 = vmatmul.mubr.bf16.gmra.mxu0 %v59
  %v2822 = vpop.f32.mrf.mxu0
  %v2823 = vadd.f32 0.0, %v2822
  %v2824 = vpop.f32.mrf.mxu0
  %v2825 = vpop.f32.mrf.mxu0
  %v2826 = vadd.f32 0.0, %v2825
  %v2827 = vpop.f32.mrf.mxu0
  %2828 = vmatprep.mubr.bf16.mxu0 0
  %2829 = vmatmul.mubr.bf16.gmra.mxu0 %v62
  %v2830 = vpop.f32.mrf.mxu0
  %v2831 = vadd.f32 0.0, %v2830
  %v2832 = vpop.f32.mrf.mxu0
  %v2833 = vpop.f32.mrf.mxu0
  %v2834 = vadd.f32 0.0, %v2833
  %v2835 = vpop.f32.mrf.mxu0
  %2836 = vdwg.mxu0
  %v2837 = vpack.c.bf16 %v2826, %v2823
  %v2838 = vpack.c.bf16 %v2834, %v2831
  %v2840 = vsel %vm127, %v2837, 0
  %v2843 = vsel %vm127, %v2838, 0
  %2845 = vmatprep.subr.bf16.mxu0 0
  %2846 = vmatpush1.bf16.msra.mxu0 0
  %2847 = vmatprep.subr.bf16.mxu0 0
  %2848 = vmatpush1.bf16.msra.mxu0 0
  %2849 = vmatprep.subr.bf16.mxu0 0
  %2850 = vmatpush1.bf16.msra.mxu0 0
  %2851 = vmatprep.subr.bf16.mxu0 0
  %2852 = vmatpush1.bf16.msra.mxu0 0
  %2853 = vmatprep.subr.bf16.mxu0 0
  %2854 = vmatpush1.bf16.msra.mxu0 0
  %2855 = vmatprep.subr.bf16.mxu0 0
  %2856 = vmatpush1.bf16.msra.mxu0 0
  %2857 = vmatprep.subr.bf16.mxu0 0
  %2858 = vmatpush1.bf16.msra.mxu0 %v349
  %2859 = vmatprep.subr.bf16.mxu0 0
  %2860 = vmatpush1.bf16.msra.mxu0 %v348
  %2861 = vmatprep.subr.bf16.mxu0 0
  %2862 = vmatpush2.bf16.msra.mxu0 0
  %2863 = vmatprep.subr.bf16.mxu0 0
  %2864 = vmatpush2.bf16.msra.mxu0 0
  %2865 = vmatprep.subr.bf16.mxu0 0
  %2866 = vmatpush2.bf16.msra.mxu0 0
  %2867 = vmatprep.subr.bf16.mxu0 0
  %2868 = vmatpush2.bf16.msra.mxu0 0
  %2869 = vmatprep.subr.bf16.mxu0 0
  %2870 = vmatpush2.bf16.msra.mxu0 0
  %2871 = vmatprep.subr.bf16.mxu0 0
  %2872 = vmatpush2.bf16.msra.mxu0 0
  %2873 = vmatprep.subr.bf16.mxu0 0
  %2874 = vmatpush2.bf16.msra.mxu0 0
  %2875 = vmatprep.subr.bf16.mxu0 0
  %2876 = vmatpush2.bf16.msra.mxu0 0
  %2877 = vmatprep.mubr.bf16.mxu0 0
  %2878 = vmatmul.mubr.bf16.gmra.mxu0 %v2840
  %v2879 = vpop.f32.mrf.mxu0
  %v2880 = vadd.f32 0.0, %v2879
  %v2881 = vpop.f32.mrf.mxu0
  %v2882 = vpop.f32.mrf.mxu0
  %v2883 = vadd.f32 0.0, %v2882
  %v2884 = vpop.f32.mrf.mxu0
  %2885 = vmatprep.mubr.bf16.mxu0 0
  %2886 = vmatmul.mubr.bf16.gmra.mxu0 %v2843
  %v2887 = vpop.f32.mrf.mxu0
  %v2888 = vadd.f32 0.0, %v2887
  %v2889 = vpop.f32.mrf.mxu0
  %v2890 = vpop.f32.mrf.mxu0
  %v2891 = vadd.f32 0.0, %v2890
  %v2892 = vpop.f32.mrf.mxu0
  %2893 = vdwg.mxu0
  %v2895 = vsel %vm127, %v2786, 0
  %v2898 = vsel %vm127, %v2787, 0
  %2900 = vmatprep.subr.bf16.mxu0 0
  %2901 = vmatpush1.bf16.msra.mxu0 0
  %2902 = vmatprep.subr.bf16.mxu0 0
  %2903 = vmatpush1.bf16.msra.mxu0 0
  %2904 = vmatprep.subr.bf16.mxu0 0
  %2905 = vmatpush1.bf16.msra.mxu0 0
  %2906 = vmatprep.subr.bf16.mxu0 0
  %2907 = vmatpush1.bf16.msra.mxu0 0
  %2908 = vmatprep.subr.bf16.mxu0 0
  %2909 = vmatpush1.bf16.msra.mxu0 0
  %2910 = vmatprep.subr.bf16.mxu0 0
  %2911 = vmatpush1.bf16.msra.mxu0 0
  %2912 = vmatprep.subr.bf16.mxu0 0
  %2913 = vmatpush1.bf16.msra.mxu0 %v419
  %2914 = vmatprep.subr.bf16.mxu0 0
  %2915 = vmatpush1.bf16.msra.mxu0 %v418
  %2916 = vmatprep.subr.bf16.mxu0 0
  %2917 = vmatpush2.bf16.msra.mxu0 0
  %2918 = vmatprep.subr.bf16.mxu0 0
  %2919 = vmatpush2.bf16.msra.mxu0 0
  %2920 = vmatprep.subr.bf16.mxu0 0
  %2921 = vmatpush2.bf16.msra.mxu0 0
  %2922 = vmatprep.subr.bf16.mxu0 0
  %2923 = vmatpush2.bf16.msra.mxu0 0
  %2924 = vmatprep.subr.bf16.mxu0 0
  %2925 = vmatpush2.bf16.msra.mxu0 0
  %2926 = vmatprep.subr.bf16.mxu0 0
  %2927 = vmatpush2.bf16.msra.mxu0 0
  %2928 = vmatprep.subr.bf16.mxu0 0
  %2929 = vmatpush2.bf16.msra.mxu0 0
  %2930 = vmatprep.subr.bf16.mxu0 0
  %2931 = vmatpush2.bf16.msra.mxu0 0
  %2932 = vmatprep.mubr.bf16.mxu0 0
  %2933 = vmatmul.mubr.bf16.gmra.mxu0 %v2895
  %v2934 = vpop.f32.mrf.mxu0
  %v2935 = vadd.f32 %v2880, %v2934
  %v2936 = vpop.f32.mrf.mxu0
  %v2937 = vpop.f32.mrf.mxu0
  %v2938 = vadd.f32 %v2883, %v2937
  %v2939 = vpop.f32.mrf.mxu0
  %2940 = vmatprep.mubr.bf16.mxu0 0
  %2941 = vmatmul.mubr.bf16.gmra.mxu0 %v2898
  %v2942 = vpop.f32.mrf.mxu0
  %v2943 = vadd.f32 %v2888, %v2942
  %v2944 = vpop.f32.mrf.mxu0
  %v2945 = vpop.f32.mrf.mxu0
  %v2946 = vadd.f32 %v2891, %v2945
  %v2947 = vpop.f32.mrf.mxu0
  %2948 = vdwg.mxu0
  %s2949 = scalar_lea.vmem %s2, 192
  %v2950 = vld [vmem:[%s2949] sm:$0xff]
  %v2951 = vld [vmem:[%s2949 + $0x8] sm:$0xff]
  %v2952 = vld [vmem:[%s2949 + $0x10] sm:$0xff]
  %v2953 = vld [vmem:[%s2949 + $0x18] sm:$0xff]
  %v2954 = vadd.f32 %v2935, %v2950
  %v2955 = vadd.f32 %v2938, %v2951
  %v2956 = vadd.f32 %v2943, %v2952
  %v2957 = vadd.f32 %v2946, %v2953
  %v2958 = vmul.f32 %v2759, %v2561
  %v2959 = vmul.f32 %v2761, %v2562
  %v2960 = vmul.f32 %v2763, %v2563
  %v2961 = vmul.f32 %v2765, %v2564
  %v2962 = vsub.f32 1.0, %v2759
  %v2963 = vsub.f32 1.0, %v2761
  %v2964 = vsub.f32 1.0, %v2763
  %v2965 = vsub.f32 1.0, %v2765
  %v2966 = vtanh.pop %v2954
  %v2967 = vtanh.pop %v2955
  %v2968 = vtanh.pop %v2956
  %v2969 = vtanh.pop %v2957
  %v2970 = vmul.f32 %v2962, %v2966
  %v2971 = vmul.f32 %v2963, %v2967
  %v2972 = vmul.f32 %v2964, %v2968
  %v2973 = vmul.f32 %v2965, %v2969
  %v2974 = vadd.f32 %v2958, %v2970
  %v2975 = vadd.f32 %v2959, %v2971
  %v2976 = vadd.f32 %v2960, %v2972
  %v2977 = vadd.f32 %v2961, %v2973
  %s2978 = scalar_lea.vmem %s7, 192
  %2979 = vst.msk [vmem:[%s2978] sm:$0xff] %vm127, %v2974
  %2980 = vst.msk [vmem:[%s2978 + $0x8] sm:$0xff] %vm127, %v2975
  %2981 = vst.msk [vmem:[%s2978 + $0x10] sm:$0xff] %vm127, %v2976
  %2982 = vst.msk [vmem:[%s2978 + $0x18] sm:$0xff] %vm127, %v2977
  %v2983 = vpack.c.bf16 %v2975, %v2974
  %v2984 = vpack.c.bf16 %v2977, %v2976
  %2985 = vmatprep.subr.bf16.mxu0 0
  %2986 = vmatpush1.bf16.msra.mxu0 0
  %2987 = vmatprep.subr.bf16.mxu0 0
  %2988 = vmatpush1.bf16.msra.mxu0 0
  %2989 = vmatprep.subr.bf16.mxu0 0
  %2990 = vmatpush1.bf16.msra.mxu0 0
  %2991 = vmatprep.subr.bf16.mxu0 0
  %2992 = vmatpush1.bf16.msra.mxu0 0
  %2993 = vmatprep.subr.bf16.mxu0 0
  %2994 = vmatpush1.bf16.msra.mxu0 0
  %2995 = vmatprep.subr.bf16.mxu0 0
  %2996 = vmatpush1.bf16.msra.mxu0 0
  %2997 = vmatprep.subr.bf16.mxu0 0
  %2998 = vmatpush1.bf16.msra.mxu0 0
  %2999 = vmatprep.subr.bf16.mxu0 0
  %3000 = vmatpush1.bf16.msra.mxu0 %v2983
  %3001 = vmatprep.subr.bf16.mxu0 0
  %3002 = vmatpush2.bf16.msra.mxu0 0
  %3003 = vmatprep.subr.bf16.mxu0 0
  %3004 = vmatpush2.bf16.msra.mxu0 0
  %3005 = vmatprep.subr.bf16.mxu0 0
  %3006 = vmatpush2.bf16.msra.mxu0 0
  %3007 = vmatprep.subr.bf16.mxu0 0
  %3008 = vmatpush2.bf16.msra.mxu0 0
  %3009 = vmatprep.subr.bf16.mxu0 0
  %3010 = vmatpush2.bf16.msra.mxu0 0
  %3011 = vmatprep.subr.bf16.mxu0 0
  %3012 = vmatpush2.bf16.msra.mxu0 0
  %3013 = vmatprep.subr.bf16.mxu0 0
  %3014 = vmatpush2.bf16.msra.mxu0 0
  %3015 = vmatprep.subr.bf16.mxu0 0
  %3016 = vmatpush2.bf16.msra.mxu0 0
  %3017 = vmatprep.mubr.bf16.mxu0 0
  %3018 = vmatmul.mubr.bf16.gmra.mxu0 %v59
  %v3019 = vpop.f32.mrf.mxu0
  %v3020 = vadd.f32 0.0, %v3019
  %v3021 = vpop.f32.mrf.mxu0
  %v3022 = vpop.f32.mrf.mxu0
  %v3023 = vadd.f32 0.0, %v3022
  %v3024 = vpop.f32.mrf.mxu0
  %3025 = vmatprep.mubr.bf16.mxu0 0
  %3026 = vmatmul.mubr.bf16.gmra.mxu0 %v62
  %v3027 = vpop.f32.mrf.mxu0
  %v3028 = vadd.f32 0.0, %v3027
  %v3029 = vpop.f32.mrf.mxu0
  %v3030 = vpop.f32.mrf.mxu0
  %v3031 = vadd.f32 0.0, %v3030
  %v3032 = vpop.f32.mrf.mxu0
  %3033 = vdwg.mxu0
  %v3034 = vpack.c.bf16 %v3023, %v3020
  %v3035 = vpack.c.bf16 %v3031, %v3028
  %v3037 = vsel %vm127, %v3034, 0
  %v3040 = vsel %vm127, %v3035, 0
  %3042 = vmatprep.subr.bf16.mxu0 0
  %3043 = vmatpush1.bf16.msra.mxu0 0
  %3044 = vmatprep.subr.bf16.mxu0 0
  %3045 = vmatpush1.bf16.msra.mxu0 0
  %3046 = vmatprep.subr.bf16.mxu0 0
  %3047 = vmatpush1.bf16.msra.mxu0 0
  %3048 = vmatprep.subr.bf16.mxu0 0
  %3049 = vmatpush1.bf16.msra.mxu0 0
  %3050 = vmatprep.subr.bf16.mxu0 0
  %3051 = vmatpush1.bf16.msra.mxu0 0
  %3052 = vmatprep.subr.bf16.mxu0 0
  %3053 = vmatpush1.bf16.msra.mxu0 0
  %3054 = vmatprep.subr.bf16.mxu0 0
  %3055 = vmatpush1.bf16.msra.mxu0 %v124
  %3056 = vmatprep.subr.bf16.mxu0 0
  %3057 = vmatpush1.bf16.msra.mxu0 %v123
  %3058 = vmatprep.subr.bf16.mxu0 0
  %3059 = vmatpush2.bf16.msra.mxu0 0
  %3060 = vmatprep.subr.bf16.mxu0 0
  %3061 = vmatpush2.bf16.msra.mxu0 0
  %3062 = vmatprep.subr.bf16.mxu0 0
  %3063 = vmatpush2.bf16.msra.mxu0 0
  %3064 = vmatprep.subr.bf16.mxu0 0
  %3065 = vmatpush2.bf16.msra.mxu0 0
  %3066 = vmatprep.subr.bf16.mxu0 0
  %3067 = vmatpush2.bf16.msra.mxu0 0
  %3068 = vmatprep.subr.bf16.mxu0 0
  %3069 = vmatpush2.bf16.msra.mxu0 0
  %3070 = vmatprep.subr.bf16.mxu0 0
  %3071 = vmatpush2.bf16.msra.mxu0 0
  %3072 = vmatprep.subr.bf16.mxu0 0
  %3073 = vmatpush2.bf16.msra.mxu0 0
  %3074 = vmatprep.mubr.bf16.mxu0 0
  %3075 = vmatmul.mubr.bf16.gmra.mxu0 %v3037
  %v3076 = vpop.f32.mrf.mxu0
  %v3077 = vadd.f32 0.0, %v3076
  %v3078 = vpop.f32.mrf.mxu0
  %v3079 = vpop.f32.mrf.mxu0
  %v3080 = vadd.f32 0.0, %v3079
  %v3081 = vpop.f32.mrf.mxu0
  %3082 = vmatprep.mubr.bf16.mxu0 0
  %3083 = vmatmul.mubr.bf16.gmra.mxu0 %v3040
  %v3084 = vpop.f32.mrf.mxu0
  %v3085 = vadd.f32 0.0, %v3084
  %v3086 = vpop.f32.mrf.mxu0
  %v3087 = vpop.f32.mrf.mxu0
  %v3088 = vadd.f32 0.0, %v3087
  %v3089 = vpop.f32.mrf.mxu0
  %3090 = vdwg.mxu0
  %v3092 = vsel %vm127, %v2983, 0
  %v3095 = vsel %vm127, %v2984, 0
  %3097 = vmatprep.subr.bf16.mxu0 0
  %3098 = vmatpush1.bf16.msra.mxu0 0
  %3099 = vmatprep.subr.bf16.mxu0 0
  %3100 = vmatpush1.bf16.msra.mxu0 0
  %3101 = vmatprep.subr.bf16.mxu0 0
  %3102 = vmatpush1.bf16.msra.mxu0 0
  %3103 = vmatprep.subr.bf16.mxu0 0
  %3104 = vmatpush1.bf16.msra.mxu0 0
  %3105 = vmatprep.subr.bf16.mxu0 0
  %3106 = vmatpush1.bf16.msra.mxu0 0
  %3107 = vmatprep.subr.bf16.mxu0 0
  %3108 = vmatpush1.bf16.msra.mxu0 0
  %3109 = vmatprep.subr.bf16.mxu0 0
  %3110 = vmatpush1.bf16.msra.mxu0 %v192
  %3111 = vmatprep.subr.bf16.mxu0 0
  %3112 = vmatpush1.bf16.msra.mxu0 %v191
  %3113 = vmatprep.subr.bf16.mxu0 0
  %3114 = vmatpush2.bf16.msra.mxu0 0
  %3115 = vmatprep.subr.bf16.mxu0 0
  %3116 = vmatpush2.bf16.msra.mxu0 0
  %3117 = vmatprep.subr.bf16.mxu0 0
  %3118 = vmatpush2.bf16.msra.mxu0 0
  %3119 = vmatprep.subr.bf16.mxu0 0
  %3120 = vmatpush2.bf16.msra.mxu0 0
  %3121 = vmatprep.subr.bf16.mxu0 0
  %3122 = vmatpush2.bf16.msra.mxu0 0
  %3123 = vmatprep.subr.bf16.mxu0 0
  %3124 = vmatpush2.bf16.msra.mxu0 0
  %3125 = vmatprep.subr.bf16.mxu0 0
  %3126 = vmatpush2.bf16.msra.mxu0 0
  %3127 = vmatprep.subr.bf16.mxu0 0
  %3128 = vmatpush2.bf16.msra.mxu0 0
  %3129 = vmatprep.mubr.bf16.mxu0 0
  %3130 = vmatmul.mubr.bf16.gmra.mxu0 %v3092
  %v3131 = vpop.f32.mrf.mxu0
  %v3132 = vadd.f32 %v3077, %v3131
  %v3133 = vpop.f32.mrf.mxu0
  %v3134 = vpop.f32.mrf.mxu0
  %v3135 = vadd.f32 %v3080, %v3134
  %v3136 = vpop.f32.mrf.mxu0
  %3137 = vmatprep.mubr.bf16.mxu0 0
  %3138 = vmatmul.mubr.bf16.gmra.mxu0 %v3095
  %v3139 = vpop.f32.mrf.mxu0
  %v3140 = vadd.f32 %v3085, %v3139
  %v3141 = vpop.f32.mrf.mxu0
  %v3142 = vpop.f32.mrf.mxu0
  %v3143 = vadd.f32 %v3088, %v3142
  %v3144 = vpop.f32.mrf.mxu0
  %3145 = vdwg.mxu0
  %s3146 = scalar_lea.vmem %s1, 224
  %v3147 = vld [vmem:[%s3146] sm:$0xff]
  %v3148 = vld [vmem:[%s3146 + $0x8] sm:$0xff]
  %v3149 = vld [vmem:[%s3146 + $0x10] sm:$0xff]
  %v3150 = vld [vmem:[%s3146 + $0x18] sm:$0xff]
  %v3151 = vadd.f32 %v3132, %v3147
  %v3152 = vadd.f32 %v3135, %v3148
  %v3153 = vadd.f32 %v3140, %v3149
  %v3154 = vadd.f32 %v3143, %v3150
  %v3155 = vxor.u32 %v3151, 2147483648
  %v3156 = vxor.u32 %v3152, 2147483648
  %v3157 = vxor.u32 %v3153, 2147483648
  %v3158 = vxor.u32 %v3154, 2147483648
  %v3159 = vmul.f32 %v3155, 1.442695
  %v3160 = vpow.pop %v3159
  %v3161 = vmul.f32 %v3156, 1.442695
  %v3162 = vpow.pop %v3161
  %v3163 = vmul.f32 %v3157, 1.442695
  %v3164 = vpow.pop %v3163
  %v3165 = vmul.f32 %v3158, 1.442695
  %v3166 = vpow.pop %v3165
  %v3167 = vadd.f32 %v3160, 1.0
  %v3168 = vadd.f32 %v3162, 1.0
  %v3169 = vadd.f32 %v3164, 1.0
  %v3170 = vadd.f32 %v3166, 1.0
  %v3171 = vrcp.pop %v3167
  %v3172 = vmul.f32 1.0, %v3171
  %v3173 = vrcp.pop %v3168
  %v3174 = vmul.f32 1.0, %v3173
  %v3175 = vrcp.pop %v3169
  %v3176 = vmul.f32 1.0, %v3175
  %v3177 = vrcp.pop %v3170
  %v3178 = vmul.f32 1.0, %v3177
  %3183 = vrot.lane.b32.xlu0 %v3172, 96
  %v3184 = vpop.permute.xlu0 %3183
  %3185 = vrot.lane.b32.xlu0 %v3174, 96
  %v3186 = vpop.permute.xlu0 %3185
  %3187 = vrot.lane.b32.xlu0 %v3176, 96
  %v3188 = vpop.permute.xlu0 %3187
  %3189 = vrot.lane.b32.xlu0 %v3178, 96
  %v3190 = vpop.permute.xlu0 %3189
  %v3195 = vmul.f32 %v2974, %v3184
  %v3196 = vmul.f32 %v2975, %v3186
  %v3197 = vmul.f32 %v2976, %v3188
  %v3198 = vmul.f32 %v2977, %v3190
  %v3199 = vpack.c.bf16 %v3196, %v3195
  %v3200 = vpack.c.bf16 %v3198, %v3197
  %3201 = vmatprep.subr.bf16.mxu0 0
  %3202 = vmatpush1.bf16.msra.mxu0 0
  %3203 = vmatprep.subr.bf16.mxu0 0
  %3204 = vmatpush1.bf16.msra.mxu0 0
  %3205 = vmatprep.subr.bf16.mxu0 0
  %3206 = vmatpush1.bf16.msra.mxu0 0
  %3207 = vmatprep.subr.bf16.mxu0 0
  %3208 = vmatpush1.bf16.msra.mxu0 0
  %3209 = vmatprep.subr.bf16.mxu0 0
  %3210 = vmatpush1.bf16.msra.mxu0 0
  %3211 = vmatprep.subr.bf16.mxu0 0
  %3212 = vmatpush1.bf16.msra.mxu0 0
  %3213 = vmatprep.subr.bf16.mxu0 0
  %3214 = vmatpush1.bf16.msra.mxu0 0
  %3215 = vmatprep.subr.bf16.mxu0 0
  %3216 = vmatpush1.bf16.msra.mxu0 %v3199
  %3217 = vmatprep.subr.bf16.mxu0 0
  %3218 = vmatpush2.bf16.msra.mxu0 0
  %3219 = vmatprep.subr.bf16.mxu0 0
  %3220 = vmatpush2.bf16.msra.mxu0 0
  %3221 = vmatprep.subr.bf16.mxu0 0
  %3222 = vmatpush2.bf16.msra.mxu0 0
  %3223 = vmatprep.subr.bf16.mxu0 0
  %3224 = vmatpush2.bf16.msra.mxu0 0
  %3225 = vmatprep.subr.bf16.mxu0 0
  %3226 = vmatpush2.bf16.msra.mxu0 0
  %3227 = vmatprep.subr.bf16.mxu0 0
  %3228 = vmatpush2.bf16.msra.mxu0 0
  %3229 = vmatprep.subr.bf16.mxu0 0
  %3230 = vmatpush2.bf16.msra.mxu0 0
  %3231 = vmatprep.subr.bf16.mxu0 0
  %3232 = vmatpush2.bf16.msra.mxu0 0
  %3233 = vmatprep.mubr.bf16.mxu0 0
  %3234 = vmatmul.mubr.bf16.gmra.mxu0 %v59
  %v3235 = vpop.f32.mrf.mxu0
  %v3236 = vadd.f32 0.0, %v3235
  %v3237 = vpop.f32.mrf.mxu0
  %v3238 = vpop.f32.mrf.mxu0
  %v3239 = vadd.f32 0.0, %v3238
  %v3240 = vpop.f32.mrf.mxu0
  %3241 = vmatprep.mubr.bf16.mxu0 0
  %3242 = vmatmul.mubr.bf16.gmra.mxu0 %v62
  %v3243 = vpop.f32.mrf.mxu0
  %v3244 = vadd.f32 0.0, %v3243
  %v3245 = vpop.f32.mrf.mxu0
  %v3246 = vpop.f32.mrf.mxu0
  %v3247 = vadd.f32 0.0, %v3246
  %v3248 = vpop.f32.mrf.mxu0
  %3249 = vdwg.mxu0
  %v3250 = vpack.c.bf16 %v3239, %v3236
  %v3251 = vpack.c.bf16 %v3247, %v3244
  %v3253 = vsel %vm127, %v3250, 0
  %v3256 = vsel %vm127, %v3251, 0
  %3258 = vmatprep.subr.bf16.mxu0 0
  %3259 = vmatpush1.bf16.msra.mxu0 0
  %3260 = vmatprep.subr.bf16.mxu0 0
  %3261 = vmatpush1.bf16.msra.mxu0 0
  %3262 = vmatprep.subr.bf16.mxu0 0
  %3263 = vmatpush1.bf16.msra.mxu0 0
  %3264 = vmatprep.subr.bf16.mxu0 0
  %3265 = vmatpush1.bf16.msra.mxu0 0
  %3266 = vmatprep.subr.bf16.mxu0 0
  %3267 = vmatpush1.bf16.msra.mxu0 0
  %3268 = vmatprep.subr.bf16.mxu0 0
  %3269 = vmatpush1.bf16.msra.mxu0 0
  %3270 = vmatprep.subr.bf16.mxu0 0
  %3271 = vmatpush1.bf16.msra.mxu0 %v349
  %3272 = vmatprep.subr.bf16.mxu0 0
  %3273 = vmatpush1.bf16.msra.mxu0 %v348
  %3274 = vmatprep.subr.bf16.mxu0 0
  %3275 = vmatpush2.bf16.msra.mxu0 0
  %3276 = vmatprep.subr.bf16.mxu0 0
  %3277 = vmatpush2.bf16.msra.mxu0 0
  %3278 = vmatprep.subr.bf16.mxu0 0
  %3279 = vmatpush2.bf16.msra.mxu0 0
  %3280 = vmatprep.subr.bf16.mxu0 0
  %3281 = vmatpush2.bf16.msra.mxu0 0
  %3282 = vmatprep.subr.bf16.mxu0 0
  %3283 = vmatpush2.bf16.msra.mxu0 0
  %3284 = vmatprep.subr.bf16.mxu0 0
  %3285 = vmatpush2.bf16.msra.mxu0 0
  %3286 = vmatprep.subr.bf16.mxu0 0
  %3287 = vmatpush2.bf16.msra.mxu0 0
  %3288 = vmatprep.subr.bf16.mxu0 0
  %3289 = vmatpush2.bf16.msra.mxu0 0
  %3290 = vmatprep.mubr.bf16.mxu0 0
  %3291 = vmatmul.mubr.bf16.gmra.mxu0 %v3253
  %v3292 = vpop.f32.mrf.mxu0
  %v3293 = vadd.f32 0.0, %v3292
  %v3294 = vpop.f32.mrf.mxu0
  %v3295 = vpop.f32.mrf.mxu0
  %v3296 = vadd.f32 0.0, %v3295
  %v3297 = vpop.f32.mrf.mxu0
  %3298 = vmatprep.mubr.bf16.mxu0 0
  %3299 = vmatmul.mubr.bf16.gmra.mxu0 %v3256
  %v3300 = vpop.f32.mrf.mxu0
  %v3301 = vadd.f32 0.0, %v3300
  %v3302 = vpop.f32.mrf.mxu0
  %v3303 = vpop.f32.mrf.mxu0
  %v3304 = vadd.f32 0.0, %v3303
  %v3305 = vpop.f32.mrf.mxu0
  %3306 = vdwg.mxu0
  %v3308 = vsel %vm127, %v3199, 0
  %v3311 = vsel %vm127, %v3200, 0
  %3313 = vmatprep.subr.bf16.mxu0 0
  %3314 = vmatpush1.bf16.msra.mxu0 0
  %3315 = vmatprep.subr.bf16.mxu0 0
  %3316 = vmatpush1.bf16.msra.mxu0 0
  %3317 = vmatprep.subr.bf16.mxu0 0
  %3318 = vmatpush1.bf16.msra.mxu0 0
  %3319 = vmatprep.subr.bf16.mxu0 0
  %3320 = vmatpush1.bf16.msra.mxu0 0
  %3321 = vmatprep.subr.bf16.mxu0 0
  %3322 = vmatpush1.bf16.msra.mxu0 0
  %3323 = vmatprep.subr.bf16.mxu0 0
  %3324 = vmatpush1.bf16.msra.mxu0 0
  %3325 = vmatprep.subr.bf16.mxu0 0
  %3326 = vmatpush1.bf16.msra.mxu0 %v419
  %3327 = vmatprep.subr.bf16.mxu0 0
  %3328 = vmatpush1.bf16.msra.mxu0 %v418
  %3329 = vmatprep.subr.bf16.mxu0 0
  %3330 = vmatpush2.bf16.msra.mxu0 0
  %3331 = vmatprep.subr.bf16.mxu0 0
  %3332 = vmatpush2.bf16.msra.mxu0 0
  %3333 = vmatprep.subr.bf16.mxu0 0
  %3334 = vmatpush2.bf16.msra.mxu0 0
  %3335 = vmatprep.subr.bf16.mxu0 0
  %3336 = vmatpush2.bf16.msra.mxu0 0
  %3337 = vmatprep.subr.bf16.mxu0 0
  %3338 = vmatpush2.bf16.msra.mxu0 0
  %3339 = vmatprep.subr.bf16.mxu0 0
  %3340 = vmatpush2.bf16.msra.mxu0 0
  %3341 = vmatprep.subr.bf16.mxu0 0
  %3342 = vmatpush2.bf16.msra.mxu0 0
  %3343 = vmatprep.subr.bf16.mxu0 0
  %3344 = vmatpush2.bf16.msra.mxu0 0
  %3345 = vmatprep.mubr.bf16.mxu0 0
  %3346 = vmatmul.mubr.bf16.gmra.mxu0 %v3308
  %v3347 = vpop.f32.mrf.mxu0
  %v3348 = vadd.f32 %v3293, %v3347
  %v3349 = vpop.f32.mrf.mxu0
  %v3350 = vpop.f32.mrf.mxu0
  %v3351 = vadd.f32 %v3296, %v3350
  %v3352 = vpop.f32.mrf.mxu0
  %3353 = vmatprep.mubr.bf16.mxu0 0
  %3354 = vmatmul.mubr.bf16.gmra.mxu0 %v3311
  %v3355 = vpop.f32.mrf.mxu0
  %v3356 = vadd.f32 %v3301, %v3355
  %v3357 = vpop.f32.mrf.mxu0
  %v3358 = vpop.f32.mrf.mxu0
  %v3359 = vadd.f32 %v3304, %v3358
  %v3360 = vpop.f32.mrf.mxu0
  %3361 = vdwg.mxu0
  %s3362 = scalar_lea.vmem %s2, 224
  %v3363 = vld [vmem:[%s3362] sm:$0xff]
  %v3364 = vld [vmem:[%s3362 + $0x8] sm:$0xff]
  %v3365 = vld [vmem:[%s3362 + $0x10] sm:$0xff]
  %v3366 = vld [vmem:[%s3362 + $0x18] sm:$0xff]
  %v3367 = vadd.f32 %v3348, %v3363
  %v3368 = vadd.f32 %v3351, %v3364
  %v3369 = vadd.f32 %v3356, %v3365
  %v3370 = vadd.f32 %v3359, %v3366
  %v3371 = vmul.f32 %v3172, %v2974
  %v3372 = vmul.f32 %v3174, %v2975
  %v3373 = vmul.f32 %v3176, %v2976
  %v3374 = vmul.f32 %v3178, %v2977
  %v3375 = vsub.f32 1.0, %v3172
  %v3376 = vsub.f32 1.0, %v3174
  %v3377 = vsub.f32 1.0, %v3176
  %v3378 = vsub.f32 1.0, %v3178
  %v3379 = vtanh.pop %v3367
  %v3380 = vtanh.pop %v3368
  %v3381 = vtanh.pop %v3369
  %v3382 = vtanh.pop %v3370
  %v3383 = vmul.f32 %v3375, %v3379
  %v3384 = vmul.f32 %v3376, %v3380
  %v3385 = vmul.f32 %v3377, %v3381
  %v3386 = vmul.f32 %v3378, %v3382
  %v3387 = vadd.f32 %v3371, %v3383
  %v3388 = vadd.f32 %v3372, %v3384
  %v3389 = vadd.f32 %v3373, %v3385
  %v3390 = vadd.f32 %v3374, %v3386
  %s3391 = scalar_lea.vmem %s7, 224
  %3392 = vst.msk [vmem:[%s3391] sm:$0xff] %vm127, %v3387
  %3393 = vst.msk [vmem:[%s3391 + $0x8] sm:$0xff] %vm127, %v3388
  %3394 = vst.msk [vmem:[%s3391 + $0x10] sm:$0xff] %vm127, %v3389
  %3395 = vst.msk [vmem:[%s3391 + $0x18] sm:$0xff] %vm127, %v3390
  // Predicated region
  $region30: #{tgcn_forward.1} parent=0 // pred_check
    _
  $region31: #{tgcn_forward.1} parent=0 // pred_check_branch
    %3397 = sbr.rel (0) target = $region33
  $region32: #{tgcn_forward.1} parent=0 // pred_region
    _
  $region33: #{tgcn_forward.1} parent=0 // pred_fallthru
    _
  // Predicated region
  $region34: #{tgcn_forward.1} parent=0 // pred_check
    _
  $region35: #{tgcn_forward.1} parent=0 // pred_check_branch
    %3399 = sbr.rel (0) target = $region37
  $region36: #{tgcn_forward.1} parent=0 // pred_region
    _
  $region37: #{tgcn_forward.1} parent=0 // pred_fallthru
    _

</llo_original>
